<compile_context>
chip_gen: v7x
topology: tpu7x:2x2x1
jax: 0.10.0
libtpu: 0.0.40
codegen_flags: <defaults>
</compile_context>

<pallas_src>
import jax
import jax.numpy as jnp
import numpy as np
from jax.experimental import pallas as pl
from jax.experimental.pallas import tpu as pltpu

jax.config.update("jax_default_matmul_precision", "highest")

HIDDEN = 16
NUM_CLASSES = 2
NUM_LAYERS = 3
NUM_DIRECTIONS = 2
GATES = 4 * HIDDEN                    # 64 per direction (PyTorch gate order i, f, g, o)
PACKED = NUM_DIRECTIONS * GATES       # 128 -> exactly one lane width


def _round_up(x, m):
    return (x + m - 1) // m * m


# ---------------------------------------------------------------------------
# Fused kernel: K-tiled layer-0 input projection + epilogue (layers 0-2 cell
# math, output sum, classifier softmax) on the last grid step.
# ---------------------------------------------------------------------------
def fused_bilstm_kernel(x_ref, w0_ref, h0_ref, c0_ref, whh_ref, b_ref,
                        wih12_ref, wlin_ref, blin_ref,
                        probs_ref, feat_ref, acc_ref):
    k = pl.program_id(0)

    @pl.when(k == 0)
    def _():
        acc_ref[...] = jnp.zeros_like(acc_ref)

    # Streamed layer-0 input projection for BOTH directions at once:
    # (B, tk) @ (tk, 128) -> packed gates [dir0: i f g o | dir1: i f g o].
    acc_ref[...] += jnp.dot(x_ref[...], w0_ref[...],
                            preferred_element_type=jnp.float32)

    @pl.when(k == pl.num_programs(0) - 1)
    def _():
        H = HIDDEN

        def lstm_act(gates, c0cat):
            # gates: (B, 128) packed; c0cat: (B, 32) = [c0_fwd | c0_bwd]
            def one(g, c0):
                i = jax.nn.sigmoid(g[:, 0:H])
                f = jax.nn.sigmoid(g[:, H:2 * H])
                gg = jnp.tanh(g[:, 2 * H:3 * H])
                o = jax.nn.sigmoid(g[:, 3 * H:4 * H])
                c = f * c0 + i * gg
                return o * jnp.tanh(c)
            return jnp.concatenate(
                [one(gates[:, :GATES], c0cat[:, :H]),
                 one(gates[:, GATES:], c0cat[:, H:])], axis=-1)     # (B, 32)

        # ---- layer 0 (input projection already accumulated over the E axis) --
        gates = (acc_ref[...]
                 + jnp.dot(h0_ref[0], whh_ref[0], preferred_element_type=jnp.float32)
                 + b_ref[0])
        h = lstm_act(gates, c0_ref[0])                              # (B, 32)

        # ---- layers 1..2: tiny (B,32)@(32,128) matmuls, fully VMEM-resident --
        for l in range(1, NUM_LAYERS):
            gates = (jnp.dot(h, wih12_ref[l - 1], preferred_element_type=jnp.float32)
                     + jnp.dot(h0_ref[l], whh_ref[l], preferred_element_type=jnp.float32)
                     + b_ref[l])
            h = lstm_act(gates, c0_ref[l])

        out_last = h[:, :H] + h[:, H:]          # forward_out + backward_out (seq len 1)

        # Attention over a length-1 sequence: softmax(context) == 1.0 exactly, so
        # bmm(softmax_w, out) == out.  feature == out_last; dead attn compute dropped.
        feat_ref[...] = out_last

        logits = (jnp.dot(out_last, wlin_ref[...], preferred_element_type=jnp.float32)
                  + blin_ref[...])
        m = jnp.max(logits, axis=1, keepdims=True)
        e = jnp.exp(logits - m)
        probs_ref[...] = e / jnp.sum(e, axis=1, keepdims=True)


# ---------------------------------------------------------------------------
# Parameter init (deterministic, PyTorch-style uniform(-1/sqrt(H), 1/sqrt(H))).
# Stored in "math" layout (in_dim, 4H); packing for the kernel happens below.
# ---------------------------------------------------------------------------
def init_params(key, embedding_size, hidden_size, num_layers, num_classes):
    kh = 1.0 / np.sqrt(hidden_size)
    lstm = []
    for layer in range(num_layers):
        in_dim = embedding_size if layer == 0 else 2 * hidden_size
        per_dir = []
        for _d in range(NUM_DIRECTIONS):
            key, k1, k2, k3, k4 = jax.random.split(key, 5)
            wih = jax.random.uniform(k1, (in_dim, 4 * hidden_size), jnp.float32, -kh, kh)
            whh = jax.random.uniform(k2, (hidden_size, 4 * hidden_size), jnp.float32, -kh, kh)
            bih = jax.random.uniform(k3, (4 * hidden_size,), jnp.float32, -kh, kh)
            bhh = jax.random.uniform(k4, (4 * hidden_size,), jnp.float32, -kh, kh)
            per_dir.append((wih, whh, bih + bhh))
        lstm.append(per_dir)
    key, k1, k2, k3, k4 = jax.random.split(key, 5)
    watt = jax.random.uniform(k1, (hidden_size, hidden_size), jnp.float32, -kh, kh)
    batt = jax.random.uniform(k2, (1, hidden_size), jnp.float32, -kh, kh)
    wlin = jax.random.uniform(k3, (hidden_size, num_classes), jnp.float32, -kh, kh)
    blin = jax.random.uniform(k4, (1, num_classes), jnp.float32, -kh, kh)
    return {"lstm": lstm, "watt": watt, "batt": batt, "wlin": wlin, "blin": blin}


def pack_params(params):
    """Pack both directions to lane-dense N=128 layouts for the fused kernel."""
    layers = params["lstm"]
    # layer-0 input weight, both directions side by side: (E, 128)
    wih0 = jnp.concatenate([layers[0][0][0], layers[0][1][0]], axis=1)
    whh_p, b_p, wih12 = [], [], []
    for l in range(NUM_LAYERS):
        w_f, w_b = layers[l][0][1], layers[l][1][1]                 # (H, 64) each
        z = jnp.zeros_like(w_f)
        # block-diagonal so that [h_fwd | h_bwd] @ W_hh_packed gives both dirs' gates
        whh_p.append(jnp.concatenate(
            [jnp.concatenate([w_f, z], axis=1),
             jnp.concatenate([z, w_b], axis=1)], axis=0))           # (32, 128)
        b_p.append(jnp.concatenate([layers[l][0][2], layers[l][1][2]])[None, :])  # (1, 128)
        if l > 0:
            wih12.append(jnp.concatenate([layers[l][0][0], layers[l][1][0]], axis=1))  # (32, 128)
    return wih0, jnp.stack(whh_p), jnp.stack(b_p), jnp.stack(wih12)


# ---------------------------------------------------------------------------
# Full forward pass: one fused pallas_call.
# ---------------------------------------------------------------------------
def bilstm_forward(x, h0, c0, params, *, tk=None, interpret=False):
    # x: (B, E); h0, c0: (num_layers * num_directions, B, H), index = layer*2 + dir
    B, E = x.shape
    H, C = HIDDEN, NUM_CLASSES

    wih0, whh_p, b_p, wih12 = pack_params(params)
    h0cat = jnp.stack([jnp.concatenate([h0[2 * l], h0[2 * l + 1]], axis=-1)
                       for l in range(NUM_LAYERS)])                 # (3, B, 32)
    c0cat = jnp.stack([jnp.concatenate([c0[2 * l], c0[2 * l + 1]], axis=-1)
                       for l in range(NUM_LAYERS)])                 # (3, B, 32)

    # Tile size along the embedding (reduction) axis. tk=4096 -> 2 MiB weight
    # tile (x2 buffers) + 16*B KiB x tile: well under the scoped VMEM limit on
    # v5e/v6e/v7x while keeping the 0.35us/step overhead negligible.
    if tk is None:
        tk = min(4096, _round_up(E, 128))
    tk = _round_up(tk, 128)
    E_pad = _round_up(E, tk)
    if E_pad != E:            # zero padding contributes exactly 0 to the matmul
        x = jnp.pad(x, ((0, 0), (0, E_pad - E)))
        wih0 = jnp.pad(wih0, ((0, E_pad - E), (0, 0)))
    num_k = E_pad // tk

    cost = pl.CostEstimate(
        flops=2 * B * E_pad * PACKED
              + 2 * B * 2 * H * PACKED * (2 * NUM_LAYERS - 1)
              + 2 * B * H * C,
        transcendentals=NUM_LAYERS * NUM_DIRECTIONS * B * 5 * H + B * C,
        bytes_accessed=4 * (B * E_pad + E_pad * PACKED
                            + NUM_LAYERS * (2 * H * PACKED + PACKED)
                            + (NUM_LAYERS - 1) * 2 * H * PACKED
                            + 2 * NUM_LAYERS * B * 2 * H
                            + H * C + C + B * C + B * H),
    )

    grid_spec = pltpu.PrefetchScalarGridSpec(
        num_scalar_prefetch=0,
        grid=(num_k,),
        in_specs=[
            pl.BlockSpec((B, tk), lambda k: (0, k)),                      # x (streamed)
            pl.BlockSpec((tk, PACKED), lambda k: (k, 0)),                 # layer-0 W_ih (streamed)
            pl.BlockSpec((NUM_LAYERS, B, 2 * H), lambda k: (0, 0, 0)),    # h0 (resident)
            pl.BlockSpec((NUM_LAYERS, B, 2 * H), lambda k: (0, 0, 0)),    # c0 (resident)
            pl.BlockSpec((NUM_LAYERS, 2 * H, PACKED), lambda k: (0, 0, 0)),   # W_hh packed
            pl.BlockSpec((NUM_LAYERS, 1, PACKED), lambda k: (0, 0, 0)),       # biases packed
            pl.BlockSpec((NUM_LAYERS - 1, 2 * H, PACKED), lambda k: (0, 0, 0)),  # layer-1/2 W_ih
            pl.BlockSpec((H, C), lambda k: (0, 0)),                       # classifier W
            pl.BlockSpec((1, C), lambda k: (0, 0)),                       # classifier b
        ],
        out_specs=(pl.BlockSpec((B, C), lambda k: (0, 0)),
                   pl.BlockSpec((B, H), lambda k: (0, 0))),
        scratch_shapes=[pltpu.VMEM((B, PACKED), jnp.float32)],            # gate accumulator
    )

    probs, feat = pl.pallas_call(
        fused_bilstm_kernel,
        out_shape=(jax.ShapeDtypeStruct((B, C), jnp.float32),
                   jax.ShapeDtypeStruct((B, H), jnp.float32)),
        grid_spec=grid_spec,
        compiler_params=pltpu.CompilerParams(
            dimension_semantics=("arbitrary",),       # K is a reduction axis
            vmem_limit_bytes=32 * 1024 * 1024),
        cost_estimate=cost,
        interpret=interpret,
    )(x, wih0, h0cat, c0cat, whh_p, b_p, wih12, params["wlin"], params["blin"])
    return probs, feat


# ---------------------------------------------------------------------------
# Pure-JAX reference (keeps the full, literal attention path for validation).
# ---------------------------------------------------------------------------
def reference_forward(x, h0, c0, params):
    layer_in = x
    hs = []
    for layer in range(NUM_LAYERS):
        outs = []
        for d in range(NUM_DIRECTIONS):
            wih, whh, b = params["lstm"][layer][d]
            idx = layer * NUM_DIRECTIONS + d
            gates = layer_in @ wih + h0[idx] @ whh + b
            H = HIDDEN
            i = jax.nn.sigmoid(gates[:, :H])
            f = jax.nn.sigmoid(gates[:, H:2 * H])
            g = jnp.tanh(gates[:, 2 * H:3 * H])
            o = jax.nn.sigmoid(gates[:, 3 * H:])
            c = f * c0[idx] + i * g
            h = o * jnp.tanh(c)
            outs.append(h)
            hs.append(h)
        layer_in = jnp.concatenate(outs, axis=-1)
    out_last = hs[-2] + hs[-1]
    h_sum = jnp.sum(jnp.stack(hs), axis=0)
    attn = jnp.maximum(h_sum @ params["watt"] + params["batt"], 0.0)
    ctx = jnp.sum(attn * out_last, axis=-1, keepdims=True)
    feat = jax.nn.softmax(ctx, axis=-1) * out_last
    probs = jax.nn.softmax(feat @ params["wlin"] + params["blin"], axis=1)
    return probs, feat


if __name__ == "__main__":
    # Small stand-ins for batch_size=16, embedding_size=78448. E=520 is NOT a
    # multiple of 128 and tk=128 forces a 5-step K grid, exercising padding,
    # the pl.when accumulator init, and the epilogue path.
    B, E = 4, 520
    key = jax.random.PRNGKey(0)
    key, kx, kh, kc, kp = jax.random.split(key, 5)
    x = jax.random.normal(kx, (B, E), jnp.float32)
    h0 = jax.random.normal(kh, (NUM_LAYERS * NUM_DIRECTIONS, B, HIDDEN), jnp.float32)
    c0 = jax.random.normal(kc, (NUM_LAYERS * NUM_DIRECTIONS, B, HIDDEN), jnp.float32)
    params = init_params(kp, E, HIDDEN, NUM_LAYERS, NUM_CLASSES)

    probs, feat = jax.block_until_ready(bilstm_forward(x, h0, c0, params, tk=128))
    ref_probs, ref_feat = reference_forward(x, h0, c0, params)

    np.testing.assert_allclose(np.asarray(probs), np.asarray(ref_probs), rtol=1e-5, atol=1e-5)
    np.testing.assert_allclose(np.asarray(feat), np.asarray(ref_feat), rtol=1e-5, atol=1e-5)
    assert probs.shape == (B, NUM_CLASSES) and feat.shape == (B, HIDDEN)

    print("KERNEL_OK")
</pallas_src>

<mosaic_0001>
module attributes {stable_mosaic.version = 11 : i64} {
  func.func @fused_bilstm_kernel(%arg0: i32, %arg1: memref<4x128xf32, #tpu.memory_space<vmem>>, %arg2: memref<128x128xf32, #tpu.memory_space<vmem>>, %arg3: memref<3x4x32xf32, #tpu.memory_space<vmem>>, %arg4: memref<3x4x32xf32, #tpu.memory_space<vmem>>, %arg5: memref<3x32x128xf32, #tpu.memory_space<vmem>>, %arg6: memref<3x1x128xf32, #tpu.memory_space<vmem>>, %arg7: memref<2x32x128xf32, #tpu.memory_space<vmem>>, %arg8: memref<16x2xf32, #tpu.memory_space<vmem>>, %arg9: memref<1x2xf32, #tpu.memory_space<vmem>>, %arg10: memref<4x2xf32, #tpu.memory_space<vmem>>, %arg11: memref<4x16xf32, #tpu.memory_space<vmem>>, %arg12: memref<4x128xf32, #tpu.memory_space<vmem>>) attributes {dimension_semantics = [#tpu.dimension_semantics<arbitrary>], iteration_bounds = array<i64: 5>, scalar_prefetch = 0 : i64, scratch_operands = 1 : i64, tpu.core_type = #tpu.core_type<tc>, window_params = [{transform_indices = @transform_0, window_bounds = array<i64: 4, 128>}, {transform_indices = @transform_1, window_bounds = array<i64: 128, 128>}, {pipeline_mode = #tpu.pipeline_mode<synchronous>, transform_indices = @transform_2, window_bounds = array<i64: 3, 4, 32>}, {pipeline_mode = #tpu.pipeline_mode<synchronous>, transform_indices = @transform_3, window_bounds = array<i64: 3, 4, 32>}, {pipeline_mode = #tpu.pipeline_mode<synchronous>, transform_indices = @transform_4, window_bounds = array<i64: 3, 32, 128>}, {pipeline_mode = #tpu.pipeline_mode<synchronous>, transform_indices = @transform_5, window_bounds = array<i64: 3, 1, 128>}, {pipeline_mode = #tpu.pipeline_mode<synchronous>, transform_indices = @transform_6, window_bounds = array<i64: 2, 32, 128>}, {pipeline_mode = #tpu.pipeline_mode<synchronous>, transform_indices = @transform_7, window_bounds = array<i64: 16, 2>}, {pipeline_mode = #tpu.pipeline_mode<synchronous>, transform_indices = @transform_8, window_bounds = array<i64: 1, 2>}, {pipeline_mode = #tpu.pipeline_mode<synchronous>, transform_indices = @transform_9, window_bounds = array<i64: 4, 2>}, {pipeline_mode = #tpu.pipeline_mode<synchronous>, transform_indices = @transform_10, window_bounds = array<i64: 4, 16>}]} {
    %c0_i32 = arith.constant 0 : i32
    %0 = arith.cmpi eq, %arg0, %c0_i32 : i32
    %1 = arith.extui %0 : i1 to i32
    %c0_i32_0 = arith.constant 0 : i32
    %2 = arith.cmpi ne, %1, %c0_i32_0 : i32
    scf.if %2 {
      %cst_9 = arith.constant 0.000000e+00 : f32
      %12 = vector.broadcast %cst_9 : f32 to vector<4x128xf32>
      %c0_10 = arith.constant 0 : index
      %c0_11 = arith.constant 0 : index
      %13 = vector.load %arg12[%c0_10, %c0_11] : memref<4x128xf32, #tpu.memory_space<vmem>>, vector<4x128xf32>
      tpu.vector_store %arg12[%c0_10, %c0_11], %12 {strides = array<i32>} : memref<4x128xf32, #tpu.memory_space<vmem>>, vector<4x128xf32>,
    } else {
    }
    %c0 = arith.constant 0 : index
    %c0_1 = arith.constant 0 : index
    %3 = vector.load %arg12[%c0, %c0_1] : memref<4x128xf32, #tpu.memory_space<vmem>>, vector<4x128xf32>
    %c0_2 = arith.constant 0 : index
    %c0_3 = arith.constant 0 : index
    %4 = vector.load %arg1[%c0_2, %c0_3] : memref<4x128xf32, #tpu.memory_space<vmem>>, vector<4x128xf32>
    %c0_4 = arith.constant 0 : index
    %c0_5 = arith.constant 0 : index
    %5 = vector.load %arg2[%c0_4, %c0_5] : memref<128x128xf32, #tpu.memory_space<vmem>>, vector<128x128xf32>
    %cst = arith.constant dense<0.000000e+00> : vector<4x128xf32>
    %6 = tpu.matmul %4, %5, %cst {dimension_numbers = #tpu.dot_dimension_numbers<[1], [0], [0], [1], [0, 0, 1, 1], [], []>, precision = #tpu.contract_precision<fp32>} : vector<4x128xf32>, vector<128x128xf32>, vector<4x128xf32> -> vector<4x128xf32>
    %7 = arith.addf %3, %6 : vector<4x128xf32>
    %c0_6 = arith.constant 0 : index
    %c0_7 = arith.constant 0 : index
    %8 = vector.load %arg12[%c0_6, %c0_7] : memref<4x128xf32, #tpu.memory_space<vmem>>, vector<4x128xf32>
    tpu.vector_store %arg12[%c0_6, %c0_7], %7 {strides = array<i32>} : memref<4x128xf32, #tpu.memory_space<vmem>>, vector<4x128xf32>,
    %c4_i32 = arith.constant 4 : i32
    %9 = arith.cmpi eq, %arg0, %c4_i32 : i32
    %10 = arith.extui %9 : i1 to i32
    %c0_i32_8 = arith.constant 0 : i32
    %11 = arith.cmpi ne, %10, %c0_i32_8 : i32
    scf.if %11 {
      %c0_9 = arith.constant 0 : index
      %c0_10 = arith.constant 0 : index
      %12 = vector.load %arg12[%c0_9, %c0_10] : memref<4x128xf32, #tpu.memory_space<vmem>>, vector<4x128xf32>
      %c0_11 = arith.constant 0 : index
      %c0_12 = arith.constant 0 : index
      %c0_13 = arith.constant 0 : index
      %13 = vector.load %arg3[%c0_11, %c0_12, %c0_13] : memref<3x4x32xf32, #tpu.memory_space<vmem>>, vector<1x4x32xf32>
      %14 = vector.shape_cast %13 : vector<1x4x32xf32> to vector<4x32xf32>
      %c0_14 = arith.constant 0 : index
      %c0_15 = arith.constant 0 : index
      %c0_16 = arith.constant 0 : index
      %15 = vector.load %arg5[%c0_14, %c0_15, %c0_16] : memref<3x32x128xf32, #tpu.memory_space<vmem>>, vector<1x32x128xf32>
      %16 = vector.shape_cast %15 : vector<1x32x128xf32> to vector<32x128xf32>
      %cst_17 = arith.constant dense<0.000000e+00> : vector<4x128xf32>
      %17 = tpu.matmul %14, %16, %cst_17 {dimension_numbers = #tpu.dot_dimension_numbers<[1], [0], [0], [1], [0, 0, 1, 1], [], []>, precision = #tpu.contract_precision<fp32>} : vector<4x32xf32>, vector<32x128xf32>, vector<4x128xf32> -> vector<4x128xf32>
      %18 = arith.addf %12, %17 : vector<4x128xf32>
      %c0_18 = arith.constant 0 : index
      %c0_19 = arith.constant 0 : index
      %c0_20 = arith.constant 0 : index
      %19 = vector.load %arg6[%c0_18, %c0_19, %c0_20] : memref<3x1x128xf32, #tpu.memory_space<vmem>>, vector<1x1x128xf32>
      %20 = vector.shape_cast %19 : vector<1x1x128xf32> to vector<1x128xf32>
      %21 = vector.broadcast %20 : vector<1x128xf32> to vector<4x128xf32>
      %22 = arith.addf %18, %21 : vector<4x128xf32>
      %c0_21 = arith.constant 0 : index
      %c0_22 = arith.constant 0 : index
      %c0_23 = arith.constant 0 : index
      %23 = vector.load %arg4[%c0_21, %c0_22, %c0_23] : memref<3x4x32xf32, #tpu.memory_space<vmem>>, vector<1x4x32xf32>
      %24 = vector.shape_cast %23 : vector<1x4x32xf32> to vector<4x32xf32>
      %25 = vector.extract_strided_slice %22 {offsets = [0, 0], sizes = [4, 64], strides = [1, 1]} : vector<4x128xf32> to vector<4x64xf32>
      %26 = vector.extract_strided_slice %24 {offsets = [0, 0], sizes = [4, 16], strides = [1, 1]} : vector<4x32xf32> to vector<4x16xf32>
      %27 = vector.extract_strided_slice %25 {offsets = [0, 0], sizes = [4, 16], strides = [1, 1]} : vector<4x64xf32> to vector<4x16xf32>
      %28 = arith.negf %27 : vector<4x16xf32>
      %29 = math.exp %28 : vector<4x16xf32>
      %cst_24 = arith.constant 1.000000e+00 : f32
      %30 = vector.broadcast %cst_24 : f32 to vector<4x16xf32>
      %31 = arith.addf %30, %29 : vector<4x16xf32>
      %32 = arith.divf %30, %31 : vector<4x16xf32>
      %33 = vector.extract_strided_slice %25 {offsets = [0, 16], sizes = [4, 16], strides = [1, 1]} : vector<4x64xf32> to vector<4x16xf32>
      %34 = arith.negf %33 : vector<4x16xf32>
      %35 = math.exp %34 : vector<4x16xf32>
      %cst_25 = arith.constant 1.000000e+00 : f32
      %36 = vector.broadcast %cst_25 : f32 to vector<4x16xf32>
      %37 = arith.addf %36, %35 : vector<4x16xf32>
      %38 = arith.divf %36, %37 : vector<4x16xf32>
      %39 = vector.extract_strided_slice %25 {offsets = [0, 32], sizes = [4, 16], strides = [1, 1]} : vector<4x64xf32> to vector<4x16xf32>
      %40 = math.tanh %39 : vector<4x16xf32>
      %41 = vector.extract_strided_slice %25 {offsets = [0, 48], sizes = [4, 16], strides = [1, 1]} : vector<4x64xf32> to vector<4x16xf32>
      %42 = arith.negf %41 : vector<4x16xf32>
      %43 = math.exp %42 : vector<4x16xf32>
      %cst_26 = arith.constant 1.000000e+00 : f32
      %44 = vector.broadcast %cst_26 : f32 to vector<4x16xf32>
      %45 = arith.addf %44, %43 : vector<4x16xf32>
      %46 = arith.divf %44, %45 : vector<4x16xf32>
      %47 = arith.mulf %38, %26 : vector<4x16xf32>
      %48 = arith.mulf %32, %40 : vector<4x16xf32>
      %49 = arith.addf %47, %48 : vector<4x16xf32>
      %50 = math.tanh %49 : vector<4x16xf32>
      %51 = arith.mulf %46, %50 : vector<4x16xf32>
      %52 = vector.extract_strided_slice %22 {offsets = [0, 64], sizes = [4, 64], strides = [1, 1]} : vector<4x128xf32> to vector<4x64xf32>
      %53 = vector.extract_strided_slice %24 {offsets = [0, 16], sizes = [4, 16], strides = [1, 1]} : vector<4x32xf32> to vector<4x16xf32>
      %54 = vector.extract_strided_slice %52 {offsets = [0, 0], sizes = [4, 16], strides = [1, 1]} : vector<4x64xf32> to vector<4x16xf32>
      %55 = arith.negf %54 : vector<4x16xf32>
      %56 = math.exp %55 : vector<4x16xf32>
      %cst_27 = arith.constant 1.000000e+00 : f32
      %57 = vector.broadcast %cst_27 : f32 to vector<4x16xf32>
      %58 = arith.addf %57, %56 : vector<4x16xf32>
      %59 = arith.divf %57, %58 : vector<4x16xf32>
      %60 = vector.extract_strided_slice %52 {offsets = [0, 16], sizes = [4, 16], strides = [1, 1]} : vector<4x64xf32> to vector<4x16xf32>
      %61 = arith.negf %60 : vector<4x16xf32>
      %62 = math.exp %61 : vector<4x16xf32>
      %cst_28 = arith.constant 1.000000e+00 : f32
      %63 = vector.broadcast %cst_28 : f32 to vector<4x16xf32>
      %64 = arith.addf %63, %62 : vector<4x16xf32>
      %65 = arith.divf %63, %64 : vector<4x16xf32>
      %66 = vector.extract_strided_slice %52 {offsets = [0, 32], sizes = [4, 16], strides = [1, 1]} : vector<4x64xf32> to vector<4x16xf32>
      %67 = math.tanh %66 : vector<4x16xf32>
      %68 = vector.extract_strided_slice %52 {offsets = [0, 48], sizes = [4, 16], strides = [1, 1]} : vector<4x64xf32> to vector<4x16xf32>
      %69 = arith.negf %68 : vector<4x16xf32>
      %70 = math.exp %69 : vector<4x16xf32>
      %cst_29 = arith.constant 1.000000e+00 : f32
      %71 = vector.broadcast %cst_29 : f32 to vector<4x16xf32>
      %72 = arith.addf %71, %70 : vector<4x16xf32>
      %73 = arith.divf %71, %72 : vector<4x16xf32>
      %74 = arith.mulf %65, %53 : vector<4x16xf32>
      %75 = arith.mulf %59, %67 : vector<4x16xf32>
      %76 = arith.addf %74, %75 : vector<4x16xf32>
      %77 = math.tanh %76 : vector<4x16xf32>
      %78 = arith.mulf %73, %77 : vector<4x16xf32>
      %79 = tpu.concatenate %51, %78 in 1 : vector<4x16xf32>, vector<4x16xf32> -> vector<4x32xf32>
      %c0_30 = arith.constant 0 : index
      %c0_31 = arith.constant 0 : index
      %c0_32 = arith.constant 0 : index
      %80 = vector.load %arg7[%c0_30, %c0_31, %c0_32] : memref<2x32x128xf32, #tpu.memory_space<vmem>>, vector<1x32x128xf32>
      %81 = vector.shape_cast %80 : vector<1x32x128xf32> to vector<32x128xf32>
      %cst_33 = arith.constant dense<0.000000e+00> : vector<4x128xf32>
      %82 = tpu.matmul %79, %81, %cst_33 {dimension_numbers = #tpu.dot_dimension_numbers<[1], [0], [0], [1], [0, 0, 1, 1], [], []>, precision = #tpu.contract_precision<fp32>} : vector<4x32xf32>, vector<32x128xf32>, vector<4x128xf32> -> vector<4x128xf32>
      %c1 = arith.constant 1 : index
      %c0_34 = arith.constant 0 : index
      %c0_35 = arith.constant 0 : index
      %83 = vector.load %arg3[%c1, %c0_34, %c0_35] : memref<3x4x32xf32, #tpu.memory_space<vmem>>, vector<1x4x32xf32>
      %84 = vector.shape_cast %83 : vector<1x4x32xf32> to vector<4x32xf32>
      %c1_36 = arith.constant 1 : index
      %c0_37 = arith.constant 0 : index
      %c0_38 = arith.constant 0 : index
      %85 = vector.load %arg5[%c1_36, %c0_37, %c0_38] : memref<3x32x128xf32, #tpu.memory_space<vmem>>, vector<1x32x128xf32>
      %86 = vector.shape_cast %85 : vector<1x32x128xf32> to vector<32x128xf32>
      %cst_39 = arith.constant dense<0.000000e+00> : vector<4x128xf32>
      %87 = tpu.matmul %84, %86, %cst_39 {dimension_numbers = #tpu.dot_dimension_numbers<[1], [0], [0], [1], [0, 0, 1, 1], [], []>, precision = #tpu.contract_precision<fp32>} : vector<4x32xf32>, vector<32x128xf32>, vector<4x128xf32> -> vector<4x128xf32>
      %88 = arith.addf %82, %87 : vector<4x128xf32>
      %c1_40 = arith.constant 1 : index
      %c0_41 = arith.constant 0 : index
      %c0_42 = arith.constant 0 : index
      %89 = vector.load %arg6[%c1_40, %c0_41, %c0_42] : memref<3x1x128xf32, #tpu.memory_space<vmem>>, vector<1x1x128xf32>
      %90 = vector.shape_cast %89 : vector<1x1x128xf32> to vector<1x128xf32>
      %91 = vector.broadcast %90 : vector<1x128xf32> to vector<4x128xf32>
      %92 = arith.addf %88, %91 : vector<4x128xf32>
      %c1_43 = arith.constant 1 : index
      %c0_44 = arith.constant 0 : index
      %c0_45 = arith.constant 0 : index
      %93 = vector.load %arg4[%c1_43, %c0_44, %c0_45] : memref<3x4x32xf32, #tpu.memory_space<vmem>>, vector<1x4x32xf32>
      %94 = vector.shape_cast %93 : vector<1x4x32xf32> to vector<4x32xf32>
      %95 = vector.extract_strided_slice %92 {offsets = [0, 0], sizes = [4, 64], strides = [1, 1]} : vector<4x128xf32> to vector<4x64xf32>
      %96 = vector.extract_strided_slice %94 {offsets = [0, 0], sizes = [4, 16], strides = [1, 1]} : vector<4x32xf32> to vector<4x16xf32>
      %97 = vector.extract_strided_slice %95 {offsets = [0, 0], sizes = [4, 16], strides = [1, 1]} : vector<4x64xf32> to vector<4x16xf32>
      %98 = arith.negf %97 : vector<4x16xf32>
      %99 = math.exp %98 : vector<4x16xf32>
      %cst_46 = arith.constant 1.000000e+00 : f32
      %100 = vector.broadcast %cst_46 : f32 to vector<4x16xf32>
      %101 = arith.addf %100, %99 : vector<4x16xf32>
      %102 = arith.divf %100, %101 : vector<4x16xf32>
      %103 = vector.extract_strided_slice %95 {offsets = [0, 16], sizes = [4, 16], strides = [1, 1]} : vector<4x64xf32> to vector<4x16xf32>
      %104 = arith.negf %103 : vector<4x16xf32>
      %105 = math.exp %104 : vector<4x16xf32>
      %cst_47 = arith.constant 1.000000e+00 : f32
      %106 = vector.broadcast %cst_47 : f32 to vector<4x16xf32>
      %107 = arith.addf %106, %105 : vector<4x16xf32>
      %108 = arith.divf %106, %107 : vector<4x16xf32>
      %109 = vector.extract_strided_slice %95 {offsets = [0, 32], sizes = [4, 16], strides = [1, 1]} : vector<4x64xf32> to vector<4x16xf32>
      %110 = math.tanh %109 : vector<4x16xf32>
      %111 = vector.extract_strided_slice %95 {offsets = [0, 48], sizes = [4, 16], strides = [1, 1]} : vector<4x64xf32> to vector<4x16xf32>
      %112 = arith.negf %111 : vector<4x16xf32>
      %113 = math.exp %112 : vector<4x16xf32>
      %cst_48 = arith.constant 1.000000e+00 : f32
      %114 = vector.broadcast %cst_48 : f32 to vector<4x16xf32>
      %115 = arith.addf %114, %113 : vector<4x16xf32>
      %116 = arith.divf %114, %115 : vector<4x16xf32>
      %117 = arith.mulf %108, %96 : vector<4x16xf32>
      %118 = arith.mulf %102, %110 : vector<4x16xf32>
      %119 = arith.addf %117, %118 : vector<4x16xf32>
      %120 = math.tanh %119 : vector<4x16xf32>
      %121 = arith.mulf %116, %120 : vector<4x16xf32>
      %122 = vector.extract_strided_slice %92 {offsets = [0, 64], sizes = [4, 64], strides = [1, 1]} : vector<4x128xf32> to vector<4x64xf32>
      %123 = vector.extract_strided_slice %94 {offsets = [0, 16], sizes = [4, 16], strides = [1, 1]} : vector<4x32xf32> to vector<4x16xf32>
      %124 = vector.extract_strided_slice %122 {offsets = [0, 0], sizes = [4, 16], strides = [1, 1]} : vector<4x64xf32> to vector<4x16xf32>
      %125 = arith.negf %124 : vector<4x16xf32>
      %126 = math.exp %125 : vector<4x16xf32>
      %cst_49 = arith.constant 1.000000e+00 : f32
      %127 = vector.broadcast %cst_49 : f32 to vector<4x16xf32>
      %128 = arith.addf %127, %126 : vector<4x16xf32>
      %129 = arith.divf %127, %128 : vector<4x16xf32>
      %130 = vector.extract_strided_slice %122 {offsets = [0, 16], sizes = [4, 16], strides = [1, 1]} : vector<4x64xf32> to vector<4x16xf32>
      %131 = arith.negf %130 : vector<4x16xf32>
      %132 = math.exp %131 : vector<4x16xf32>
      %cst_50 = arith.constant 1.000000e+00 : f32
      %133 = vector.broadcast %cst_50 : f32 to vector<4x16xf32>
      %134 = arith.addf %133, %132 : vector<4x16xf32>
      %135 = arith.divf %133, %134 : vector<4x16xf32>
      %136 = vector.extract_strided_slice %122 {offsets = [0, 32], sizes = [4, 16], strides = [1, 1]} : vector<4x64xf32> to vector<4x16xf32>
      %137 = math.tanh %136 : vector<4x16xf32>
      %138 = vector.extract_strided_slice %122 {offsets = [0, 48], sizes = [4, 16], strides = [1, 1]} : vector<4x64xf32> to vector<4x16xf32>
      %139 = arith.negf %138 : vector<4x16xf32>
      %140 = math.exp %139 : vector<4x16xf32>
      %cst_51 = arith.constant 1.000000e+00 : f32
      %141 = vector.broadcast %cst_51 : f32 to vector<4x16xf32>
      %142 = arith.addf %141, %140 : vector<4x16xf32>
      %143 = arith.divf %141, %142 : vector<4x16xf32>
      %144 = arith.mulf %135, %123 : vector<4x16xf32>
      %145 = arith.mulf %129, %137 : vector<4x16xf32>
      %146 = arith.addf %144, %145 : vector<4x16xf32>
      %147 = math.tanh %146 : vector<4x16xf32>
      %148 = arith.mulf %143, %147 : vector<4x16xf32>
      %149 = tpu.concatenate %121, %148 in 1 : vector<4x16xf32>, vector<4x16xf32> -> vector<4x32xf32>
      %c1_52 = arith.constant 1 : index
      %c0_53 = arith.constant 0 : index
      %c0_54 = arith.constant 0 : index
      %150 = vector.load %arg7[%c1_52, %c0_53, %c0_54] : memref<2x32x128xf32, #tpu.memory_space<vmem>>, vector<1x32x128xf32>
      %151 = vector.shape_cast %150 : vector<1x32x128xf32> to vector<32x128xf32>
      %cst_55 = arith.constant dense<0.000000e+00> : vector<4x128xf32>
      %152 = tpu.matmul %149, %151, %cst_55 {dimension_numbers = #tpu.dot_dimension_numbers<[1], [0], [0], [1], [0, 0, 1, 1], [], []>, precision = #tpu.contract_precision<fp32>} : vector<4x32xf32>, vector<32x128xf32>, vector<4x128xf32> -> vector<4x128xf32>
      %c2 = arith.constant 2 : index
      %c0_56 = arith.constant 0 : index
      %c0_57 = arith.constant 0 : index
      %153 = vector.load %arg3[%c2, %c0_56, %c0_57] : memref<3x4x32xf32, #tpu.memory_space<vmem>>, vector<1x4x32xf32>
      %154 = vector.shape_cast %153 : vector<1x4x32xf32> to vector<4x32xf32>
      %c2_58 = arith.constant 2 : index
      %c0_59 = arith.constant 0 : index
      %c0_60 = arith.constant 0 : index
      %155 = vector.load %arg5[%c2_58, %c0_59, %c0_60] : memref<3x32x128xf32, #tpu.memory_space<vmem>>, vector<1x32x128xf32>
      %156 = vector.shape_cast %155 : vector<1x32x128xf32> to vector<32x128xf32>
      %cst_61 = arith.constant dense<0.000000e+00> : vector<4x128xf32>
      %157 = tpu.matmul %154, %156, %cst_61 {dimension_numbers = #tpu.dot_dimension_numbers<[1], [0], [0], [1], [0, 0, 1, 1], [], []>, precision = #tpu.contract_precision<fp32>} : vector<4x32xf32>, vector<32x128xf32>, vector<4x128xf32> -> vector<4x128xf32>
      %158 = arith.addf %152, %157 : vector<4x128xf32>
      %c2_62 = arith.constant 2 : index
      %c0_63 = arith.constant 0 : index
      %c0_64 = arith.constant 0 : index
      %159 = vector.load %arg6[%c2_62, %c0_63, %c0_64] : memref<3x1x128xf32, #tpu.memory_space<vmem>>, vector<1x1x128xf32>
      %160 = vector.shape_cast %159 : vector<1x1x128xf32> to vector<1x128xf32>
      %161 = vector.broadcast %160 : vector<1x128xf32> to vector<4x128xf32>
      %162 = arith.addf %158, %161 : vector<4x128xf32>
      %c2_65 = arith.constant 2 : index
      %c0_66 = arith.constant 0 : index
      %c0_67 = arith.constant 0 : index
      %163 = vector.load %arg4[%c2_65, %c0_66, %c0_67] : memref<3x4x32xf32, #tpu.memory_space<vmem>>, vector<1x4x32xf32>
      %164 = vector.shape_cast %163 : vector<1x4x32xf32> to vector<4x32xf32>
      %165 = vector.extract_strided_slice %162 {offsets = [0, 0], sizes = [4, 64], strides = [1, 1]} : vector<4x128xf32> to vector<4x64xf32>
      %166 = vector.extract_strided_slice %164 {offsets = [0, 0], sizes = [4, 16], strides = [1, 1]} : vector<4x32xf32> to vector<4x16xf32>
      %167 = vector.extract_strided_slice %165 {offsets = [0, 0], sizes = [4, 16], strides = [1, 1]} : vector<4x64xf32> to vector<4x16xf32>
      %168 = arith.negf %167 : vector<4x16xf32>
      %169 = math.exp %168 : vector<4x16xf32>
      %cst_68 = arith.constant 1.000000e+00 : f32
      %170 = vector.broadcast %cst_68 : f32 to vector<4x16xf32>
      %171 = arith.addf %170, %169 : vector<4x16xf32>
      %172 = arith.divf %170, %171 : vector<4x16xf32>
      %173 = vector.extract_strided_slice %165 {offsets = [0, 16], sizes = [4, 16], strides = [1, 1]} : vector<4x64xf32> to vector<4x16xf32>
      %174 = arith.negf %173 : vector<4x16xf32>
      %175 = math.exp %174 : vector<4x16xf32>
      %cst_69 = arith.constant 1.000000e+00 : f32
      %176 = vector.broadcast %cst_69 : f32 to vector<4x16xf32>
      %177 = arith.addf %176, %175 : vector<4x16xf32>
      %178 = arith.divf %176, %177 : vector<4x16xf32>
      %179 = vector.extract_strided_slice %165 {offsets = [0, 32], sizes = [4, 16], strides = [1, 1]} : vector<4x64xf32> to vector<4x16xf32>
      %180 = math.tanh %179 : vector<4x16xf32>
      %181 = vector.extract_strided_slice %165 {offsets = [0, 48], sizes = [4, 16], strides = [1, 1]} : vector<4x64xf32> to vector<4x16xf32>
      %182 = arith.negf %181 : vector<4x16xf32>
      %183 = math.exp %182 : vector<4x16xf32>
      %cst_70 = arith.constant 1.000000e+00 : f32
      %184 = vector.broadcast %cst_70 : f32 to vector<4x16xf32>
      %185 = arith.addf %184, %183 : vector<4x16xf32>
      %186 = arith.divf %184, %185 : vector<4x16xf32>
      %187 = arith.mulf %178, %166 : vector<4x16xf32>
      %188 = arith.mulf %172, %180 : vector<4x16xf32>
      %189 = arith.addf %187, %188 : vector<4x16xf32>
      %190 = math.tanh %189 : vector<4x16xf32>
      %191 = arith.mulf %186, %190 : vector<4x16xf32>
      %192 = vector.extract_strided_slice %162 {offsets = [0, 64], sizes = [4, 64], strides = [1, 1]} : vector<4x128xf32> to vector<4x64xf32>
      %193 = vector.extract_strided_slice %164 {offsets = [0, 16], sizes = [4, 16], strides = [1, 1]} : vector<4x32xf32> to vector<4x16xf32>
      %194 = vector.extract_strided_slice %192 {offsets = [0, 0], sizes = [4, 16], strides = [1, 1]} : vector<4x64xf32> to vector<4x16xf32>
      %195 = arith.negf %194 : vector<4x16xf32>
      %196 = math.exp %195 : vector<4x16xf32>
      %cst_71 = arith.constant 1.000000e+00 : f32
      %197 = vector.broadcast %cst_71 : f32 to vector<4x16xf32>
      %198 = arith.addf %197, %196 : vector<4x16xf32>
      %199 = arith.divf %197, %198 : vector<4x16xf32>
      %200 = vector.extract_strided_slice %192 {offsets = [0, 16], sizes = [4, 16], strides = [1, 1]} : vector<4x64xf32> to vector<4x16xf32>
      %201 = arith.negf %200 : vector<4x16xf32>
      %202 = math.exp %201 : vector<4x16xf32>
      %cst_72 = arith.constant 1.000000e+00 : f32
      %203 = vector.broadcast %cst_72 : f32 to vector<4x16xf32>
      %204 = arith.addf %203, %202 : vector<4x16xf32>
      %205 = arith.divf %203, %204 : vector<4x16xf32>
      %206 = vector.extract_strided_slice %192 {offsets = [0, 32], sizes = [4, 16], strides = [1, 1]} : vector<4x64xf32> to vector<4x16xf32>
      %207 = math.tanh %206 : vector<4x16xf32>
      %208 = vector.extract_strided_slice %192 {offsets = [0, 48], sizes = [4, 16], strides = [1, 1]} : vector<4x64xf32> to vector<4x16xf32>
      %209 = arith.negf %208 : vector<4x16xf32>
      %210 = math.exp %209 : vector<4x16xf32>
      %cst_73 = arith.constant 1.000000e+00 : f32
      %211 = vector.broadcast %cst_73 : f32 to vector<4x16xf32>
      %212 = arith.addf %211, %210 : vector<4x16xf32>
      %213 = arith.divf %211, %212 : vector<4x16xf32>
      %214 = arith.mulf %205, %193 : vector<4x16xf32>
      %215 = arith.mulf %199, %207 : vector<4x16xf32>
      %216 = arith.addf %214, %215 : vector<4x16xf32>
      %217 = math.tanh %216 : vector<4x16xf32>
      %218 = arith.mulf %213, %217 : vector<4x16xf32>
      %219 = tpu.concatenate %191, %218 in 1 : vector<4x16xf32>, vector<4x16xf32> -> vector<4x32xf32>
      %220 = vector.extract_strided_slice %219 {offsets = [0, 0], sizes = [4, 16], strides = [1, 1]} : vector<4x32xf32> to vector<4x16xf32>
      %221 = vector.extract_strided_slice %219 {offsets = [0, 16], sizes = [4, 16], strides = [1, 1]} : vector<4x32xf32> to vector<4x16xf32>
      %222 = arith.addf %220, %221 : vector<4x16xf32>
      %c0_74 = arith.constant 0 : index
      %c0_75 = arith.constant 0 : index
      %223 = vector.load %arg11[%c0_74, %c0_75] : memref<4x16xf32, #tpu.memory_space<vmem>>, vector<4x16xf32>
      tpu.vector_store %arg11[%c0_74, %c0_75], %222 {strides = array<i32>} : memref<4x16xf32, #tpu.memory_space<vmem>>, vector<4x16xf32>,
      %c0_76 = arith.constant 0 : index
      %c0_77 = arith.constant 0 : index
      %224 = vector.load %arg8[%c0_76, %c0_77] : memref<16x2xf32, #tpu.memory_space<vmem>>, vector<16x2xf32>
      %cst_78 = arith.constant dense<0.000000e+00> : vector<4x2xf32>
      %225 = tpu.matmul %222, %224, %cst_78 {dimension_numbers = #tpu.dot_dimension_numbers<[1], [0], [0], [1], [0, 0, 1, 1], [], []>, precision = #tpu.contract_precision<fp32>} : vector<4x16xf32>, vector<16x2xf32>, vector<4x2xf32> -> vector<4x2xf32>
      %c0_79 = arith.constant 0 : index
      %c0_80 = arith.constant 0 : index
      %226 = vector.load %arg9[%c0_79, %c0_80] : memref<1x2xf32, #tpu.memory_space<vmem>>, vector<1x2xf32>
      %227 = vector.broadcast %226 : vector<1x2xf32> to vector<4x2xf32>
      %228 = arith.addf %225, %227 : vector<4x2xf32>
      %cst_81 = arith.constant dense<0xFF800000> : vector<4xf32>
      %229 = vector.multi_reduction <maximumf>, %228, %cst_81 [1] : vector<4x2xf32> to vector<4xf32>
      %230 = vector.shape_cast %229 : vector<4xf32> to vector<4x1xf32>
      %231 = vector.broadcast %230 : vector<4x1xf32> to vector<4x2xf32>
      %232 = arith.subf %228, %231 : vector<4x2xf32>
      %233 = math.exp %232 : vector<4x2xf32>
      %cst_82 = arith.constant dense<0.000000e+00> : vector<4xf32>
      %234 = vector.multi_reduction <add>, %233, %cst_82 [1] : vector<4x2xf32> to vector<4xf32>
      %235 = vector.shape_cast %234 : vector<4xf32> to vector<4x1xf32>
      %236 = vector.broadcast %235 : vector<4x1xf32> to vector<4x2xf32>
      %237 = arith.divf %233, %236 : vector<4x2xf32>
      %c0_83 = arith.constant 0 : index
      %c0_84 = arith.constant 0 : index
      %238 = vector.load %arg10[%c0_83, %c0_84] : memref<4x2xf32, #tpu.memory_space<vmem>>, vector<4x2xf32>
      tpu.vector_store %arg10[%c0_83, %c0_84], %237 {strides = array<i32>} : memref<4x2xf32, #tpu.memory_space<vmem>>, vector<4x2xf32>,
    } else {
    }
    return
  }
  func.func @transform_0(%arg0: i32) -> (i32, i32) {
    %c0_i32 = arith.constant 0 : i32
    %c0_i32_0 = arith.constant 0 : i32
    return %c0_i32, %arg0 : i32, i32
  }
  func.func @transform_1(%arg0: i32) -> (i32, i32) {
    %c0_i32 = arith.constant 0 : i32
    %c0_i32_0 = arith.constant 0 : i32
    return %arg0, %c0_i32 : i32, i32
  }
  func.func @transform_2(%arg0: i32) -> (i32, i32, i32) {
    %c0_i32 = arith.constant 0 : i32
    %c0_i32_0 = arith.constant 0 : i32
    %c0_i32_1 = arith.constant 0 : i32
    %c0_i32_2 = arith.constant 0 : i32
    return %c0_i32, %c0_i32_0, %c0_i32_1 : i32, i32, i32
  }
  func.func @transform_3(%arg0: i32) -> (i32, i32, i32) {
    %c0_i32 = arith.constant 0 : i32
    %c0_i32_0 = arith.constant 0 : i32
    %c0_i32_1 = arith.constant 0 : i32
    %c0_i32_2 = arith.constant 0 : i32
    return %c0_i32, %c0_i32_0, %c0_i32_1 : i32, i32, i32
  }
  func.func @transform_4(%arg0: i32) -> (i32, i32, i32) {
    %c0_i32 = arith.constant 0 : i32
    %c0_i32_0 = arith.constant 0 : i32
    %c0_i32_1 = arith.constant 0 : i32
    %c0_i32_2 = arith.constant 0 : i32
    return %c0_i32, %c0_i32_0, %c0_i32_1 : i32, i32, i32
  }
  func.func @transform_5(%arg0: i32) -> (i32, i32, i32) {
    %c0_i32 = arith.constant 0 : i32
    %c0_i32_0 = arith.constant 0 : i32
    %c0_i32_1 = arith.constant 0 : i32
    %c0_i32_2 = arith.constant 0 : i32
    return %c0_i32, %c0_i32_0, %c0_i32_1 : i32, i32, i32
  }
  func.func @transform_6(%arg0: i32) -> (i32, i32, i32) {
    %c0_i32 = arith.constant 0 : i32
    %c0_i32_0 = arith.constant 0 : i32
    %c0_i32_1 = arith.constant 0 : i32
    %c0_i32_2 = arith.constant 0 : i32
    return %c0_i32, %c0_i32_0, %c0_i32_1 : i32, i32, i32
  }
  func.func @transform_7(%arg0: i32) -> (i32, i32) {
    %c0_i32 = arith.constant 0 : i32
    %c0_i32_0 = arith.constant 0 : i32
    %c0_i32_1 = arith.constant 0 : i32
    return %c0_i32, %c0_i32_0 : i32, i32
  }
  func.func @transform_8(%arg0: i32) -> (i32, i32) {
    %c0_i32 = arith.constant 0 : i32
    %c0_i32_0 = arith.constant 0 : i32
    %c0_i32_1 = arith.constant 0 : i32
    return %c0_i32, %c0_i32_0 : i32, i32
  }
  func.func @transform_9(%arg0: i32) -> (i32, i32) {
    %c0_i32 = arith.constant 0 : i32
    %c0_i32_0 = arith.constant 0 : i32
    %c0_i32_1 = arith.constant 0 : i32
    return %c0_i32, %c0_i32_0 : i32, i32
  }
  func.func @transform_10(%arg0: i32) -> (i32, i32) {
    %c0_i32 = arith.constant 0 : i32
    %c0_i32_0 = arith.constant 0 : i32
    %c0_i32_1 = arith.constant 0 : i32
    return %c0_i32, %c0_i32_0 : i32, i32
  }
}

</mosaic_0001>

<llo_original>
// kernel: tpu_custom_call.1
$region0: #{tpu_custom_call.1}
  #allocation0 [shape = 'u32[]', space=smem, size = 0x4, offset = 0x4, fixed_abs, tag = 'smem constant byte address 0x4 - core index']
  #allocation1 [shape = 'u32[144,128]{1,0:T(1,128)}', space=vmem, size = 0x12000, scoped, tag = 'internal scratch']
  #allocation2 [shape = 'f32[4,128]{1,0:T(4,128)}', space=vmem, size = 0x800, scoped, tag = 'scratch operand']
  %s0 = inlined_call_operand.hbm [shape: f32[4,640], index: 0, kind: input, shape index: {}]
  %s1 = inlined_call_operand.hbm [shape: f32[640,128], index: 1, kind: input, shape index: {}]
  %s2 = inlined_call_operand.vmem [shape: f32[3,4,32], index: 2, kind: input, shape index: {}]
  %s3 = inlined_call_operand.vmem [shape: f32[3,4,32], index: 3, kind: input, shape index: {}]
  %s4 = inlined_call_operand.hbm [shape: f32[3,32,128], index: 4, kind: input, shape index: {}]
  %s5 = inlined_call_operand.vmem [shape: f32[3,1,128], index: 5, kind: input, shape index: {}]
  %s6 = inlined_call_operand.hbm [shape: f32[2,32,128], index: 6, kind: input, shape index: {}]
  %s7 = inlined_call_operand.vmem [shape: f32[16,2], index: 7, kind: input, shape index: {}]
  %s8 = inlined_call_operand.vmem [shape: f32[1,2], index: 8, kind: input, shape index: {}]
  %s9 = inlined_call_operand.vmem [shape: f32[4,2], index: 9, kind: output, shape index: {0}]
  %s10 = inlined_call_operand.hbm [shape: f32[4,16], index: 10, kind: output, shape index: {1}]
  %11 = xla_tuple %s9, %s10
  %s12 = sld [smem:[#allocation0]]
  $region101: #{tpu_custom_call.1} parent=0
    _
  %s14 = ssub.s32 1, %s12
  %s15 = scalar_select 0, %s14, %s12
  $region1: #{tpu_custom_call.1} parent=0
    #allocation3 [shape = 'u8[4096]{0}', space=vmem, size = 0x1000, scoped, tag = 'input window, operand 0']
    #allocation4 [shape = 's32[2]{0}', space=sflag, size = 0x8, scoped, tag = 'scoped memory for tpu_custom_call.1']
    #allocation5 [shape = 's32[2]{0}', space=sflag, size = 0x8, scoped, tag = 'scoped memory for tpu_custom_call.1']
    #allocation6 [shape = 'u8[131072]{0}', space=vmem, size = 0x20000, scoped, tag = 'input window, operand 1']
    #allocation7 [shape = 's32[2]{0}', space=sflag, size = 0x8, scoped, tag = 'scoped memory for tpu_custom_call.1']
    #allocation8 [shape = 'u8[49152]{0}', space=vmem, size = 0xc000, scoped, tag = 'input window, operand 4, single buffered']
    #allocation9 [shape = 'u8[32768]{0}', space=vmem, size = 0x8000, scoped, tag = 'input window, operand 6, single buffered']
    #allocation10 [shape = 's32[1]{0}', space=sflag, size = 0x4, scoped, tag = 'scoped memory for tpu_custom_call.1']
    #allocation11 [shape = 'u8[2048]{0}', space=vmem, size = 0x800, scoped, tag = 'output window, operand 1, single buffered']
    %16 = vsyncpa [#allocation4], 0
    %s17 = scalar_lea.sflag [#allocation4], 1
    %18 = vsyncpa %s17, 0
    %19 = vsyncpa [#allocation7], 0
    %s20 = scalar_lea.sflag [#allocation7], 1
    %21 = vsyncpa %s20, 0
    %22 = vsyncpa [#allocation10], 0
    %23 = vsyncpa [#allocation5], 0
    loop: start=0, step=1, limit=7
    $region2: #{tpu_custom_call.1} parent=1 // loop_pre_header
      _
    $region3: #{tpu_custom_call.1} parent=1 // loop_header
      %s25 = sphi 0, %s29
      %p26 = scmp.ge.s32.totalorder %s25, 7
      %s35 = sphi 0, %s37
      %s38 = sphi 0, %s35
      %s39 = sphi 0, %s38
      %s55 = sphi 0, %s39
      %s61 = sphi 0, %s63
      %s64 = sphi 0, %s61
      %s65 = sphi 0, %s64
      %s81 = sphi 0, %s65
      %s85 = sphi 0, %s85
      %s87 = sphi 0, %s85
      %s88 = sphi 0, %s87
      %s102 = sphi 0, %s88
      %s106 = sphi 0, %s106
      %s108 = sphi 0, %s106
      %s109 = sphi 0, %s108
      %s123 = sphi 0, %s109
      %s127 = sphi 0, %s127
      %s129 = sphi 0, %s127
      %s130 = sphi 0, %s129
      %s144 = sphi 0, %s130
      %s148 = sphi 0, %s148
      %s150 = sphi 0, %s148
      %s151 = sphi 0, %s150
      %s165 = sphi 0, %s151
      %s169 = sphi 0, %s169
      %s171 = sphi 0, %s169
      %s172 = sphi 0, %s171
      %s186 = sphi 0, %s172
      %s190 = sphi 0, %s190
      %s192 = sphi 0, %s190
      %s193 = sphi 0, %s192
      %s207 = sphi 0, %s193
      %s211 = sphi 0, %s211
      %s213 = sphi 0, %s211
      %s214 = sphi 0, %s213
      %s228 = sphi 0, %s214
      %s232 = sphi 0, %s232
      %s234 = sphi 0, %s232
      %s235 = sphi 0, %s234
      %s249 = sphi 0, %s235
      %s253 = sphi 0, %s253
      %s255 = sphi 0, %s253
      %s256 = sphi 0, %s255
      %s270 = sphi 0, %s256
    $region4: #{tpu_custom_call.1} parent=1 // loop_header_branch
      %28 = sbr.rel (%p26) target = $region8
    $region5: #{tpu_custom_call.1} parent=1 // loop_body
      %s30 = ssub.s32 %s25, 1
      %s31 = ssub.s32 %s25, 2
      %s32 = sadd.s32 %s25, 1
      %s33 = ssub.s32 %s25, %s32
      %p34 = scmp.eq.s32.totalorder %s33, 0
      %s36 = sadd.s32 %s35, 1
      %s37 = scalar_select %p34, %s35, %s36
      %p40 = pneg %p34
      %p41 = scmp.eq.s32.totalorder %s25, 4
      %p42 = por %p40, %p41
      %p43 = scmp.ne.s32.totalorder %s35, %s38
      %p44 = scmp.eq.s32.totalorder %s25, 0
      %p45 = por %p43, %p44
      %p46 = scmp.ne.s32.totalorder %s35, %s38
      %p47 = scmp.eq.s32.totalorder %s30, 4
      %p48 = por %p46, %p47
      %p49 = scmp.ne.s32.totalorder %s38, %s39
      %p50 = scmp.eq.s32.totalorder %s30, 0
      %p51 = por %p49, %p50
      %p52 = scmp.ne.s32.totalorder %s38, %s39
      %p53 = scmp.eq.s32.totalorder %s31, 4
      %p54 = por %p52, %p53
      %p56 = scmp.ne.s32.totalorder %s39, %s55
      %p57 = scmp.eq.s32.totalorder %s31, 0
      %p58 = por %p56, %p57
      %s59 = ssub.s32 %s25, %s32
      %p60 = scmp.eq.s32.totalorder %s59, 0
      %s62 = sadd.s32 %s61, 1
      %s63 = scalar_select %p60, %s61, %s62
      %p66 = pneg %p60
      %p67 = scmp.eq.s32.totalorder %s25, 4
      %p68 = por %p66, %p67
      %p69 = scmp.ne.s32.totalorder %s61, %s64
      %p70 = scmp.eq.s32.totalorder %s25, 0
      %p71 = por %p69, %p70
      %p72 = scmp.ne.s32.totalorder %s61, %s64
      %p73 = scmp.eq.s32.totalorder %s30, 4
      %p74 = por %p72, %p73
      %p75 = scmp.ne.s32.totalorder %s64, %s65
      %p76 = scmp.eq.s32.totalorder %s30, 0
      %p77 = por %p75, %p76
      %p78 = scmp.ne.s32.totalorder %s64, %s65
      %p79 = scmp.eq.s32.totalorder %s31, 4
      %p80 = por %p78, %p79
      %p82 = scmp.ne.s32.totalorder %s65, %s81
      %p83 = scmp.eq.s32.totalorder %s31, 0
      %p84 = por %p82, %p83
      %s86 = sadd.s32 %s85, 1
      %p89 = scmp.eq.s32.totalorder %s25, 4
      %p90 = scmp.ne.s32.totalorder %s85, %s87
      %p91 = scmp.eq.s32.totalorder %s25, 0
      %p92 = por %p90, %p91
      %p93 = scmp.ne.s32.totalorder %s85, %s87
      %p94 = scmp.eq.s32.totalorder %s30, 4
      %p95 = por %p93, %p94
      %p96 = scmp.ne.s32.totalorder %s87, %s88
      %p97 = scmp.eq.s32.totalorder %s30, 0
      %p98 = por %p96, %p97
      %p99 = scmp.ne.s32.totalorder %s87, %s88
      %p100 = scmp.eq.s32.totalorder %s31, 4
      %p101 = por %p99, %p100
      %p103 = scmp.ne.s32.totalorder %s88, %s102
      %p104 = scmp.eq.s32.totalorder %s31, 0
      %p105 = por %p103, %p104
      %s107 = sadd.s32 %s106, 1
      %p110 = scmp.eq.s32.totalorder %s25, 4
      %p111 = scmp.ne.s32.totalorder %s106, %s108
      %p112 = scmp.eq.s32.totalorder %s25, 0
      %p113 = por %p111, %p112
      %p114 = scmp.ne.s32.totalorder %s106, %s108
      %p115 = scmp.eq.s32.totalorder %s30, 4
      %p116 = por %p114, %p115
      %p117 = scmp.ne.s32.totalorder %s108, %s109
      %p118 = scmp.eq.s32.totalorder %s30, 0
      %p119 = por %p117, %p118
      %p120 = scmp.ne.s32.totalorder %s108, %s109
      %p121 = scmp.eq.s32.totalorder %s31, 4
      %p122 = por %p120, %p121
      %p124 = scmp.ne.s32.totalorder %s109, %s123
      %p125 = scmp.eq.s32.totalorder %s31, 0
      %p126 = por %p124, %p125
      %s128 = sadd.s32 %s127, 1
      %p131 = scmp.eq.s32.totalorder %s25, 4
      %p132 = scmp.ne.s32.totalorder %s127, %s129
      %p133 = scmp.eq.s32.totalorder %s25, 0
      %p134 = por %p132, %p133
      %p135 = scmp.ne.s32.totalorder %s127, %s129
      %p136 = scmp.eq.s32.totalorder %s30, 4
      %p137 = por %p135, %p136
      %p138 = scmp.ne.s32.totalorder %s129, %s130
      %p139 = scmp.eq.s32.totalorder %s30, 0
      %p140 = por %p138, %p139
      %p141 = scmp.ne.s32.totalorder %s129, %s130
      %p142 = scmp.eq.s32.totalorder %s31, 4
      %p143 = por %p141, %p142
      %p145 = scmp.ne.s32.totalorder %s130, %s144
      %p146 = scmp.eq.s32.totalorder %s31, 0
      %p147 = por %p145, %p146
      %s149 = sadd.s32 %s148, 1
      %p152 = scmp.eq.s32.totalorder %s25, 4
      %p153 = scmp.ne.s32.totalorder %s148, %s150
      %p154 = scmp.eq.s32.totalorder %s25, 0
      %p155 = por %p153, %p154
      %p156 = scmp.ne.s32.totalorder %s148, %s150
      %p157 = scmp.eq.s32.totalorder %s30, 4
      %p158 = por %p156, %p157
      %p159 = scmp.ne.s32.totalorder %s150, %s151
      %p160 = scmp.eq.s32.totalorder %s30, 0
      %p161 = por %p159, %p160
      %p162 = scmp.ne.s32.totalorder %s150, %s151
      %p163 = scmp.eq.s32.totalorder %s31, 4
      %p164 = por %p162, %p163
      %p166 = scmp.ne.s32.totalorder %s151, %s165
      %p167 = scmp.eq.s32.totalorder %s31, 0
      %p168 = por %p166, %p167
      %s170 = sadd.s32 %s169, 1
      %p173 = scmp.eq.s32.totalorder %s25, 4
      %p174 = scmp.ne.s32.totalorder %s169, %s171
      %p175 = scmp.eq.s32.totalorder %s25, 0
      %p176 = por %p174, %p175
      %p177 = scmp.ne.s32.totalorder %s169, %s171
      %p178 = scmp.eq.s32.totalorder %s30, 4
      %p179 = por %p177, %p178
      %p180 = scmp.ne.s32.totalorder %s171, %s172
      %p181 = scmp.eq.s32.totalorder %s30, 0
      %p182 = por %p180, %p181
      %p183 = scmp.ne.s32.totalorder %s171, %s172
      %p184 = scmp.eq.s32.totalorder %s31, 4
      %p185 = por %p183, %p184
      %p187 = scmp.ne.s32.totalorder %s172, %s186
      %p188 = scmp.eq.s32.totalorder %s31, 0
      %p189 = por %p187, %p188
      %s191 = sadd.s32 %s190, 1
      %p194 = scmp.eq.s32.totalorder %s25, 4
      %p195 = scmp.ne.s32.totalorder %s190, %s192
      %p196 = scmp.eq.s32.totalorder %s25, 0
      %p197 = por %p195, %p196
      %p198 = scmp.ne.s32.totalorder %s190, %s192
      %p199 = scmp.eq.s32.totalorder %s30, 4
      %p200 = por %p198, %p199
      %p201 = scmp.ne.s32.totalorder %s192, %s193
      %p202 = scmp.eq.s32.totalorder %s30, 0
      %p203 = por %p201, %p202
      %p204 = scmp.ne.s32.totalorder %s192, %s193
      %p205 = scmp.eq.s32.totalorder %s31, 4
      %p206 = por %p204, %p205
      %p208 = scmp.ne.s32.totalorder %s193, %s207
      %p209 = scmp.eq.s32.totalorder %s31, 0
      %p210 = por %p208, %p209
      %s212 = sadd.s32 %s211, 1
      %p215 = scmp.eq.s32.totalorder %s25, 4
      %p216 = scmp.ne.s32.totalorder %s211, %s213
      %p217 = scmp.eq.s32.totalorder %s25, 0
      %p218 = por %p216, %p217
      %p219 = scmp.ne.s32.totalorder %s211, %s213
      %p220 = scmp.eq.s32.totalorder %s30, 4
      %p221 = por %p219, %p220
      %p222 = scmp.ne.s32.totalorder %s213, %s214
      %p223 = scmp.eq.s32.totalorder %s30, 0
      %p224 = por %p222, %p223
      %p225 = scmp.ne.s32.totalorder %s213, %s214
      %p226 = scmp.eq.s32.totalorder %s31, 4
      %p227 = por %p225, %p226
      %p229 = scmp.ne.s32.totalorder %s214, %s228
      %p230 = scmp.eq.s32.totalorder %s31, 0
      %p231 = por %p229, %p230
      %s233 = sadd.s32 %s232, 1
      %p236 = scmp.eq.s32.totalorder %s25, 4
      %p237 = scmp.ne.s32.totalorder %s232, %s234
      %p238 = scmp.eq.s32.totalorder %s25, 0
      %p239 = por %p237, %p238
      %p240 = scmp.ne.s32.totalorder %s232, %s234
      %p241 = scmp.eq.s32.totalorder %s30, 4
      %p242 = por %p240, %p241
      %p243 = scmp.ne.s32.totalorder %s234, %s235
      %p244 = scmp.eq.s32.totalorder %s30, 0
      %p245 = por %p243, %p244
      %p246 = scmp.ne.s32.totalorder %s234, %s235
      %p247 = scmp.eq.s32.totalorder %s31, 4
      %p248 = por %p246, %p247
      %p250 = scmp.ne.s32.totalorder %s235, %s249
      %p251 = scmp.eq.s32.totalorder %s31, 0
      %p252 = por %p250, %p251
      %s254 = sadd.s32 %s253, 1
      %p257 = scmp.eq.s32.totalorder %s25, 4
      %p258 = scmp.ne.s32.totalorder %s253, %s255
      %p259 = scmp.eq.s32.totalorder %s25, 0
      %p260 = por %p258, %p259
      %p261 = scmp.ne.s32.totalorder %s253, %s255
      %p262 = scmp.eq.s32.totalorder %s30, 4
      %p263 = por %p261, %p262
      %p264 = scmp.ne.s32.totalorder %s255, %s256
      %p265 = scmp.eq.s32.totalorder %s30, 0
      %p266 = por %p264, %p265
      %p267 = scmp.ne.s32.totalorder %s255, %s256
      %p268 = scmp.eq.s32.totalorder %s31, 4
      %p269 = por %p267, %p268
      %p271 = scmp.ne.s32.totalorder %s256, %s270
      %p272 = scmp.eq.s32.totalorder %s31, 0
      %p273 = por %p271, %p272
      %p274 = scmp.le.s32.totalorder 1, %s25
      %p275 = scmp.lt.s32.totalorder %s25, 6
      %p276 = pnand %p274, %p275
      %p277 = pneg %p276
      // Predicated region
      $region9: #{tpu_custom_call.1} parent=5 // pred_check
        _
      $region10: #{tpu_custom_call.1} parent=5 // pred_check_branch
        %279 = sbr.rel (%p276) target = $region12
      $region11: #{tpu_custom_call.1} parent=5 // pred_region
        %s280 = ssub.s32 %s25, 1
        // Predicated region
        $region13: #{tpu_custom_call.1} parent=11 // pred_check
          %p281 = pneg %p98
        $region14: #{tpu_custom_call.1} parent=11 // pred_check_branch
          %283 = sbr.rel (%p281) target = $region16
        $region15: #{tpu_custom_call.1} parent=11 // pred_region
          _
        $region16: #{tpu_custom_call.1} parent=11 // pred_fallthru
          _
        // Predicated region
        $region17: #{tpu_custom_call.1} parent=11 // pred_check
          %p284 = pneg %p119
        $region18: #{tpu_custom_call.1} parent=11 // pred_check_branch
          %286 = sbr.rel (%p284) target = $region20
        $region19: #{tpu_custom_call.1} parent=11 // pred_region
          _
        $region20: #{tpu_custom_call.1} parent=11 // pred_fallthru
          _
        // Predicated region
        $region21: #{tpu_custom_call.1} parent=11 // pred_check
          %p287 = pneg %p140
        $region22: #{tpu_custom_call.1} parent=11 // pred_check_branch
          %289 = sbr.rel (%p287) target = $region24
        $region23: #{tpu_custom_call.1} parent=11 // pred_region
          %s291 = ssub.s32 1536, 1536
          %292 = vsyncadd [#allocation7], %s291
          %s293 = sshll.u32 [#allocation8], 4
          %s294 = int_to_ptr.vmem [resolvable:$true] %s293
          %299 = dma.hbm_to_vmem [thread:$0]  %s4, 1536, %s294, [#allocation7], 128, 128, 8
        $region24: #{tpu_custom_call.1} parent=11 // pred_fallthru
          _
        // Predicated region
        $region25: #{tpu_custom_call.1} parent=11 // pred_check
          %p300 = pneg %p161
        $region26: #{tpu_custom_call.1} parent=11 // pred_check_branch
          %302 = sbr.rel (%p300) target = $region28
        $region27: #{tpu_custom_call.1} parent=11 // pred_region
          _
        $region28: #{tpu_custom_call.1} parent=11 // pred_fallthru
          _
        // Predicated region
        $region29: #{tpu_custom_call.1} parent=11 // pred_check
          %p303 = pneg %p182
        $region30: #{tpu_custom_call.1} parent=11 // pred_check_branch
          %305 = sbr.rel (%p303) target = $region32
        $region31: #{tpu_custom_call.1} parent=11 // pred_region
          %s307 = ssub.s32 1024, 1024
          %308 = vsyncadd [#allocation10], %s307
          %s309 = sshll.u32 [#allocation9], 4
          %s310 = int_to_ptr.vmem [resolvable:$true] %s309
          %315 = dma.hbm_to_vmem [thread:$0]  %s6, 1024, %s310, [#allocation10], 128, 128, 8
        $region32: #{tpu_custom_call.1} parent=11 // pred_fallthru
          _
        // Predicated region
        $region33: #{tpu_custom_call.1} parent=11 // pred_check
          %p316 = pneg %p203
        $region34: #{tpu_custom_call.1} parent=11 // pred_check_branch
          %318 = sbr.rel (%p316) target = $region36
        $region35: #{tpu_custom_call.1} parent=11 // pred_region
          _
        $region36: #{tpu_custom_call.1} parent=11 // pred_fallthru
          _
        // Predicated region
        $region37: #{tpu_custom_call.1} parent=11 // pred_check
          %p319 = pneg %p224
        $region38: #{tpu_custom_call.1} parent=11 // pred_check_branch
          %321 = sbr.rel (%p319) target = $region40
        $region39: #{tpu_custom_call.1} parent=11 // pred_region
          _
        $region40: #{tpu_custom_call.1} parent=11 // pred_fallthru
          _
      $region12: #{tpu_custom_call.1} parent=5 // pred_fallthru
        _
      %p322 = scmp.lt.s32.totalorder %s25, 5
      // Predicated region
      $region41: #{tpu_custom_call.1} parent=5 // pred_check
        %p323 = pneg %p322
      $region42: #{tpu_custom_call.1} parent=5 // pred_check_branch
        %325 = sbr.rel (%p323) target = $region44
      $region43: #{tpu_custom_call.1} parent=5 // pred_region
        // Predicated region
        $region45: #{tpu_custom_call.1} parent=43 // pred_check
          %p326 = pneg %p45
        $region46: #{tpu_custom_call.1} parent=43 // pred_check_branch
          %328 = sbr.rel (%p326) target = $region48
        $region47: #{tpu_custom_call.1} parent=43 // pred_region
          %s329 = sand.u32 %s35, 1
          %s330 = scalar_lea.sflag [#allocation4], %s329
          %s331 = sand.u32 %s35, 1
          %s332 = smul.addr %s331, 4
          %s333 = scalar_lea.vmem [#allocation3], %s332
          %s335 = ssub.s32 64, 64
          %336 = vsyncadd %s330, %s335
          %s337 = smul.addr %s25, 64
          %s338 = scalar_lea.hbm %s0, %s337
          %s340 = sshll.u32 %s333, 4
          %s341 = int_to_ptr.vmem [resolvable:$true] %s340
          %343 = dma.hbm_to_vmem [thread:$0]  %s338, 64, %s341, %s330
        $region48: #{tpu_custom_call.1} parent=43 // pred_fallthru
          _
        // Predicated region
        $region49: #{tpu_custom_call.1} parent=43 // pred_check
          %p344 = pneg %p71
        $region50: #{tpu_custom_call.1} parent=43 // pred_check_branch
          %346 = sbr.rel (%p344) target = $region52
        $region51: #{tpu_custom_call.1} parent=43 // pred_region
          %s347 = sand.u32 %s25, 1
          %s348 = scalar_lea.sflag [#allocation7], %s347
          %s349 = sand.u32 %s61, 1
          %s350 = smul.addr %s349, 128
          %s351 = scalar_lea.vmem [#allocation6], %s350
          %s352 = smul.u32 16, %s25
          %s354 = ssub.s32 2048, 2048
          %355 = vsyncadd %s348, %s354
          %s356 = smul.addr %s352, 128
          %s357 = scalar_lea.hbm %s1, %s356
          %s358 = sshll.u32 %s351, 4
          %s359 = int_to_ptr.vmem [resolvable:$true] %s358
          %364 = dma.hbm_to_vmem [thread:$0]  %s357, 2048, %s359, %s348, 128, 128, 8
        $region52: #{tpu_custom_call.1} parent=43 // pred_fallthru
          _
      $region44: #{tpu_custom_call.1} parent=5 // pred_fallthru
        _
      %p365 = scmp.le.s32.totalorder 1, %s25
      %p366 = scmp.lt.s32.totalorder %s25, 6
      %p367 = pnand %p365, %p366
      %p368 = pneg %p367
      // Predicated region
      $region53: #{tpu_custom_call.1} parent=5 // pred_check
        _
      $region54: #{tpu_custom_call.1} parent=5 // pred_check_branch
        %370 = sbr.rel (%p367) target = $region56
      $region55: #{tpu_custom_call.1} parent=5 // pred_region
        %s371 = ssub.s32 %s25, 1
        %s372 = sand.u32 %s38, 1
        %s373 = scalar_lea.sflag [#allocation4], %s372
        %s374 = sand.u32 %s38, 1
        %s375 = smul.addr %s374, 4
        %s376 = scalar_lea.vmem [#allocation3], %s375
        // Predicated region
        $region57: #{tpu_custom_call.1} parent=55 // pred_check
          %p377 = pneg %p51
        $region58: #{tpu_custom_call.1} parent=55 // pred_check_branch
          %379 = sbr.rel (%p377) target = $region60
        $region59: #{tpu_custom_call.1} parent=55 // pred_region
          %380 = dma.done %s373, 64
        $region60: #{tpu_custom_call.1} parent=55 // pred_fallthru
          _
        %s381 = sand.u32 %s30, 1
        %s382 = scalar_lea.sflag [#allocation7], %s381
        %s383 = sand.u32 %s64, 1
        %s384 = smul.addr %s383, 128
        %s385 = scalar_lea.vmem [#allocation6], %s384
        // Predicated region
        $region61: #{tpu_custom_call.1} parent=55 // pred_check
          %p386 = pneg %p77
        $region62: #{tpu_custom_call.1} parent=55 // pred_check_branch
          %388 = sbr.rel (%p386) target = $region64
        $region63: #{tpu_custom_call.1} parent=55 // pred_region
          %389 = dma.done %s382, 2048
        $region64: #{tpu_custom_call.1} parent=55 // pred_fallthru
          _
        // Predicated region
        $region65: #{tpu_custom_call.1} parent=55 // pred_check
          %p390 = pneg %p140
        $region66: #{tpu_custom_call.1} parent=55 // pred_check_branch
          %392 = sbr.rel (%p390) target = $region68
        $region67: #{tpu_custom_call.1} parent=55 // pred_region
          %393 = dma.done [#allocation7], 1536
        $region68: #{tpu_custom_call.1} parent=55 // pred_fallthru
          _
        // Predicated region
        $region69: #{tpu_custom_call.1} parent=55 // pred_check
          %p394 = pneg %p182
        $region70: #{tpu_custom_call.1} parent=55 // pred_check_branch
          %396 = sbr.rel (%p394) target = $region72
        $region71: #{tpu_custom_call.1} parent=55 // pred_region
          %397 = dma.done [#allocation10], 1024
        $region72: #{tpu_custom_call.1} parent=55 // pred_fallthru
          _
        %s398 = sand.u32 %s38, 1
        %s399 = scalar_lea.sflag [#allocation4], %s398
        %s400 = sand.u32 %s38, 1
        %s401 = smul.addr %s400, 4
        %s402 = scalar_lea.vmem [#allocation3], %s401
        %p403 = pneg %p51
        %p404 = pneg %p48
        %s405 = sand.u32 %s30, 1
        %s406 = scalar_lea.sflag [#allocation7], %s405
        %s407 = sand.u32 %s64, 1
        %s408 = smul.addr %s407, 128
        %s409 = scalar_lea.vmem [#allocation6], %s408
        %p410 = pneg %p77
        %p411 = pneg %p74
        %p412 = pneg %p98
        %p413 = pneg %p95
        %p414 = pneg %p119
        %p415 = pneg %p116
        %p416 = pneg %p140
        %p417 = pneg %p137
        %p418 = pneg %p161
        %p419 = pneg %p158
        %p420 = pneg %p182
        %p421 = pneg %p179
        %p422 = pneg %p203
        %p423 = pneg %p200
        %p424 = pneg %p224
        %p425 = pneg %p221
        %p426 = pneg %p245
        %p427 = pneg %p242
        %p428 = pneg %p266
        %p429 = pneg %p263
        %s430 = smul.u32 16, %s30
        %p431 = scmp.eq.s32.totalorder %s30, 0
        // Predicated region
        $region73: #{tpu_custom_call.1} parent=55 // pred_check
          %p432 = pneg %p431
        $region74: #{tpu_custom_call.1} parent=55 // pred_check_branch
          %434 = sbr.rel (%p432) target = $region76
        $region75: #{tpu_custom_call.1} parent=55 // pred_region
          %435 = vst [vmem:[#allocation2] sm:$0xf] 0.0
        $region76: #{tpu_custom_call.1} parent=55 // pred_fallthru
          _
        %v436 = vld [vmem:[#allocation2] sm:$0xf]
        %v437 = vld [vmem:[%s376] sm:$0xf]
        %v438 = vld [vmem:[%s385] sm:$0xff]
        %v439 = vld [vmem:[%s385 + $0x8] sm:$0xff]
        %v440 = vld [vmem:[%s385 + $0x10] sm:$0xff]
        %v441 = vld [vmem:[%s385 + $0x18] sm:$0xff]
        %v442 = vld [vmem:[%s385 + $0x20] sm:$0xff]
        %v443 = vld [vmem:[%s385 + $0x28] sm:$0xff]
        %v444 = vld [vmem:[%s385 + $0x30] sm:$0xff]
        %v445 = vld [vmem:[%s385 + $0x38] sm:$0xff]
        %v446 = vld [vmem:[%s385 + $0x40] sm:$0xff]
        %v447 = vld [vmem:[%s385 + $0x48] sm:$0xff]
        %v448 = vld [vmem:[%s385 + $0x50] sm:$0xff]
        %v449 = vld [vmem:[%s385 + $0x58] sm:$0xff]
        %v450 = vld [vmem:[%s385 + $0x60] sm:$0xff]
        %v451 = vld [vmem:[%s385 + $0x68] sm:$0xff]
        %v452 = vld [vmem:[%s385 + $0x70] sm:$0xff]
        %v453 = vld [vmem:[%s385 + $0x78] sm:$0xff]
        %454 = vmatprep.subr.mxu0 0.0
        %v455 = vand.u32 %v438, 4294901760
        %456 = vmatpush1.msra.mxu0 %v455
        %457 = vmatprep.subr.mxu0 0.0
        %v458 = vand.u32 %v439, 4294901760
        %459 = vmatpush1.msra.mxu0 %v458
        %460 = vmatprep.subr.mxu0 0.0
        %v461 = vand.u32 %v440, 4294901760
        %462 = vmatpush1.msra.mxu0 %v461
        %463 = vmatprep.subr.mxu0 0.0
        %v464 = vand.u32 %v441, 4294901760
        %465 = vmatpush1.msra.mxu0 %v464
        %466 = vmatprep.subr.mxu0 0.0
        %v467 = vand.u32 %v442, 4294901760
        %468 = vmatpush1.msra.mxu0 %v467
        %469 = vmatprep.subr.mxu0 0.0
        %v470 = vand.u32 %v443, 4294901760
        %471 = vmatpush1.msra.mxu0 %v470
        %472 = vmatprep.subr.mxu0 0.0
        %v473 = vand.u32 %v444, 4294901760
        %474 = vmatpush1.msra.mxu0 %v473
        %475 = vmatprep.subr.mxu0 0.0
        %v476 = vand.u32 %v445, 4294901760
        %477 = vmatpush1.msra.mxu0 %v476
        %478 = vmatprep.subr.mxu0 0.0
        %v479 = vand.u32 %v446, 4294901760
        %480 = vmatpush1.msra.mxu0 %v479
        %481 = vmatprep.subr.mxu0 0.0
        %v482 = vand.u32 %v447, 4294901760
        %483 = vmatpush1.msra.mxu0 %v482
        %484 = vmatprep.subr.mxu0 0.0
        %v485 = vand.u32 %v448, 4294901760
        %486 = vmatpush1.msra.mxu0 %v485
        %487 = vmatprep.subr.mxu0 0.0
        %v488 = vand.u32 %v449, 4294901760
        %489 = vmatpush1.msra.mxu0 %v488
        %490 = vmatprep.subr.mxu0 0.0
        %v491 = vand.u32 %v450, 4294901760
        %492 = vmatpush1.msra.mxu0 %v491
        %493 = vmatprep.subr.mxu0 0.0
        %v494 = vand.u32 %v451, 4294901760
        %495 = vmatpush1.msra.mxu0 %v494
        %496 = vmatprep.subr.mxu0 0.0
        %v497 = vand.u32 %v452, 4294901760
        %498 = vmatpush1.msra.mxu0 %v497
        %499 = vmatprep.subr.mxu0 0.0
        %v500 = vand.u32 %v453, 4294901760
        %501 = vmatpush1.msra.mxu0 %v500
        %502 = vmatprep.subr.mxu0 0.0
        %503 = vmatpush1.msra.mxu0 0.0
        %504 = vmatprep.subr.mxu0 0.0
        %505 = vmatpush1.msra.mxu0 0.0
        %506 = vmatprep.subr.mxu0 0.0
        %507 = vmatpush1.msra.mxu0 0.0
        %508 = vmatprep.subr.mxu0 0.0
        %509 = vmatpush1.msra.mxu0 0.0
        %510 = vmatprep.subr.mxu0 0.0
        %511 = vmatpush1.msra.mxu0 0.0
        %512 = vmatprep.subr.mxu0 0.0
        %513 = vmatpush1.msra.mxu0 0.0
        %514 = vmatprep.subr.mxu0 0.0
        %515 = vmatpush1.msra.mxu0 0.0
        %516 = vmatprep.subr.mxu0 0.0
        %517 = vmatpush1.msra.mxu0 0.0
        %518 = vmatprep.subr.mxu0 0.0
        %519 = vmatpush1.msra.mxu0 0.0
        %520 = vmatprep.subr.mxu0 0.0
        %521 = vmatpush1.msra.mxu0 0.0
        %522 = vmatprep.subr.mxu0 0.0
        %523 = vmatpush1.msra.mxu0 0.0
        %524 = vmatprep.subr.mxu0 0.0
        %525 = vmatpush1.msra.mxu0 0.0
        %526 = vmatprep.subr.mxu0 0.0
        %527 = vmatpush1.msra.mxu0 0.0
        %528 = vmatprep.subr.mxu0 0.0
        %529 = vmatpush1.msra.mxu0 0.0
        %530 = vmatprep.subr.mxu0 0.0
        %531 = vmatpush1.msra.mxu0 0.0
        %532 = vmatprep.subr.mxu0 0.0
        %533 = vmatpush1.msra.mxu0 0.0
        %534 = vmatprep.mubr.f32.mxu0 0.0
        %v535 = vand.u32 %v437, 4294901760
        %v536 = vsub.f32 %v437, %v535
        %v537 = vand.u32 %v536, 4294901760
        %v538 = vsub.f32 %v536, %v537
        %v539 = vand.u32 %v538, 4294901760
        %540 = vmatmul.mubr.f32.gmra.mrb[0].mxu0 %v539
        %v541 = vpop.f32.mrb[0].mxu0
        %v542 = vadd.f32 0.0, %v541
        %v543 = vpop.f32.mrb[0].mxu0
        %544 = vdwg.mxu0
        %545 = vmatprep.subr.mxu0 0.0
        %v546 = vand.u32 %v438, 4294901760
        %v547 = vsub.f32 %v438, %v546
        %v548 = vand.u32 %v547, 4294901760
        %v549 = vsub.f32 %v547, %v548
        %v550 = vand.u32 %v549, 4294901760
        %551 = vmatpush1.msra.mxu0 %v550
        %552 = vmatprep.subr.mxu0 0.0
        %v553 = vand.u32 %v439, 4294901760
        %v554 = vsub.f32 %v439, %v553
        %v555 = vand.u32 %v554, 4294901760
        %v556 = vsub.f32 %v554, %v555
        %v557 = vand.u32 %v556, 4294901760
        %558 = vmatpush1.msra.mxu0 %v557
        %559 = vmatprep.subr.mxu0 0.0
        %v560 = vand.u32 %v440, 4294901760
        %v561 = vsub.f32 %v440, %v560
        %v562 = vand.u32 %v561, 4294901760
        %v563 = vsub.f32 %v561, %v562
        %v564 = vand.u32 %v563, 4294901760
        %565 = vmatpush1.msra.mxu0 %v564
        %566 = vmatprep.subr.mxu0 0.0
        %v567 = vand.u32 %v441, 4294901760
        %v568 = vsub.f32 %v441, %v567
        %v569 = vand.u32 %v568, 4294901760
        %v570 = vsub.f32 %v568, %v569
        %v571 = vand.u32 %v570, 4294901760
        %572 = vmatpush1.msra.mxu0 %v571
        %573 = vmatprep.subr.mxu0 0.0
        %v574 = vand.u32 %v442, 4294901760
        %v575 = vsub.f32 %v442, %v574
        %v576 = vand.u32 %v575, 4294901760
        %v577 = vsub.f32 %v575, %v576
        %v578 = vand.u32 %v577, 4294901760
        %579 = vmatpush1.msra.mxu0 %v578
        %580 = vmatprep.subr.mxu0 0.0
        %v581 = vand.u32 %v443, 4294901760
        %v582 = vsub.f32 %v443, %v581
        %v583 = vand.u32 %v582, 4294901760
        %v584 = vsub.f32 %v582, %v583
        %v585 = vand.u32 %v584, 4294901760
        %586 = vmatpush1.msra.mxu0 %v585
        %587 = vmatprep.subr.mxu0 0.0
        %v588 = vand.u32 %v444, 4294901760
        %v589 = vsub.f32 %v444, %v588
        %v590 = vand.u32 %v589, 4294901760
        %v591 = vsub.f32 %v589, %v590
        %v592 = vand.u32 %v591, 4294901760
        %593 = vmatpush1.msra.mxu0 %v592
        %594 = vmatprep.subr.mxu0 0.0
        %v595 = vand.u32 %v445, 4294901760
        %v596 = vsub.f32 %v445, %v595
        %v597 = vand.u32 %v596, 4294901760
        %v598 = vsub.f32 %v596, %v597
        %v599 = vand.u32 %v598, 4294901760
        %600 = vmatpush1.msra.mxu0 %v599
        %601 = vmatprep.subr.mxu0 0.0
        %v602 = vand.u32 %v446, 4294901760
        %v603 = vsub.f32 %v446, %v602
        %v604 = vand.u32 %v603, 4294901760
        %v605 = vsub.f32 %v603, %v604
        %v606 = vand.u32 %v605, 4294901760
        %607 = vmatpush1.msra.mxu0 %v606
        %608 = vmatprep.subr.mxu0 0.0
        %v609 = vand.u32 %v447, 4294901760
        %v610 = vsub.f32 %v447, %v609
        %v611 = vand.u32 %v610, 4294901760
        %v612 = vsub.f32 %v610, %v611
        %v613 = vand.u32 %v612, 4294901760
        %614 = vmatpush1.msra.mxu0 %v613
        %615 = vmatprep.subr.mxu0 0.0
        %v616 = vand.u32 %v448, 4294901760
        %v617 = vsub.f32 %v448, %v616
        %v618 = vand.u32 %v617, 4294901760
        %v619 = vsub.f32 %v617, %v618
        %v620 = vand.u32 %v619, 4294901760
        %621 = vmatpush1.msra.mxu0 %v620
        %622 = vmatprep.subr.mxu0 0.0
        %v623 = vand.u32 %v449, 4294901760
        %v624 = vsub.f32 %v449, %v623
        %v625 = vand.u32 %v624, 4294901760
        %v626 = vsub.f32 %v624, %v625
        %v627 = vand.u32 %v626, 4294901760
        %628 = vmatpush1.msra.mxu0 %v627
        %629 = vmatprep.subr.mxu0 0.0
        %v630 = vand.u32 %v450, 4294901760
        %v631 = vsub.f32 %v450, %v630
        %v632 = vand.u32 %v631, 4294901760
        %v633 = vsub.f32 %v631, %v632
        %v634 = vand.u32 %v633, 4294901760
        %635 = vmatpush1.msra.mxu0 %v634
        %636 = vmatprep.subr.mxu0 0.0
        %v637 = vand.u32 %v451, 4294901760
        %v638 = vsub.f32 %v451, %v637
        %v639 = vand.u32 %v638, 4294901760
        %v640 = vsub.f32 %v638, %v639
        %v641 = vand.u32 %v640, 4294901760
        %642 = vmatpush1.msra.mxu0 %v641
        %643 = vmatprep.subr.mxu0 0.0
        %v644 = vand.u32 %v452, 4294901760
        %v645 = vsub.f32 %v452, %v644
        %v646 = vand.u32 %v645, 4294901760
        %v647 = vsub.f32 %v645, %v646
        %v648 = vand.u32 %v647, 4294901760
        %649 = vmatpush1.msra.mxu0 %v648
        %650 = vmatprep.subr.mxu0 0.0
        %v651 = vand.u32 %v453, 4294901760
        %v652 = vsub.f32 %v453, %v651
        %v653 = vand.u32 %v652, 4294901760
        %v654 = vsub.f32 %v652, %v653
        %v655 = vand.u32 %v654, 4294901760
        %656 = vmatpush1.msra.mxu0 %v655
        %657 = vmatprep.subr.mxu0 0.0
        %658 = vmatpush1.msra.mxu0 0.0
        %659 = vmatprep.subr.mxu0 0.0
        %660 = vmatpush1.msra.mxu0 0.0
        %661 = vmatprep.subr.mxu0 0.0
        %662 = vmatpush1.msra.mxu0 0.0
        %663 = vmatprep.subr.mxu0 0.0
        %664 = vmatpush1.msra.mxu0 0.0
        %665 = vmatprep.subr.mxu0 0.0
        %666 = vmatpush1.msra.mxu0 0.0
        %667 = vmatprep.subr.mxu0 0.0
        %668 = vmatpush1.msra.mxu0 0.0
        %669 = vmatprep.subr.mxu0 0.0
        %670 = vmatpush1.msra.mxu0 0.0
        %671 = vmatprep.subr.mxu0 0.0
        %672 = vmatpush1.msra.mxu0 0.0
        %673 = vmatprep.subr.mxu0 0.0
        %674 = vmatpush1.msra.mxu0 0.0
        %675 = vmatprep.subr.mxu0 0.0
        %676 = vmatpush1.msra.mxu0 0.0
        %677 = vmatprep.subr.mxu0 0.0
        %678 = vmatpush1.msra.mxu0 0.0
        %679 = vmatprep.subr.mxu0 0.0
        %680 = vmatpush1.msra.mxu0 0.0
        %681 = vmatprep.subr.mxu0 0.0
        %682 = vmatpush1.msra.mxu0 0.0
        %683 = vmatprep.subr.mxu0 0.0
        %684 = vmatpush1.msra.mxu0 0.0
        %685 = vmatprep.subr.mxu0 0.0
        %686 = vmatpush1.msra.mxu0 0.0
        %687 = vmatprep.subr.mxu0 0.0
        %688 = vmatpush1.msra.mxu0 0.0
        %689 = vmatprep.mubr.f32.mxu0 0.0
        %v690 = vand.u32 %v437, 4294901760
        %691 = vmatmul.mubr.f32.gmra.mrb[0].mxu0 %v690
        %v692 = vpop.f32.mrb[0].mxu0
        %v693 = vadd.f32 %v542, %v692
        %v694 = vpop.f32.mrb[0].mxu0
        %695 = vdwg.mxu0
        %696 = vmatprep.subr.mxu0 0.0
        %v697 = vand.u32 %v438, 4294901760
        %v698 = vsub.f32 %v438, %v697
        %699 = vmatpush1.msra.mxu0 %v698
        %700 = vmatprep.subr.mxu0 0.0
        %v701 = vand.u32 %v439, 4294901760
        %v702 = vsub.f32 %v439, %v701
        %703 = vmatpush1.msra.mxu0 %v702
        %704 = vmatprep.subr.mxu0 0.0
        %v705 = vand.u32 %v440, 4294901760
        %v706 = vsub.f32 %v440, %v705
        %707 = vmatpush1.msra.mxu0 %v706
        %708 = vmatprep.subr.mxu0 0.0
        %v709 = vand.u32 %v441, 4294901760
        %v710 = vsub.f32 %v441, %v709
        %711 = vmatpush1.msra.mxu0 %v710
        %712 = vmatprep.subr.mxu0 0.0
        %v713 = vand.u32 %v442, 4294901760
        %v714 = vsub.f32 %v442, %v713
        %715 = vmatpush1.msra.mxu0 %v714
        %716 = vmatprep.subr.mxu0 0.0
        %v717 = vand.u32 %v443, 4294901760
        %v718 = vsub.f32 %v443, %v717
        %719 = vmatpush1.msra.mxu0 %v718
        %720 = vmatprep.subr.mxu0 0.0
        %v721 = vand.u32 %v444, 4294901760
        %v722 = vsub.f32 %v444, %v721
        %723 = vmatpush1.msra.mxu0 %v722
        %724 = vmatprep.subr.mxu0 0.0
        %v725 = vand.u32 %v445, 4294901760
        %v726 = vsub.f32 %v445, %v725
        %727 = vmatpush1.msra.mxu0 %v726
        %728 = vmatprep.subr.mxu0 0.0
        %v729 = vand.u32 %v446, 4294901760
        %v730 = vsub.f32 %v446, %v729
        %731 = vmatpush1.msra.mxu0 %v730
        %732 = vmatprep.subr.mxu0 0.0
        %v733 = vand.u32 %v447, 4294901760
        %v734 = vsub.f32 %v447, %v733
        %735 = vmatpush1.msra.mxu0 %v734
        %736 = vmatprep.subr.mxu0 0.0
        %v737 = vand.u32 %v448, 4294901760
        %v738 = vsub.f32 %v448, %v737
        %739 = vmatpush1.msra.mxu0 %v738
        %740 = vmatprep.subr.mxu0 0.0
        %v741 = vand.u32 %v449, 4294901760
        %v742 = vsub.f32 %v449, %v741
        %743 = vmatpush1.msra.mxu0 %v742
        %744 = vmatprep.subr.mxu0 0.0
        %v745 = vand.u32 %v450, 4294901760
        %v746 = vsub.f32 %v450, %v745
        %747 = vmatpush1.msra.mxu0 %v746
        %748 = vmatprep.subr.mxu0 0.0
        %v749 = vand.u32 %v451, 4294901760
        %v750 = vsub.f32 %v451, %v749
        %751 = vmatpush1.msra.mxu0 %v750
        %752 = vmatprep.subr.mxu0 0.0
        %v753 = vand.u32 %v452, 4294901760
        %v754 = vsub.f32 %v452, %v753
        %755 = vmatpush1.msra.mxu0 %v754
        %756 = vmatprep.subr.mxu0 0.0
        %v757 = vand.u32 %v453, 4294901760
        %v758 = vsub.f32 %v453, %v757
        %759 = vmatpush1.msra.mxu0 %v758
        %760 = vmatprep.subr.mxu0 0.0
        %761 = vmatpush1.msra.mxu0 0.0
        %762 = vmatprep.subr.mxu0 0.0
        %763 = vmatpush1.msra.mxu0 0.0
        %764 = vmatprep.subr.mxu0 0.0
        %765 = vmatpush1.msra.mxu0 0.0
        %766 = vmatprep.subr.mxu0 0.0
        %767 = vmatpush1.msra.mxu0 0.0
        %768 = vmatprep.subr.mxu0 0.0
        %769 = vmatpush1.msra.mxu0 0.0
        %770 = vmatprep.subr.mxu0 0.0
        %771 = vmatpush1.msra.mxu0 0.0
        %772 = vmatprep.subr.mxu0 0.0
        %773 = vmatpush1.msra.mxu0 0.0
        %774 = vmatprep.subr.mxu0 0.0
        %775 = vmatpush1.msra.mxu0 0.0
        %776 = vmatprep.subr.mxu0 0.0
        %777 = vmatpush1.msra.mxu0 0.0
        %778 = vmatprep.subr.mxu0 0.0
        %779 = vmatpush1.msra.mxu0 0.0
        %780 = vmatprep.subr.mxu0 0.0
        %781 = vmatpush1.msra.mxu0 0.0
        %782 = vmatprep.subr.mxu0 0.0
        %783 = vmatpush1.msra.mxu0 0.0
        %784 = vmatprep.subr.mxu0 0.0
        %785 = vmatpush1.msra.mxu0 0.0
        %786 = vmatprep.subr.mxu0 0.0
        %787 = vmatpush1.msra.mxu0 0.0
        %788 = vmatprep.subr.mxu0 0.0
        %789 = vmatpush1.msra.mxu0 0.0
        %790 = vmatprep.subr.mxu0 0.0
        %791 = vmatpush1.msra.mxu0 0.0
        %792 = vmatprep.mubr.f32.mxu0 0.0
        %v793 = vand.u32 %v437, 4294901760
        %v794 = vsub.f32 %v437, %v793
        %795 = vmatmul.mubr.f32.gmra.mrb[0].mxu0 %v794
        %v796 = vpop.f32.mrb[0].mxu0
        %v797 = vadd.f32 %v693, %v796
        %v798 = vpop.f32.mrb[0].mxu0
        %799 = vdwg.mxu0
        %800 = vmatprep.subr.mxu0 0.0
        %v801 = vand.u32 %v438, 4294901760
        %802 = vmatpush1.msra.mxu0 %v801
        %803 = vmatprep.subr.mxu0 0.0
        %v804 = vand.u32 %v439, 4294901760
        %805 = vmatpush1.msra.mxu0 %v804
        %806 = vmatprep.subr.mxu0 0.0
        %v807 = vand.u32 %v440, 4294901760
        %808 = vmatpush1.msra.mxu0 %v807
        %809 = vmatprep.subr.mxu0 0.0
        %v810 = vand.u32 %v441, 4294901760
        %811 = vmatpush1.msra.mxu0 %v810
        %812 = vmatprep.subr.mxu0 0.0
        %v813 = vand.u32 %v442, 4294901760
        %814 = vmatpush1.msra.mxu0 %v813
        %815 = vmatprep.subr.mxu0 0.0
        %v816 = vand.u32 %v443, 4294901760
        %817 = vmatpush1.msra.mxu0 %v816
        %818 = vmatprep.subr.mxu0 0.0
        %v819 = vand.u32 %v444, 4294901760
        %820 = vmatpush1.msra.mxu0 %v819
        %821 = vmatprep.subr.mxu0 0.0
        %v822 = vand.u32 %v445, 4294901760
        %823 = vmatpush1.msra.mxu0 %v822
        %824 = vmatprep.subr.mxu0 0.0
        %v825 = vand.u32 %v446, 4294901760
        %826 = vmatpush1.msra.mxu0 %v825
        %827 = vmatprep.subr.mxu0 0.0
        %v828 = vand.u32 %v447, 4294901760
        %829 = vmatpush1.msra.mxu0 %v828
        %830 = vmatprep.subr.mxu0 0.0
        %v831 = vand.u32 %v448, 4294901760
        %832 = vmatpush1.msra.mxu0 %v831
        %833 = vmatprep.subr.mxu0 0.0
        %v834 = vand.u32 %v449, 4294901760
        %835 = vmatpush1.msra.mxu0 %v834
        %836 = vmatprep.subr.mxu0 0.0
        %v837 = vand.u32 %v450, 4294901760
        %838 = vmatpush1.msra.mxu0 %v837
        %839 = vmatprep.subr.mxu0 0.0
        %v840 = vand.u32 %v451, 4294901760
        %841 = vmatpush1.msra.mxu0 %v840
        %842 = vmatprep.subr.mxu0 0.0
        %v843 = vand.u32 %v452, 4294901760
        %844 = vmatpush1.msra.mxu0 %v843
        %845 = vmatprep.subr.mxu0 0.0
        %v846 = vand.u32 %v453, 4294901760
        %847 = vmatpush1.msra.mxu0 %v846
        %848 = vmatprep.subr.mxu0 0.0
        %849 = vmatpush1.msra.mxu0 0.0
        %850 = vmatprep.subr.mxu0 0.0
        %851 = vmatpush1.msra.mxu0 0.0
        %852 = vmatprep.subr.mxu0 0.0
        %853 = vmatpush1.msra.mxu0 0.0
        %854 = vmatprep.subr.mxu0 0.0
        %855 = vmatpush1.msra.mxu0 0.0
        %856 = vmatprep.subr.mxu0 0.0
        %857 = vmatpush1.msra.mxu0 0.0
        %858 = vmatprep.subr.mxu0 0.0
        %859 = vmatpush1.msra.mxu0 0.0
        %860 = vmatprep.subr.mxu0 0.0
        %861 = vmatpush1.msra.mxu0 0.0
        %862 = vmatprep.subr.mxu0 0.0
        %863 = vmatpush1.msra.mxu0 0.0
        %864 = vmatprep.subr.mxu0 0.0
        %865 = vmatpush1.msra.mxu0 0.0
        %866 = vmatprep.subr.mxu0 0.0
        %867 = vmatpush1.msra.mxu0 0.0
        %868 = vmatprep.subr.mxu0 0.0
        %869 = vmatpush1.msra.mxu0 0.0
        %870 = vmatprep.subr.mxu0 0.0
        %871 = vmatpush1.msra.mxu0 0.0
        %872 = vmatprep.subr.mxu0 0.0
        %873 = vmatpush1.msra.mxu0 0.0
        %874 = vmatprep.subr.mxu0 0.0
        %875 = vmatpush1.msra.mxu0 0.0
        %876 = vmatprep.subr.mxu0 0.0
        %877 = vmatpush1.msra.mxu0 0.0
        %878 = vmatprep.subr.mxu0 0.0
        %879 = vmatpush1.msra.mxu0 0.0
        %880 = vmatprep.mubr.f32.mxu0 0.0
        %v881 = vand.u32 %v437, 4294901760
        %v882 = vsub.f32 %v437, %v881
        %v883 = vand.u32 %v882, 4294901760
        %884 = vmatmul.mubr.f32.gmra.mrb[0].mxu0 %v883
        %v885 = vpop.f32.mrb[0].mxu0
        %v886 = vadd.f32 %v797, %v885
        %v887 = vpop.f32.mrb[0].mxu0
        %888 = vdwg.mxu0
        %889 = vmatprep.subr.mxu0 0.0
        %v890 = vand.u32 %v438, 4294901760
        %v891 = vsub.f32 %v438, %v890
        %v892 = vand.u32 %v891, 4294901760
        %893 = vmatpush1.msra.mxu0 %v892
        %894 = vmatprep.subr.mxu0 0.0
        %v895 = vand.u32 %v439, 4294901760
        %v896 = vsub.f32 %v439, %v895
        %v897 = vand.u32 %v896, 4294901760
        %898 = vmatpush1.msra.mxu0 %v897
        %899 = vmatprep.subr.mxu0 0.0
        %v900 = vand.u32 %v440, 4294901760
        %v901 = vsub.f32 %v440, %v900
        %v902 = vand.u32 %v901, 4294901760
        %903 = vmatpush1.msra.mxu0 %v902
        %904 = vmatprep.subr.mxu0 0.0
        %v905 = vand.u32 %v441, 4294901760
        %v906 = vsub.f32 %v441, %v905
        %v907 = vand.u32 %v906, 4294901760
        %908 = vmatpush1.msra.mxu0 %v907
        %909 = vmatprep.subr.mxu0 0.0
        %v910 = vand.u32 %v442, 4294901760
        %v911 = vsub.f32 %v442, %v910
        %v912 = vand.u32 %v911, 4294901760
        %913 = vmatpush1.msra.mxu0 %v912
        %914 = vmatprep.subr.mxu0 0.0
        %v915 = vand.u32 %v443, 4294901760
        %v916 = vsub.f32 %v443, %v915
        %v917 = vand.u32 %v916, 4294901760
        %918 = vmatpush1.msra.mxu0 %v917
        %919 = vmatprep.subr.mxu0 0.0
        %v920 = vand.u32 %v444, 4294901760
        %v921 = vsub.f32 %v444, %v920
        %v922 = vand.u32 %v921, 4294901760
        %923 = vmatpush1.msra.mxu0 %v922
        %924 = vmatprep.subr.mxu0 0.0
        %v925 = vand.u32 %v445, 4294901760
        %v926 = vsub.f32 %v445, %v925
        %v927 = vand.u32 %v926, 4294901760
        %928 = vmatpush1.msra.mxu0 %v927
        %929 = vmatprep.subr.mxu0 0.0
        %v930 = vand.u32 %v446, 4294901760
        %v931 = vsub.f32 %v446, %v930
        %v932 = vand.u32 %v931, 4294901760
        %933 = vmatpush1.msra.mxu0 %v932
        %934 = vmatprep.subr.mxu0 0.0
        %v935 = vand.u32 %v447, 4294901760
        %v936 = vsub.f32 %v447, %v935
        %v937 = vand.u32 %v936, 4294901760
        %938 = vmatpush1.msra.mxu0 %v937
        %939 = vmatprep.subr.mxu0 0.0
        %v940 = vand.u32 %v448, 4294901760
        %v941 = vsub.f32 %v448, %v940
        %v942 = vand.u32 %v941, 4294901760
        %943 = vmatpush1.msra.mxu0 %v942
        %944 = vmatprep.subr.mxu0 0.0
        %v945 = vand.u32 %v449, 4294901760
        %v946 = vsub.f32 %v449, %v945
        %v947 = vand.u32 %v946, 4294901760
        %948 = vmatpush1.msra.mxu0 %v947
        %949 = vmatprep.subr.mxu0 0.0
        %v950 = vand.u32 %v450, 4294901760
        %v951 = vsub.f32 %v450, %v950
        %v952 = vand.u32 %v951, 4294901760
        %953 = vmatpush1.msra.mxu0 %v952
        %954 = vmatprep.subr.mxu0 0.0
        %v955 = vand.u32 %v451, 4294901760
        %v956 = vsub.f32 %v451, %v955
        %v957 = vand.u32 %v956, 4294901760
        %958 = vmatpush1.msra.mxu0 %v957
        %959 = vmatprep.subr.mxu0 0.0
        %v960 = vand.u32 %v452, 4294901760
        %v961 = vsub.f32 %v452, %v960
        %v962 = vand.u32 %v961, 4294901760
        %963 = vmatpush1.msra.mxu0 %v962
        %964 = vmatprep.subr.mxu0 0.0
        %v965 = vand.u32 %v453, 4294901760
        %v966 = vsub.f32 %v453, %v965
        %v967 = vand.u32 %v966, 4294901760
        %968 = vmatpush1.msra.mxu0 %v967
        %969 = vmatprep.subr.mxu0 0.0
        %970 = vmatpush1.msra.mxu0 0.0
        %971 = vmatprep.subr.mxu0 0.0
        %972 = vmatpush1.msra.mxu0 0.0
        %973 = vmatprep.subr.mxu0 0.0
        %974 = vmatpush1.msra.mxu0 0.0
        %975 = vmatprep.subr.mxu0 0.0
        %976 = vmatpush1.msra.mxu0 0.0
        %977 = vmatprep.subr.mxu0 0.0
        %978 = vmatpush1.msra.mxu0 0.0
        %979 = vmatprep.subr.mxu0 0.0
        %980 = vmatpush1.msra.mxu0 0.0
        %981 = vmatprep.subr.mxu0 0.0
        %982 = vmatpush1.msra.mxu0 0.0
        %983 = vmatprep.subr.mxu0 0.0
        %984 = vmatpush1.msra.mxu0 0.0
        %985 = vmatprep.subr.mxu0 0.0
        %986 = vmatpush1.msra.mxu0 0.0
        %987 = vmatprep.subr.mxu0 0.0
        %988 = vmatpush1.msra.mxu0 0.0
        %989 = vmatprep.subr.mxu0 0.0
        %990 = vmatpush1.msra.mxu0 0.0
        %991 = vmatprep.subr.mxu0 0.0
        %992 = vmatpush1.msra.mxu0 0.0
        %993 = vmatprep.subr.mxu0 0.0
        %994 = vmatpush1.msra.mxu0 0.0
        %995 = vmatprep.subr.mxu0 0.0
        %996 = vmatpush1.msra.mxu0 0.0
        %997 = vmatprep.subr.mxu0 0.0
        %998 = vmatpush1.msra.mxu0 0.0
        %999 = vmatprep.subr.mxu0 0.0
        %1000 = vmatpush1.msra.mxu0 0.0
        %1001 = vmatprep.mubr.f32.mxu0 0.0
        %v1002 = vand.u32 %v437, 4294901760
        %1003 = vmatmul.mubr.f32.gmra.mrb[0].mxu0 %v1002
        %v1004 = vpop.f32.mrb[0].mxu0
        %v1005 = vadd.f32 %v886, %v1004
        %v1006 = vpop.f32.mrb[0].mxu0
        %1007 = vdwg.mxu0
        %1008 = vmatprep.subr.mxu0 0.0
        %v1009 = vand.u32 %v438, 4294901760
        %1010 = vmatpush1.msra.mxu0 %v1009
        %1011 = vmatprep.subr.mxu0 0.0
        %v1012 = vand.u32 %v439, 4294901760
        %1013 = vmatpush1.msra.mxu0 %v1012
        %1014 = vmatprep.subr.mxu0 0.0
        %v1015 = vand.u32 %v440, 4294901760
        %1016 = vmatpush1.msra.mxu0 %v1015
        %1017 = vmatprep.subr.mxu0 0.0
        %v1018 = vand.u32 %v441, 4294901760
        %1019 = vmatpush1.msra.mxu0 %v1018
        %1020 = vmatprep.subr.mxu0 0.0
        %v1021 = vand.u32 %v442, 4294901760
        %1022 = vmatpush1.msra.mxu0 %v1021
        %1023 = vmatprep.subr.mxu0 0.0
        %v1024 = vand.u32 %v443, 4294901760
        %1025 = vmatpush1.msra.mxu0 %v1024
        %1026 = vmatprep.subr.mxu0 0.0
        %v1027 = vand.u32 %v444, 4294901760
        %1028 = vmatpush1.msra.mxu0 %v1027
        %1029 = vmatprep.subr.mxu0 0.0
        %v1030 = vand.u32 %v445, 4294901760
        %1031 = vmatpush1.msra.mxu0 %v1030
        %1032 = vmatprep.subr.mxu0 0.0
        %v1033 = vand.u32 %v446, 4294901760
        %1034 = vmatpush1.msra.mxu0 %v1033
        %1035 = vmatprep.subr.mxu0 0.0
        %v1036 = vand.u32 %v447, 4294901760
        %1037 = vmatpush1.msra.mxu0 %v1036
        %1038 = vmatprep.subr.mxu0 0.0
        %v1039 = vand.u32 %v448, 4294901760
        %1040 = vmatpush1.msra.mxu0 %v1039
        %1041 = vmatprep.subr.mxu0 0.0
        %v1042 = vand.u32 %v449, 4294901760
        %1043 = vmatpush1.msra.mxu0 %v1042
        %1044 = vmatprep.subr.mxu0 0.0
        %v1045 = vand.u32 %v450, 4294901760
        %1046 = vmatpush1.msra.mxu0 %v1045
        %1047 = vmatprep.subr.mxu0 0.0
        %v1048 = vand.u32 %v451, 4294901760
        %1049 = vmatpush1.msra.mxu0 %v1048
        %1050 = vmatprep.subr.mxu0 0.0
        %v1051 = vand.u32 %v452, 4294901760
        %1052 = vmatpush1.msra.mxu0 %v1051
        %1053 = vmatprep.subr.mxu0 0.0
        %v1054 = vand.u32 %v453, 4294901760
        %1055 = vmatpush1.msra.mxu0 %v1054
        %1056 = vmatprep.subr.mxu0 0.0
        %1057 = vmatpush1.msra.mxu0 0.0
        %1058 = vmatprep.subr.mxu0 0.0
        %1059 = vmatpush1.msra.mxu0 0.0
        %1060 = vmatprep.subr.mxu0 0.0
        %1061 = vmatpush1.msra.mxu0 0.0
        %1062 = vmatprep.subr.mxu0 0.0
        %1063 = vmatpush1.msra.mxu0 0.0
        %1064 = vmatprep.subr.mxu0 0.0
        %1065 = vmatpush1.msra.mxu0 0.0
        %1066 = vmatprep.subr.mxu0 0.0
        %1067 = vmatpush1.msra.mxu0 0.0
        %1068 = vmatprep.subr.mxu0 0.0
        %1069 = vmatpush1.msra.mxu0 0.0
        %1070 = vmatprep.subr.mxu0 0.0
        %1071 = vmatpush1.msra.mxu0 0.0
        %1072 = vmatprep.subr.mxu0 0.0
        %1073 = vmatpush1.msra.mxu0 0.0
        %1074 = vmatprep.subr.mxu0 0.0
        %1075 = vmatpush1.msra.mxu0 0.0
        %1076 = vmatprep.subr.mxu0 0.0
        %1077 = vmatpush1.msra.mxu0 0.0
        %1078 = vmatprep.subr.mxu0 0.0
        %1079 = vmatpush1.msra.mxu0 0.0
        %1080 = vmatprep.subr.mxu0 0.0
        %1081 = vmatpush1.msra.mxu0 0.0
        %1082 = vmatprep.subr.mxu0 0.0
        %1083 = vmatpush1.msra.mxu0 0.0
        %1084 = vmatprep.subr.mxu0 0.0
        %1085 = vmatpush1.msra.mxu0 0.0
        %1086 = vmatprep.subr.mxu0 0.0
        %1087 = vmatpush1.msra.mxu0 0.0
        %1088 = vmatprep.mubr.f32.mxu0 0.0
        %v1089 = vand.u32 %v437, 4294901760
        %1090 = vmatmul.mubr.f32.gmra.mrb[0].mxu0 %v1089
        %v1091 = vpop.f32.mrb[0].mxu0
        %v1092 = vadd.f32 %v1005, %v1091
        %v1093 = vpop.f32.mrb[0].mxu0
        %1094 = vdwg.mxu0
        %v1095 = vadd.f32 %v436, %v1092
        %1096 = vst [vmem:[#allocation2] sm:$0xf] %v1095
        %p1097 = scmp.eq.s32.totalorder %s30, 4
        // Predicated region
        $region77: #{tpu_custom_call.1} parent=55 // pred_check
          %p1098 = pneg %p1097
        $region78: #{tpu_custom_call.1} parent=55 // pred_check_branch
          %1100 = sbr.rel (%p1098) target = $region80
        $region79: #{tpu_custom_call.1} parent=55 // pred_region
          %v1101 = vld [vmem:[#allocation2] sm:$0xf]
          %v1102 = vld [vmem:[%s2] sm:$0xf]
          %v1103 = vld [vmem:[#allocation8] sm:$0xff]
          %v1104 = vld [vmem:[#allocation8 + $0x8] sm:$0xff]
          %v1105 = vld [vmem:[#allocation8 + $0x10] sm:$0xff]
          %v1106 = vld [vmem:[#allocation8 + $0x18] sm:$0xff]
          %vm1107 = vcmask 261120
          %v1109 = vsel %vm1107, %v1102, 0
          %1111 = vmatprep.subr.mxu0 0.0
          %v1112 = vand.u32 %v1103, 4294901760
          %1113 = vmatpush1.msra.mxu0 %v1112
          %1114 = vmatprep.subr.mxu0 0.0
          %v1115 = vand.u32 %v1104, 4294901760
          %1116 = vmatpush1.msra.mxu0 %v1115
          %1117 = vmatprep.subr.mxu0 0.0
          %v1118 = vand.u32 %v1105, 4294901760
          %1119 = vmatpush1.msra.mxu0 %v1118
          %1120 = vmatprep.subr.mxu0 0.0
          %v1121 = vand.u32 %v1106, 4294901760
          %1122 = vmatpush1.msra.mxu0 %v1121
          %1123 = vmatprep.subr.mxu0 0.0
          %1124 = vmatpush1.msra.mxu0 0.0
          %1125 = vmatprep.subr.mxu0 0.0
          %1126 = vmatpush1.msra.mxu0 0.0
          %1127 = vmatprep.subr.mxu0 0.0
          %1128 = vmatpush1.msra.mxu0 0.0
          %1129 = vmatprep.subr.mxu0 0.0
          %1130 = vmatpush1.msra.mxu0 0.0
          %1131 = vmatprep.subr.mxu0 0.0
          %1132 = vmatpush1.msra.mxu0 0.0
          %1133 = vmatprep.subr.mxu0 0.0
          %1134 = vmatpush1.msra.mxu0 0.0
          %1135 = vmatprep.subr.mxu0 0.0
          %1136 = vmatpush1.msra.mxu0 0.0
          %1137 = vmatprep.subr.mxu0 0.0
          %1138 = vmatpush1.msra.mxu0 0.0
          %1139 = vmatprep.subr.mxu0 0.0
          %1140 = vmatpush1.msra.mxu0 0.0
          %1141 = vmatprep.subr.mxu0 0.0
          %1142 = vmatpush1.msra.mxu0 0.0
          %1143 = vmatprep.subr.mxu0 0.0
          %1144 = vmatpush1.msra.mxu0 0.0
          %1145 = vmatprep.subr.mxu0 0.0
          %1146 = vmatpush1.msra.mxu0 0.0
          %1147 = vmatprep.subr.mxu0 0.0
          %1148 = vmatpush1.msra.mxu0 0.0
          %1149 = vmatprep.subr.mxu0 0.0
          %1150 = vmatpush1.msra.mxu0 0.0
          %1151 = vmatprep.subr.mxu0 0.0
          %1152 = vmatpush1.msra.mxu0 0.0
          %1153 = vmatprep.subr.mxu0 0.0
          %1154 = vmatpush1.msra.mxu0 0.0
          %1155 = vmatprep.subr.mxu0 0.0
          %1156 = vmatpush1.msra.mxu0 0.0
          %1157 = vmatprep.subr.mxu0 0.0
          %1158 = vmatpush1.msra.mxu0 0.0
          %1159 = vmatprep.subr.mxu0 0.0
          %1160 = vmatpush1.msra.mxu0 0.0
          %1161 = vmatprep.subr.mxu0 0.0
          %1162 = vmatpush1.msra.mxu0 0.0
          %1163 = vmatprep.subr.mxu0 0.0
          %1164 = vmatpush1.msra.mxu0 0.0
          %1165 = vmatprep.subr.mxu0 0.0
          %1166 = vmatpush1.msra.mxu0 0.0
          %1167 = vmatprep.subr.mxu0 0.0
          %1168 = vmatpush1.msra.mxu0 0.0
          %1169 = vmatprep.subr.mxu0 0.0
          %1170 = vmatpush1.msra.mxu0 0.0
          %1171 = vmatprep.subr.mxu0 0.0
          %1172 = vmatpush1.msra.mxu0 0.0
          %1173 = vmatprep.subr.mxu0 0.0
          %1174 = vmatpush1.msra.mxu0 0.0
          %1175 = vmatprep.subr.mxu0 0.0
          %1176 = vmatpush1.msra.mxu0 0.0
          %1177 = vmatprep.subr.mxu0 0.0
          %1178 = vmatpush1.msra.mxu0 0.0
          %1179 = vmatprep.mubr.f32.mxu0 0.0
          %v1180 = vand.u32 %v1109, 4294901760
          %v1181 = vsub.f32 %v1109, %v1180
          %v1182 = vand.u32 %v1181, 4294901760
          %v1183 = vsub.f32 %v1181, %v1182
          %v1184 = vand.u32 %v1183, 4294901760
          %1185 = vmatmul.mubr.f32.gmra.mrb[0].mxu0 %v1184
          %v1186 = vpop.f32.mrb[0].mxu0
          %v1187 = vadd.f32 0.0, %v1186
          %v1188 = vpop.f32.mrb[0].mxu0
          %1189 = vdwg.mxu0
          %1190 = vmatprep.subr.mxu0 0.0
          %v1191 = vand.u32 %v1103, 4294901760
          %v1192 = vsub.f32 %v1103, %v1191
          %v1193 = vand.u32 %v1192, 4294901760
          %v1194 = vsub.f32 %v1192, %v1193
          %v1195 = vand.u32 %v1194, 4294901760
          %1196 = vmatpush1.msra.mxu0 %v1195
          %1197 = vmatprep.subr.mxu0 0.0
          %v1198 = vand.u32 %v1104, 4294901760
          %v1199 = vsub.f32 %v1104, %v1198
          %v1200 = vand.u32 %v1199, 4294901760
          %v1201 = vsub.f32 %v1199, %v1200
          %v1202 = vand.u32 %v1201, 4294901760
          %1203 = vmatpush1.msra.mxu0 %v1202
          %1204 = vmatprep.subr.mxu0 0.0
          %v1205 = vand.u32 %v1105, 4294901760
          %v1206 = vsub.f32 %v1105, %v1205
          %v1207 = vand.u32 %v1206, 4294901760
          %v1208 = vsub.f32 %v1206, %v1207
          %v1209 = vand.u32 %v1208, 4294901760
          %1210 = vmatpush1.msra.mxu0 %v1209
          %1211 = vmatprep.subr.mxu0 0.0
          %v1212 = vand.u32 %v1106, 4294901760
          %v1213 = vsub.f32 %v1106, %v1212
          %v1214 = vand.u32 %v1213, 4294901760
          %v1215 = vsub.f32 %v1213, %v1214
          %v1216 = vand.u32 %v1215, 4294901760
          %1217 = vmatpush1.msra.mxu0 %v1216
          %1218 = vmatprep.subr.mxu0 0.0
          %1219 = vmatpush1.msra.mxu0 0.0
          %1220 = vmatprep.subr.mxu0 0.0
          %1221 = vmatpush1.msra.mxu0 0.0
          %1222 = vmatprep.subr.mxu0 0.0
          %1223 = vmatpush1.msra.mxu0 0.0
          %1224 = vmatprep.subr.mxu0 0.0
          %1225 = vmatpush1.msra.mxu0 0.0
          %1226 = vmatprep.subr.mxu0 0.0
          %1227 = vmatpush1.msra.mxu0 0.0
          %1228 = vmatprep.subr.mxu0 0.0
          %1229 = vmatpush1.msra.mxu0 0.0
          %1230 = vmatprep.subr.mxu0 0.0
          %1231 = vmatpush1.msra.mxu0 0.0
          %1232 = vmatprep.subr.mxu0 0.0
          %1233 = vmatpush1.msra.mxu0 0.0
          %1234 = vmatprep.subr.mxu0 0.0
          %1235 = vmatpush1.msra.mxu0 0.0
          %1236 = vmatprep.subr.mxu0 0.0
          %1237 = vmatpush1.msra.mxu0 0.0
          %1238 = vmatprep.subr.mxu0 0.0
          %1239 = vmatpush1.msra.mxu0 0.0
          %1240 = vmatprep.subr.mxu0 0.0
          %1241 = vmatpush1.msra.mxu0 0.0
          %1242 = vmatprep.subr.mxu0 0.0
          %1243 = vmatpush1.msra.mxu0 0.0
          %1244 = vmatprep.subr.mxu0 0.0
          %1245 = vmatpush1.msra.mxu0 0.0
          %1246 = vmatprep.subr.mxu0 0.0
          %1247 = vmatpush1.msra.mxu0 0.0
          %1248 = vmatprep.subr.mxu0 0.0
          %1249 = vmatpush1.msra.mxu0 0.0
          %1250 = vmatprep.subr.mxu0 0.0
          %1251 = vmatpush1.msra.mxu0 0.0
          %1252 = vmatprep.subr.mxu0 0.0
          %1253 = vmatpush1.msra.mxu0 0.0
          %1254 = vmatprep.subr.mxu0 0.0
          %1255 = vmatpush1.msra.mxu0 0.0
          %1256 = vmatprep.subr.mxu0 0.0
          %1257 = vmatpush1.msra.mxu0 0.0
          %1258 = vmatprep.subr.mxu0 0.0
          %1259 = vmatpush1.msra.mxu0 0.0
          %1260 = vmatprep.subr.mxu0 0.0
          %1261 = vmatpush1.msra.mxu0 0.0
          %1262 = vmatprep.subr.mxu0 0.0
          %1263 = vmatpush1.msra.mxu0 0.0
          %1264 = vmatprep.subr.mxu0 0.0
          %1265 = vmatpush1.msra.mxu0 0.0
          %1266 = vmatprep.subr.mxu0 0.0
          %1267 = vmatpush1.msra.mxu0 0.0
          %1268 = vmatprep.subr.mxu0 0.0
          %1269 = vmatpush1.msra.mxu0 0.0
          %1270 = vmatprep.subr.mxu0 0.0
          %1271 = vmatpush1.msra.mxu0 0.0
          %1272 = vmatprep.subr.mxu0 0.0
          %1273 = vmatpush1.msra.mxu0 0.0
          %1274 = vmatprep.mubr.f32.mxu0 0.0
          %v1275 = vand.u32 %v1109, 4294901760
          %1276 = vmatmul.mubr.f32.gmra.mrb[0].mxu0 %v1275
          %v1277 = vpop.f32.mrb[0].mxu0
          %v1278 = vadd.f32 %v1187, %v1277
          %v1279 = vpop.f32.mrb[0].mxu0
          %1280 = vdwg.mxu0
          %1281 = vmatprep.subr.mxu0 0.0
          %v1282 = vand.u32 %v1103, 4294901760
          %v1283 = vsub.f32 %v1103, %v1282
          %1284 = vmatpush1.msra.mxu0 %v1283
          %1285 = vmatprep.subr.mxu0 0.0
          %v1286 = vand.u32 %v1104, 4294901760
          %v1287 = vsub.f32 %v1104, %v1286
          %1288 = vmatpush1.msra.mxu0 %v1287
          %1289 = vmatprep.subr.mxu0 0.0
          %v1290 = vand.u32 %v1105, 4294901760
          %v1291 = vsub.f32 %v1105, %v1290
          %1292 = vmatpush1.msra.mxu0 %v1291
          %1293 = vmatprep.subr.mxu0 0.0
          %v1294 = vand.u32 %v1106, 4294901760
          %v1295 = vsub.f32 %v1106, %v1294
          %1296 = vmatpush1.msra.mxu0 %v1295
          %1297 = vmatprep.subr.mxu0 0.0
          %1298 = vmatpush1.msra.mxu0 0.0
          %1299 = vmatprep.subr.mxu0 0.0
          %1300 = vmatpush1.msra.mxu0 0.0
          %1301 = vmatprep.subr.mxu0 0.0
          %1302 = vmatpush1.msra.mxu0 0.0
          %1303 = vmatprep.subr.mxu0 0.0
          %1304 = vmatpush1.msra.mxu0 0.0
          %1305 = vmatprep.subr.mxu0 0.0
          %1306 = vmatpush1.msra.mxu0 0.0
          %1307 = vmatprep.subr.mxu0 0.0
          %1308 = vmatpush1.msra.mxu0 0.0
          %1309 = vmatprep.subr.mxu0 0.0
          %1310 = vmatpush1.msra.mxu0 0.0
          %1311 = vmatprep.subr.mxu0 0.0
          %1312 = vmatpush1.msra.mxu0 0.0
          %1313 = vmatprep.subr.mxu0 0.0
          %1314 = vmatpush1.msra.mxu0 0.0
          %1315 = vmatprep.subr.mxu0 0.0
          %1316 = vmatpush1.msra.mxu0 0.0
          %1317 = vmatprep.subr.mxu0 0.0
          %1318 = vmatpush1.msra.mxu0 0.0
          %1319 = vmatprep.subr.mxu0 0.0
          %1320 = vmatpush1.msra.mxu0 0.0
          %1321 = vmatprep.subr.mxu0 0.0
          %1322 = vmatpush1.msra.mxu0 0.0
          %1323 = vmatprep.subr.mxu0 0.0
          %1324 = vmatpush1.msra.mxu0 0.0
          %1325 = vmatprep.subr.mxu0 0.0
          %1326 = vmatpush1.msra.mxu0 0.0
          %1327 = vmatprep.subr.mxu0 0.0
          %1328 = vmatpush1.msra.mxu0 0.0
          %1329 = vmatprep.subr.mxu0 0.0
          %1330 = vmatpush1.msra.mxu0 0.0
          %1331 = vmatprep.subr.mxu0 0.0
          %1332 = vmatpush1.msra.mxu0 0.0
          %1333 = vmatprep.subr.mxu0 0.0
          %1334 = vmatpush1.msra.mxu0 0.0
          %1335 = vmatprep.subr.mxu0 0.0
          %1336 = vmatpush1.msra.mxu0 0.0
          %1337 = vmatprep.subr.mxu0 0.0
          %1338 = vmatpush1.msra.mxu0 0.0
          %1339 = vmatprep.subr.mxu0 0.0
          %1340 = vmatpush1.msra.mxu0 0.0
          %1341 = vmatprep.subr.mxu0 0.0
          %1342 = vmatpush1.msra.mxu0 0.0
          %1343 = vmatprep.subr.mxu0 0.0
          %1344 = vmatpush1.msra.mxu0 0.0
          %1345 = vmatprep.subr.mxu0 0.0
          %1346 = vmatpush1.msra.mxu0 0.0
          %1347 = vmatprep.subr.mxu0 0.0
          %1348 = vmatpush1.msra.mxu0 0.0
          %1349 = vmatprep.subr.mxu0 0.0
          %1350 = vmatpush1.msra.mxu0 0.0
          %1351 = vmatprep.subr.mxu0 0.0
          %1352 = vmatpush1.msra.mxu0 0.0
          %1353 = vmatprep.mubr.f32.mxu0 0.0
          %v1354 = vand.u32 %v1109, 4294901760
          %v1355 = vsub.f32 %v1109, %v1354
          %1356 = vmatmul.mubr.f32.gmra.mrb[0].mxu0 %v1355
          %v1357 = vpop.f32.mrb[0].mxu0
          %v1358 = vadd.f32 %v1278, %v1357
          %v1359 = vpop.f32.mrb[0].mxu0
          %1360 = vdwg.mxu0
          %1361 = vmatprep.subr.mxu0 0.0
          %v1362 = vand.u32 %v1103, 4294901760
          %1363 = vmatpush1.msra.mxu0 %v1362
          %1364 = vmatprep.subr.mxu0 0.0
          %v1365 = vand.u32 %v1104, 4294901760
          %1366 = vmatpush1.msra.mxu0 %v1365
          %1367 = vmatprep.subr.mxu0 0.0
          %v1368 = vand.u32 %v1105, 4294901760
          %1369 = vmatpush1.msra.mxu0 %v1368
          %1370 = vmatprep.subr.mxu0 0.0
          %v1371 = vand.u32 %v1106, 4294901760
          %1372 = vmatpush1.msra.mxu0 %v1371
          %1373 = vmatprep.subr.mxu0 0.0
          %1374 = vmatpush1.msra.mxu0 0.0
          %1375 = vmatprep.subr.mxu0 0.0
          %1376 = vmatpush1.msra.mxu0 0.0
          %1377 = vmatprep.subr.mxu0 0.0
          %1378 = vmatpush1.msra.mxu0 0.0
          %1379 = vmatprep.subr.mxu0 0.0
          %1380 = vmatpush1.msra.mxu0 0.0
          %1381 = vmatprep.subr.mxu0 0.0
          %1382 = vmatpush1.msra.mxu0 0.0
          %1383 = vmatprep.subr.mxu0 0.0
          %1384 = vmatpush1.msra.mxu0 0.0
          %1385 = vmatprep.subr.mxu0 0.0
          %1386 = vmatpush1.msra.mxu0 0.0
          %1387 = vmatprep.subr.mxu0 0.0
          %1388 = vmatpush1.msra.mxu0 0.0
          %1389 = vmatprep.subr.mxu0 0.0
          %1390 = vmatpush1.msra.mxu0 0.0
          %1391 = vmatprep.subr.mxu0 0.0
          %1392 = vmatpush1.msra.mxu0 0.0
          %1393 = vmatprep.subr.mxu0 0.0
          %1394 = vmatpush1.msra.mxu0 0.0
          %1395 = vmatprep.subr.mxu0 0.0
          %1396 = vmatpush1.msra.mxu0 0.0
          %1397 = vmatprep.subr.mxu0 0.0
          %1398 = vmatpush1.msra.mxu0 0.0
          %1399 = vmatprep.subr.mxu0 0.0
          %1400 = vmatpush1.msra.mxu0 0.0
          %1401 = vmatprep.subr.mxu0 0.0
          %1402 = vmatpush1.msra.mxu0 0.0
          %1403 = vmatprep.subr.mxu0 0.0
          %1404 = vmatpush1.msra.mxu0 0.0
          %1405 = vmatprep.subr.mxu0 0.0
          %1406 = vmatpush1.msra.mxu0 0.0
          %1407 = vmatprep.subr.mxu0 0.0
          %1408 = vmatpush1.msra.mxu0 0.0
          %1409 = vmatprep.subr.mxu0 0.0
          %1410 = vmatpush1.msra.mxu0 0.0
          %1411 = vmatprep.subr.mxu0 0.0
          %1412 = vmatpush1.msra.mxu0 0.0
          %1413 = vmatprep.subr.mxu0 0.0
          %1414 = vmatpush1.msra.mxu0 0.0
          %1415 = vmatprep.subr.mxu0 0.0
          %1416 = vmatpush1.msra.mxu0 0.0
          %1417 = vmatprep.subr.mxu0 0.0
          %1418 = vmatpush1.msra.mxu0 0.0
          %1419 = vmatprep.subr.mxu0 0.0
          %1420 = vmatpush1.msra.mxu0 0.0
          %1421 = vmatprep.subr.mxu0 0.0
          %1422 = vmatpush1.msra.mxu0 0.0
          %1423 = vmatprep.subr.mxu0 0.0
          %1424 = vmatpush1.msra.mxu0 0.0
          %1425 = vmatprep.subr.mxu0 0.0
          %1426 = vmatpush1.msra.mxu0 0.0
          %1427 = vmatprep.subr.mxu0 0.0
          %1428 = vmatpush1.msra.mxu0 0.0
          %1429 = vmatprep.mubr.f32.mxu0 0.0
          %v1430 = vand.u32 %v1109, 4294901760
          %v1431 = vsub.f32 %v1109, %v1430
          %v1432 = vand.u32 %v1431, 4294901760
          %1433 = vmatmul.mubr.f32.gmra.mrb[0].mxu0 %v1432
          %v1434 = vpop.f32.mrb[0].mxu0
          %v1435 = vadd.f32 %v1358, %v1434
          %v1436 = vpop.f32.mrb[0].mxu0
          %1437 = vdwg.mxu0
          %1438 = vmatprep.subr.mxu0 0.0
          %v1439 = vand.u32 %v1103, 4294901760
          %v1440 = vsub.f32 %v1103, %v1439
          %v1441 = vand.u32 %v1440, 4294901760
          %1442 = vmatpush1.msra.mxu0 %v1441
          %1443 = vmatprep.subr.mxu0 0.0
          %v1444 = vand.u32 %v1104, 4294901760
          %v1445 = vsub.f32 %v1104, %v1444
          %v1446 = vand.u32 %v1445, 4294901760
          %1447 = vmatpush1.msra.mxu0 %v1446
          %1448 = vmatprep.subr.mxu0 0.0
          %v1449 = vand.u32 %v1105, 4294901760
          %v1450 = vsub.f32 %v1105, %v1449
          %v1451 = vand.u32 %v1450, 4294901760
          %1452 = vmatpush1.msra.mxu0 %v1451
          %1453 = vmatprep.subr.mxu0 0.0
          %v1454 = vand.u32 %v1106, 4294901760
          %v1455 = vsub.f32 %v1106, %v1454
          %v1456 = vand.u32 %v1455, 4294901760
          %1457 = vmatpush1.msra.mxu0 %v1456
          %1458 = vmatprep.subr.mxu0 0.0
          %1459 = vmatpush1.msra.mxu0 0.0
          %1460 = vmatprep.subr.mxu0 0.0
          %1461 = vmatpush1.msra.mxu0 0.0
          %1462 = vmatprep.subr.mxu0 0.0
          %1463 = vmatpush1.msra.mxu0 0.0
          %1464 = vmatprep.subr.mxu0 0.0
          %1465 = vmatpush1.msra.mxu0 0.0
          %1466 = vmatprep.subr.mxu0 0.0
          %1467 = vmatpush1.msra.mxu0 0.0
          %1468 = vmatprep.subr.mxu0 0.0
          %1469 = vmatpush1.msra.mxu0 0.0
          %1470 = vmatprep.subr.mxu0 0.0
          %1471 = vmatpush1.msra.mxu0 0.0
          %1472 = vmatprep.subr.mxu0 0.0
          %1473 = vmatpush1.msra.mxu0 0.0
          %1474 = vmatprep.subr.mxu0 0.0
          %1475 = vmatpush1.msra.mxu0 0.0
          %1476 = vmatprep.subr.mxu0 0.0
          %1477 = vmatpush1.msra.mxu0 0.0
          %1478 = vmatprep.subr.mxu0 0.0
          %1479 = vmatpush1.msra.mxu0 0.0
          %1480 = vmatprep.subr.mxu0 0.0
          %1481 = vmatpush1.msra.mxu0 0.0
          %1482 = vmatprep.subr.mxu0 0.0
          %1483 = vmatpush1.msra.mxu0 0.0
          %1484 = vmatprep.subr.mxu0 0.0
          %1485 = vmatpush1.msra.mxu0 0.0
          %1486 = vmatprep.subr.mxu0 0.0
          %1487 = vmatpush1.msra.mxu0 0.0
          %1488 = vmatprep.subr.mxu0 0.0
          %1489 = vmatpush1.msra.mxu0 0.0
          %1490 = vmatprep.subr.mxu0 0.0
          %1491 = vmatpush1.msra.mxu0 0.0
          %1492 = vmatprep.subr.mxu0 0.0
          %1493 = vmatpush1.msra.mxu0 0.0
          %1494 = vmatprep.subr.mxu0 0.0
          %1495 = vmatpush1.msra.mxu0 0.0
          %1496 = vmatprep.subr.mxu0 0.0
          %1497 = vmatpush1.msra.mxu0 0.0
          %1498 = vmatprep.subr.mxu0 0.0
          %1499 = vmatpush1.msra.mxu0 0.0
          %1500 = vmatprep.subr.mxu0 0.0
          %1501 = vmatpush1.msra.mxu0 0.0
          %1502 = vmatprep.subr.mxu0 0.0
          %1503 = vmatpush1.msra.mxu0 0.0
          %1504 = vmatprep.subr.mxu0 0.0
          %1505 = vmatpush1.msra.mxu0 0.0
          %1506 = vmatprep.subr.mxu0 0.0
          %1507 = vmatpush1.msra.mxu0 0.0
          %1508 = vmatprep.subr.mxu0 0.0
          %1509 = vmatpush1.msra.mxu0 0.0
          %1510 = vmatprep.subr.mxu0 0.0
          %1511 = vmatpush1.msra.mxu0 0.0
          %1512 = vmatprep.subr.mxu0 0.0
          %1513 = vmatpush1.msra.mxu0 0.0
          %1514 = vmatprep.mubr.f32.mxu0 0.0
          %v1515 = vand.u32 %v1109, 4294901760
          %1516 = vmatmul.mubr.f32.gmra.mrb[0].mxu0 %v1515
          %v1517 = vpop.f32.mrb[0].mxu0
          %v1518 = vadd.f32 %v1435, %v1517
          %v1519 = vpop.f32.mrb[0].mxu0
          %1520 = vdwg.mxu0
          %1521 = vmatprep.subr.mxu0 0.0
          %v1522 = vand.u32 %v1103, 4294901760
          %1523 = vmatpush1.msra.mxu0 %v1522
          %1524 = vmatprep.subr.mxu0 0.0
          %v1525 = vand.u32 %v1104, 4294901760
          %1526 = vmatpush1.msra.mxu0 %v1525
          %1527 = vmatprep.subr.mxu0 0.0
          %v1528 = vand.u32 %v1105, 4294901760
          %1529 = vmatpush1.msra.mxu0 %v1528
          %1530 = vmatprep.subr.mxu0 0.0
          %v1531 = vand.u32 %v1106, 4294901760
          %1532 = vmatpush1.msra.mxu0 %v1531
          %1533 = vmatprep.subr.mxu0 0.0
          %1534 = vmatpush1.msra.mxu0 0.0
          %1535 = vmatprep.subr.mxu0 0.0
          %1536 = vmatpush1.msra.mxu0 0.0
          %1537 = vmatprep.subr.mxu0 0.0
          %1538 = vmatpush1.msra.mxu0 0.0
          %1539 = vmatprep.subr.mxu0 0.0
          %1540 = vmatpush1.msra.mxu0 0.0
          %1541 = vmatprep.subr.mxu0 0.0
          %1542 = vmatpush1.msra.mxu0 0.0
          %1543 = vmatprep.subr.mxu0 0.0
          %1544 = vmatpush1.msra.mxu0 0.0
          %1545 = vmatprep.subr.mxu0 0.0
          %1546 = vmatpush1.msra.mxu0 0.0
          %1547 = vmatprep.subr.mxu0 0.0
          %1548 = vmatpush1.msra.mxu0 0.0
          %1549 = vmatprep.subr.mxu0 0.0
          %1550 = vmatpush1.msra.mxu0 0.0
          %1551 = vmatprep.subr.mxu0 0.0
          %1552 = vmatpush1.msra.mxu0 0.0
          %1553 = vmatprep.subr.mxu0 0.0
          %1554 = vmatpush1.msra.mxu0 0.0
          %1555 = vmatprep.subr.mxu0 0.0
          %1556 = vmatpush1.msra.mxu0 0.0
          %1557 = vmatprep.subr.mxu0 0.0
          %1558 = vmatpush1.msra.mxu0 0.0
          %1559 = vmatprep.subr.mxu0 0.0
          %1560 = vmatpush1.msra.mxu0 0.0
          %1561 = vmatprep.subr.mxu0 0.0
          %1562 = vmatpush1.msra.mxu0 0.0
          %1563 = vmatprep.subr.mxu0 0.0
          %1564 = vmatpush1.msra.mxu0 0.0
          %1565 = vmatprep.subr.mxu0 0.0
          %1566 = vmatpush1.msra.mxu0 0.0
          %1567 = vmatprep.subr.mxu0 0.0
          %1568 = vmatpush1.msra.mxu0 0.0
          %1569 = vmatprep.subr.mxu0 0.0
          %1570 = vmatpush1.msra.mxu0 0.0
          %1571 = vmatprep.subr.mxu0 0.0
          %1572 = vmatpush1.msra.mxu0 0.0
          %1573 = vmatprep.subr.mxu0 0.0
          %1574 = vmatpush1.msra.mxu0 0.0
          %1575 = vmatprep.subr.mxu0 0.0
          %1576 = vmatpush1.msra.mxu0 0.0
          %1577 = vmatprep.subr.mxu0 0.0
          %1578 = vmatpush1.msra.mxu0 0.0
          %1579 = vmatprep.subr.mxu0 0.0
          %1580 = vmatpush1.msra.mxu0 0.0
          %1581 = vmatprep.subr.mxu0 0.0
          %1582 = vmatpush1.msra.mxu0 0.0
          %1583 = vmatprep.subr.mxu0 0.0
          %1584 = vmatpush1.msra.mxu0 0.0
          %1585 = vmatprep.subr.mxu0 0.0
          %1586 = vmatpush1.msra.mxu0 0.0
          %1587 = vmatprep.subr.mxu0 0.0
          %1588 = vmatpush1.msra.mxu0 0.0
          %1589 = vmatprep.mubr.f32.mxu0 0.0
          %v1590 = vand.u32 %v1109, 4294901760
          %1591 = vmatmul.mubr.f32.gmra.mrb[0].mxu0 %v1590
          %v1592 = vpop.f32.mrb[0].mxu0
          %v1593 = vadd.f32 %v1518, %v1592
          %v1594 = vpop.f32.mrb[0].mxu0
          %1595 = vdwg.mxu0
          %v1596 = vadd.f32 %v1101, %v1593
          %v1597 = vld [vmem:[%s5] sm:$0x1]
          %v1599 = vlaneseq
          %v1600 = vshrl.u32 %v1599, 7
          %v1601 = vsub.s32 0, %v1600
          %v1602 = vrot.slane %v1597, %v1601
          %v1604 = vadd.f32 %v1596, %v1602
          %v1605 = vld [vmem:[%s3] sm:$0xf]
          %v1606 = vxor.u32 %v1604, 2147483648
          %v1607 = vmul.f32 %v1606, 1.442695
          %v1608 = vpow.pop %v1607
          %v1609 = vadd.f32 %v1608, 1.0
          %v1610 = vrcp.pop %v1609
          %v1611 = vmul.f32 1.0, %v1610
          %v1612 = vtanh.pop %v1604
          %1614 = vrot.lane.b32.xlu0 %v1605, 16
          %v1615 = vpop.permute.xlu0 %1614
          %v1617 = vmul.f32 %v1611, %v1615
          %1619 = vrot.lane.b32.xlu0 %v1612, 96
          %v1620 = vpop.permute.xlu0 %1619
          %v1622 = vmul.f32 %v1611, %v1620
          %1624 = vrot.lane.b32.xlu0 %v1622, 16
          %v1625 = vpop.permute.xlu0 %1624
          %v1627 = vadd.f32 %v1617, %v1625
          %v1628 = vtanh.pop %v1627
          %1630 = vrot.lane.b32.xlu0 %v1628, 32
          %v1631 = vpop.permute.xlu0 %1630
          %v1633 = vmul.f32 %v1611, %v1631
          %1634 = vrot.lane.b32.xlu0 %v1605, 64
          %v1635 = vpop.permute.xlu0 %1634
          %v1637 = vmul.f32 %v1611, %v1635
          %v1638 = vadd.f32 %v1637, %v1625
          %v1639 = vtanh.pop %v1638
          %1641 = vrot.lane.b32.xlu0 %v1639, 32
          %v1642 = vpop.permute.xlu0 %1641
          %v1644 = vmul.f32 %v1611, %v1642
          %1646 = vrot.lane.b32.xlu0 %v1633, 80
          %v1647 = vpop.permute.xlu0 %1646
          %1650 = vrot.lane.b32.xlu0 %v1644, 32
          %v1651 = vpop.permute.xlu0 %1650
          %vm1653 = vcmask 130048
          %v1654 = vsel %vm1653, %v1647, %v1651
          %v1655 = vld [vmem:[#allocation9] sm:$0xff]
          %v1656 = vld [vmem:[#allocation9 + $0x8] sm:$0xff]
          %v1657 = vld [vmem:[#allocation9 + $0x10] sm:$0xff]
          %v1658 = vld [vmem:[#allocation9 + $0x18] sm:$0xff]
          %s1659 = scalar_lea.vmem %s2, 4
          %v1660 = vld [vmem:[%s1659] sm:$0xf]
          %s1661 = scalar_lea.vmem [#allocation8], 32
          %v1662 = vld [vmem:[%s1661] sm:$0xff]
          %v1663 = vld [vmem:[%s1661 + $0x8] sm:$0xff]
          %v1664 = vld [vmem:[%s1661 + $0x10] sm:$0xff]
          %v1665 = vld [vmem:[%s1661 + $0x18] sm:$0xff]
          %v1667 = vsel %vm1107, %v1660, 0
          %1669 = vmatprep.subr.mxu0 0.0
          %v1670 = vand.u32 %v1662, 4294901760
          %1671 = vmatpush1.msra.mxu0 %v1670
          %1672 = vmatprep.subr.mxu0 0.0
          %v1673 = vand.u32 %v1663, 4294901760
          %1674 = vmatpush1.msra.mxu0 %v1673
          %1675 = vmatprep.subr.mxu0 0.0
          %v1676 = vand.u32 %v1664, 4294901760
          %1677 = vmatpush1.msra.mxu0 %v1676
          %1678 = vmatprep.subr.mxu0 0.0
          %v1679 = vand.u32 %v1665, 4294901760
          %1680 = vmatpush1.msra.mxu0 %v1679
          %1681 = vmatprep.subr.mxu0 0.0
          %1682 = vmatpush1.msra.mxu0 0.0
          %1683 = vmatprep.subr.mxu0 0.0
          %1684 = vmatpush1.msra.mxu0 0.0
          %1685 = vmatprep.subr.mxu0 0.0
          %1686 = vmatpush1.msra.mxu0 0.0
          %1687 = vmatprep.subr.mxu0 0.0
          %1688 = vmatpush1.msra.mxu0 0.0
          %1689 = vmatprep.subr.mxu0 0.0
          %1690 = vmatpush1.msra.mxu0 0.0
          %1691 = vmatprep.subr.mxu0 0.0
          %1692 = vmatpush1.msra.mxu0 0.0
          %1693 = vmatprep.subr.mxu0 0.0
          %1694 = vmatpush1.msra.mxu0 0.0
          %1695 = vmatprep.subr.mxu0 0.0
          %1696 = vmatpush1.msra.mxu0 0.0
          %1697 = vmatprep.subr.mxu0 0.0
          %1698 = vmatpush1.msra.mxu0 0.0
          %1699 = vmatprep.subr.mxu0 0.0
          %1700 = vmatpush1.msra.mxu0 0.0
          %1701 = vmatprep.subr.mxu0 0.0
          %1702 = vmatpush1.msra.mxu0 0.0
          %1703 = vmatprep.subr.mxu0 0.0
          %1704 = vmatpush1.msra.mxu0 0.0
          %1705 = vmatprep.subr.mxu0 0.0
          %1706 = vmatpush1.msra.mxu0 0.0
          %1707 = vmatprep.subr.mxu0 0.0
          %1708 = vmatpush1.msra.mxu0 0.0
          %1709 = vmatprep.subr.mxu0 0.0
          %1710 = vmatpush1.msra.mxu0 0.0
          %1711 = vmatprep.subr.mxu0 0.0
          %1712 = vmatpush1.msra.mxu0 0.0
          %1713 = vmatprep.subr.mxu0 0.0
          %1714 = vmatpush1.msra.mxu0 0.0
          %1715 = vmatprep.subr.mxu0 0.0
          %1716 = vmatpush1.msra.mxu0 0.0
          %1717 = vmatprep.subr.mxu0 0.0
          %1718 = vmatpush1.msra.mxu0 0.0
          %1719 = vmatprep.subr.mxu0 0.0
          %1720 = vmatpush1.msra.mxu0 0.0
          %1721 = vmatprep.subr.mxu0 0.0
          %1722 = vmatpush1.msra.mxu0 0.0
          %1723 = vmatprep.subr.mxu0 0.0
          %1724 = vmatpush1.msra.mxu0 0.0
          %1725 = vmatprep.subr.mxu0 0.0
          %1726 = vmatpush1.msra.mxu0 0.0
          %1727 = vmatprep.subr.mxu0 0.0
          %1728 = vmatpush1.msra.mxu0 0.0
          %1729 = vmatprep.subr.mxu0 0.0
          %1730 = vmatpush1.msra.mxu0 0.0
          %1731 = vmatprep.subr.mxu0 0.0
          %1732 = vmatpush1.msra.mxu0 0.0
          %1733 = vmatprep.subr.mxu0 0.0
          %1734 = vmatpush1.msra.mxu0 0.0
          %1735 = vmatprep.subr.mxu0 0.0
          %1736 = vmatpush1.msra.mxu0 0.0
          %1737 = vmatprep.mubr.f32.mxu0 0.0
          %v1738 = vand.u32 %v1667, 4294901760
          %v1739 = vsub.f32 %v1667, %v1738
          %v1740 = vand.u32 %v1739, 4294901760
          %v1741 = vsub.f32 %v1739, %v1740
          %v1742 = vand.u32 %v1741, 4294901760
          %1743 = vmatmul.mubr.f32.gmra.mrb[0].mxu0 %v1742
          %v1744 = vpop.f32.mrb[0].mxu0
          %v1745 = vadd.f32 0.0, %v1744
          %v1746 = vpop.f32.mrb[0].mxu0
          %1747 = vdwg.mxu0
          %1748 = vmatprep.subr.mxu0 0.0
          %v1749 = vand.u32 %v1662, 4294901760
          %v1750 = vsub.f32 %v1662, %v1749
          %v1751 = vand.u32 %v1750, 4294901760
          %v1752 = vsub.f32 %v1750, %v1751
          %v1753 = vand.u32 %v1752, 4294901760
          %1754 = vmatpush1.msra.mxu0 %v1753
          %1755 = vmatprep.subr.mxu0 0.0
          %v1756 = vand.u32 %v1663, 4294901760
          %v1757 = vsub.f32 %v1663, %v1756
          %v1758 = vand.u32 %v1757, 4294901760
          %v1759 = vsub.f32 %v1757, %v1758
          %v1760 = vand.u32 %v1759, 4294901760
          %1761 = vmatpush1.msra.mxu0 %v1760
          %1762 = vmatprep.subr.mxu0 0.0
          %v1763 = vand.u32 %v1664, 4294901760
          %v1764 = vsub.f32 %v1664, %v1763
          %v1765 = vand.u32 %v1764, 4294901760
          %v1766 = vsub.f32 %v1764, %v1765
          %v1767 = vand.u32 %v1766, 4294901760
          %1768 = vmatpush1.msra.mxu0 %v1767
          %1769 = vmatprep.subr.mxu0 0.0
          %v1770 = vand.u32 %v1665, 4294901760
          %v1771 = vsub.f32 %v1665, %v1770
          %v1772 = vand.u32 %v1771, 4294901760
          %v1773 = vsub.f32 %v1771, %v1772
          %v1774 = vand.u32 %v1773, 4294901760
          %1775 = vmatpush1.msra.mxu0 %v1774
          %1776 = vmatprep.subr.mxu0 0.0
          %1777 = vmatpush1.msra.mxu0 0.0
          %1778 = vmatprep.subr.mxu0 0.0
          %1779 = vmatpush1.msra.mxu0 0.0
          %1780 = vmatprep.subr.mxu0 0.0
          %1781 = vmatpush1.msra.mxu0 0.0
          %1782 = vmatprep.subr.mxu0 0.0
          %1783 = vmatpush1.msra.mxu0 0.0
          %1784 = vmatprep.subr.mxu0 0.0
          %1785 = vmatpush1.msra.mxu0 0.0
          %1786 = vmatprep.subr.mxu0 0.0
          %1787 = vmatpush1.msra.mxu0 0.0
          %1788 = vmatprep.subr.mxu0 0.0
          %1789 = vmatpush1.msra.mxu0 0.0
          %1790 = vmatprep.subr.mxu0 0.0
          %1791 = vmatpush1.msra.mxu0 0.0
          %1792 = vmatprep.subr.mxu0 0.0
          %1793 = vmatpush1.msra.mxu0 0.0
          %1794 = vmatprep.subr.mxu0 0.0
          %1795 = vmatpush1.msra.mxu0 0.0
          %1796 = vmatprep.subr.mxu0 0.0
          %1797 = vmatpush1.msra.mxu0 0.0
          %1798 = vmatprep.subr.mxu0 0.0
          %1799 = vmatpush1.msra.mxu0 0.0
          %1800 = vmatprep.subr.mxu0 0.0
          %1801 = vmatpush1.msra.mxu0 0.0
          %1802 = vmatprep.subr.mxu0 0.0
          %1803 = vmatpush1.msra.mxu0 0.0
          %1804 = vmatprep.subr.mxu0 0.0
          %1805 = vmatpush1.msra.mxu0 0.0
          %1806 = vmatprep.subr.mxu0 0.0
          %1807 = vmatpush1.msra.mxu0 0.0
          %1808 = vmatprep.subr.mxu0 0.0
          %1809 = vmatpush1.msra.mxu0 0.0
          %1810 = vmatprep.subr.mxu0 0.0
          %1811 = vmatpush1.msra.mxu0 0.0
          %1812 = vmatprep.subr.mxu0 0.0
          %1813 = vmatpush1.msra.mxu0 0.0
          %1814 = vmatprep.subr.mxu0 0.0
          %1815 = vmatpush1.msra.mxu0 0.0
          %1816 = vmatprep.subr.mxu0 0.0
          %1817 = vmatpush1.msra.mxu0 0.0
          %1818 = vmatprep.subr.mxu0 0.0
          %1819 = vmatpush1.msra.mxu0 0.0
          %1820 = vmatprep.subr.mxu0 0.0
          %1821 = vmatpush1.msra.mxu0 0.0
          %1822 = vmatprep.subr.mxu0 0.0
          %1823 = vmatpush1.msra.mxu0 0.0
          %1824 = vmatprep.subr.mxu0 0.0
          %1825 = vmatpush1.msra.mxu0 0.0
          %1826 = vmatprep.subr.mxu0 0.0
          %1827 = vmatpush1.msra.mxu0 0.0
          %1828 = vmatprep.subr.mxu0 0.0
          %1829 = vmatpush1.msra.mxu0 0.0
          %1830 = vmatprep.subr.mxu0 0.0
          %1831 = vmatpush1.msra.mxu0 0.0
          %1832 = vmatprep.mubr.f32.mxu0 0.0
          %v1833 = vand.u32 %v1667, 4294901760
          %1834 = vmatmul.mubr.f32.gmra.mrb[0].mxu0 %v1833
          %v1835 = vpop.f32.mrb[0].mxu0
          %v1836 = vadd.f32 %v1745, %v1835
          %v1837 = vpop.f32.mrb[0].mxu0
          %1838 = vdwg.mxu0
          %1839 = vmatprep.subr.mxu0 0.0
          %v1840 = vand.u32 %v1662, 4294901760
          %v1841 = vsub.f32 %v1662, %v1840
          %1842 = vmatpush1.msra.mxu0 %v1841
          %1843 = vmatprep.subr.mxu0 0.0
          %v1844 = vand.u32 %v1663, 4294901760
          %v1845 = vsub.f32 %v1663, %v1844
          %1846 = vmatpush1.msra.mxu0 %v1845
          %1847 = vmatprep.subr.mxu0 0.0
          %v1848 = vand.u32 %v1664, 4294901760
          %v1849 = vsub.f32 %v1664, %v1848
          %1850 = vmatpush1.msra.mxu0 %v1849
          %1851 = vmatprep.subr.mxu0 0.0
          %v1852 = vand.u32 %v1665, 4294901760
          %v1853 = vsub.f32 %v1665, %v1852
          %1854 = vmatpush1.msra.mxu0 %v1853
          %1855 = vmatprep.subr.mxu0 0.0
          %1856 = vmatpush1.msra.mxu0 0.0
          %1857 = vmatprep.subr.mxu0 0.0
          %1858 = vmatpush1.msra.mxu0 0.0
          %1859 = vmatprep.subr.mxu0 0.0
          %1860 = vmatpush1.msra.mxu0 0.0
          %1861 = vmatprep.subr.mxu0 0.0
          %1862 = vmatpush1.msra.mxu0 0.0
          %1863 = vmatprep.subr.mxu0 0.0
          %1864 = vmatpush1.msra.mxu0 0.0
          %1865 = vmatprep.subr.mxu0 0.0
          %1866 = vmatpush1.msra.mxu0 0.0
          %1867 = vmatprep.subr.mxu0 0.0
          %1868 = vmatpush1.msra.mxu0 0.0
          %1869 = vmatprep.subr.mxu0 0.0
          %1870 = vmatpush1.msra.mxu0 0.0
          %1871 = vmatprep.subr.mxu0 0.0
          %1872 = vmatpush1.msra.mxu0 0.0
          %1873 = vmatprep.subr.mxu0 0.0
          %1874 = vmatpush1.msra.mxu0 0.0
          %1875 = vmatprep.subr.mxu0 0.0
          %1876 = vmatpush1.msra.mxu0 0.0
          %1877 = vmatprep.subr.mxu0 0.0
          %1878 = vmatpush1.msra.mxu0 0.0
          %1879 = vmatprep.subr.mxu0 0.0
          %1880 = vmatpush1.msra.mxu0 0.0
          %1881 = vmatprep.subr.mxu0 0.0
          %1882 = vmatpush1.msra.mxu0 0.0
          %1883 = vmatprep.subr.mxu0 0.0
          %1884 = vmatpush1.msra.mxu0 0.0
          %1885 = vmatprep.subr.mxu0 0.0
          %1886 = vmatpush1.msra.mxu0 0.0
          %1887 = vmatprep.subr.mxu0 0.0
          %1888 = vmatpush1.msra.mxu0 0.0
          %1889 = vmatprep.subr.mxu0 0.0
          %1890 = vmatpush1.msra.mxu0 0.0
          %1891 = vmatprep.subr.mxu0 0.0
          %1892 = vmatpush1.msra.mxu0 0.0
          %1893 = vmatprep.subr.mxu0 0.0
          %1894 = vmatpush1.msra.mxu0 0.0
          %1895 = vmatprep.subr.mxu0 0.0
          %1896 = vmatpush1.msra.mxu0 0.0
          %1897 = vmatprep.subr.mxu0 0.0
          %1898 = vmatpush1.msra.mxu0 0.0
          %1899 = vmatprep.subr.mxu0 0.0
          %1900 = vmatpush1.msra.mxu0 0.0
          %1901 = vmatprep.subr.mxu0 0.0
          %1902 = vmatpush1.msra.mxu0 0.0
          %1903 = vmatprep.subr.mxu0 0.0
          %1904 = vmatpush1.msra.mxu0 0.0
          %1905 = vmatprep.subr.mxu0 0.0
          %1906 = vmatpush1.msra.mxu0 0.0
          %1907 = vmatprep.subr.mxu0 0.0
          %1908 = vmatpush1.msra.mxu0 0.0
          %1909 = vmatprep.subr.mxu0 0.0
          %1910 = vmatpush1.msra.mxu0 0.0
          %1911 = vmatprep.mubr.f32.mxu0 0.0
          %v1912 = vand.u32 %v1667, 4294901760
          %v1913 = vsub.f32 %v1667, %v1912
          %1914 = vmatmul.mubr.f32.gmra.mrb[0].mxu0 %v1913
          %v1915 = vpop.f32.mrb[0].mxu0
          %v1916 = vadd.f32 %v1836, %v1915
          %v1917 = vpop.f32.mrb[0].mxu0
          %1918 = vdwg.mxu0
          %1919 = vmatprep.subr.mxu0 0.0
          %v1920 = vand.u32 %v1662, 4294901760
          %1921 = vmatpush1.msra.mxu0 %v1920
          %1922 = vmatprep.subr.mxu0 0.0
          %v1923 = vand.u32 %v1663, 4294901760
          %1924 = vmatpush1.msra.mxu0 %v1923
          %1925 = vmatprep.subr.mxu0 0.0
          %v1926 = vand.u32 %v1664, 4294901760
          %1927 = vmatpush1.msra.mxu0 %v1926
          %1928 = vmatprep.subr.mxu0 0.0
          %v1929 = vand.u32 %v1665, 4294901760
          %1930 = vmatpush1.msra.mxu0 %v1929
          %1931 = vmatprep.subr.mxu0 0.0
          %1932 = vmatpush1.msra.mxu0 0.0
          %1933 = vmatprep.subr.mxu0 0.0
          %1934 = vmatpush1.msra.mxu0 0.0
          %1935 = vmatprep.subr.mxu0 0.0
          %1936 = vmatpush1.msra.mxu0 0.0
          %1937 = vmatprep.subr.mxu0 0.0
          %1938 = vmatpush1.msra.mxu0 0.0
          %1939 = vmatprep.subr.mxu0 0.0
          %1940 = vmatpush1.msra.mxu0 0.0
          %1941 = vmatprep.subr.mxu0 0.0
          %1942 = vmatpush1.msra.mxu0 0.0
          %1943 = vmatprep.subr.mxu0 0.0
          %1944 = vmatpush1.msra.mxu0 0.0
          %1945 = vmatprep.subr.mxu0 0.0
          %1946 = vmatpush1.msra.mxu0 0.0
          %1947 = vmatprep.subr.mxu0 0.0
          %1948 = vmatpush1.msra.mxu0 0.0
          %1949 = vmatprep.subr.mxu0 0.0
          %1950 = vmatpush1.msra.mxu0 0.0
          %1951 = vmatprep.subr.mxu0 0.0
          %1952 = vmatpush1.msra.mxu0 0.0
          %1953 = vmatprep.subr.mxu0 0.0
          %1954 = vmatpush1.msra.mxu0 0.0
          %1955 = vmatprep.subr.mxu0 0.0
          %1956 = vmatpush1.msra.mxu0 0.0
          %1957 = vmatprep.subr.mxu0 0.0
          %1958 = vmatpush1.msra.mxu0 0.0
          %1959 = vmatprep.subr.mxu0 0.0
          %1960 = vmatpush1.msra.mxu0 0.0
          %1961 = vmatprep.subr.mxu0 0.0
          %1962 = vmatpush1.msra.mxu0 0.0
          %1963 = vmatprep.subr.mxu0 0.0
          %1964 = vmatpush1.msra.mxu0 0.0
          %1965 = vmatprep.subr.mxu0 0.0
          %1966 = vmatpush1.msra.mxu0 0.0
          %1967 = vmatprep.subr.mxu0 0.0
          %1968 = vmatpush1.msra.mxu0 0.0
          %1969 = vmatprep.subr.mxu0 0.0
          %1970 = vmatpush1.msra.mxu0 0.0
          %1971 = vmatprep.subr.mxu0 0.0
          %1972 = vmatpush1.msra.mxu0 0.0
          %1973 = vmatprep.subr.mxu0 0.0
          %1974 = vmatpush1.msra.mxu0 0.0
          %1975 = vmatprep.subr.mxu0 0.0
          %1976 = vmatpush1.msra.mxu0 0.0
          %1977 = vmatprep.subr.mxu0 0.0
          %1978 = vmatpush1.msra.mxu0 0.0
          %1979 = vmatprep.subr.mxu0 0.0
          %1980 = vmatpush1.msra.mxu0 0.0
          %1981 = vmatprep.subr.mxu0 0.0
          %1982 = vmatpush1.msra.mxu0 0.0
          %1983 = vmatprep.subr.mxu0 0.0
          %1984 = vmatpush1.msra.mxu0 0.0
          %1985 = vmatprep.subr.mxu0 0.0
          %1986 = vmatpush1.msra.mxu0 0.0
          %1987 = vmatprep.mubr.f32.mxu0 0.0
          %v1988 = vand.u32 %v1667, 4294901760
          %v1989 = vsub.f32 %v1667, %v1988
          %v1990 = vand.u32 %v1989, 4294901760
          %1991 = vmatmul.mubr.f32.gmra.mrb[0].mxu0 %v1990
          %v1992 = vpop.f32.mrb[0].mxu0
          %v1993 = vadd.f32 %v1916, %v1992
          %v1994 = vpop.f32.mrb[0].mxu0
          %1995 = vdwg.mxu0
          %1996 = vmatprep.subr.mxu0 0.0
          %v1997 = vand.u32 %v1662, 4294901760
          %v1998 = vsub.f32 %v1662, %v1997
          %v1999 = vand.u32 %v1998, 4294901760
          %2000 = vmatpush1.msra.mxu0 %v1999
          %2001 = vmatprep.subr.mxu0 0.0
          %v2002 = vand.u32 %v1663, 4294901760
          %v2003 = vsub.f32 %v1663, %v2002
          %v2004 = vand.u32 %v2003, 4294901760
          %2005 = vmatpush1.msra.mxu0 %v2004
          %2006 = vmatprep.subr.mxu0 0.0
          %v2007 = vand.u32 %v1664, 4294901760
          %v2008 = vsub.f32 %v1664, %v2007
          %v2009 = vand.u32 %v2008, 4294901760
          %2010 = vmatpush1.msra.mxu0 %v2009
          %2011 = vmatprep.subr.mxu0 0.0
          %v2012 = vand.u32 %v1665, 4294901760
          %v2013 = vsub.f32 %v1665, %v2012
          %v2014 = vand.u32 %v2013, 4294901760
          %2015 = vmatpush1.msra.mxu0 %v2014
          %2016 = vmatprep.subr.mxu0 0.0
          %2017 = vmatpush1.msra.mxu0 0.0
          %2018 = vmatprep.subr.mxu0 0.0
          %2019 = vmatpush1.msra.mxu0 0.0
          %2020 = vmatprep.subr.mxu0 0.0
          %2021 = vmatpush1.msra.mxu0 0.0
          %2022 = vmatprep.subr.mxu0 0.0
          %2023 = vmatpush1.msra.mxu0 0.0
          %2024 = vmatprep.subr.mxu0 0.0
          %2025 = vmatpush1.msra.mxu0 0.0
          %2026 = vmatprep.subr.mxu0 0.0
          %2027 = vmatpush1.msra.mxu0 0.0
          %2028 = vmatprep.subr.mxu0 0.0
          %2029 = vmatpush1.msra.mxu0 0.0
          %2030 = vmatprep.subr.mxu0 0.0
          %2031 = vmatpush1.msra.mxu0 0.0
          %2032 = vmatprep.subr.mxu0 0.0
          %2033 = vmatpush1.msra.mxu0 0.0
          %2034 = vmatprep.subr.mxu0 0.0
          %2035 = vmatpush1.msra.mxu0 0.0
          %2036 = vmatprep.subr.mxu0 0.0
          %2037 = vmatpush1.msra.mxu0 0.0
          %2038 = vmatprep.subr.mxu0 0.0
          %2039 = vmatpush1.msra.mxu0 0.0
          %2040 = vmatprep.subr.mxu0 0.0
          %2041 = vmatpush1.msra.mxu0 0.0
          %2042 = vmatprep.subr.mxu0 0.0
          %2043 = vmatpush1.msra.mxu0 0.0
          %2044 = vmatprep.subr.mxu0 0.0
          %2045 = vmatpush1.msra.mxu0 0.0
          %2046 = vmatprep.subr.mxu0 0.0
          %2047 = vmatpush1.msra.mxu0 0.0
          %2048 = vmatprep.subr.mxu0 0.0
          %2049 = vmatpush1.msra.mxu0 0.0
          %2050 = vmatprep.subr.mxu0 0.0
          %2051 = vmatpush1.msra.mxu0 0.0
          %2052 = vmatprep.subr.mxu0 0.0
          %2053 = vmatpush1.msra.mxu0 0.0
          %2054 = vmatprep.subr.mxu0 0.0
          %2055 = vmatpush1.msra.mxu0 0.0
          %2056 = vmatprep.subr.mxu0 0.0
          %2057 = vmatpush1.msra.mxu0 0.0
          %2058 = vmatprep.subr.mxu0 0.0
          %2059 = vmatpush1.msra.mxu0 0.0
          %2060 = vmatprep.subr.mxu0 0.0
          %2061 = vmatpush1.msra.mxu0 0.0
          %2062 = vmatprep.subr.mxu0 0.0
          %2063 = vmatpush1.msra.mxu0 0.0
          %2064 = vmatprep.subr.mxu0 0.0
          %2065 = vmatpush1.msra.mxu0 0.0
          %2066 = vmatprep.subr.mxu0 0.0
          %2067 = vmatpush1.msra.mxu0 0.0
          %2068 = vmatprep.subr.mxu0 0.0
          %2069 = vmatpush1.msra.mxu0 0.0
          %2070 = vmatprep.subr.mxu0 0.0
          %2071 = vmatpush1.msra.mxu0 0.0
          %2072 = vmatprep.mubr.f32.mxu0 0.0
          %v2073 = vand.u32 %v1667, 4294901760
          %2074 = vmatmul.mubr.f32.gmra.mrb[0].mxu0 %v2073
          %v2075 = vpop.f32.mrb[0].mxu0
          %v2076 = vadd.f32 %v1993, %v2075
          %v2077 = vpop.f32.mrb[0].mxu0
          %2078 = vdwg.mxu0
          %2079 = vmatprep.subr.mxu0 0.0
          %v2080 = vand.u32 %v1662, 4294901760
          %2081 = vmatpush1.msra.mxu0 %v2080
          %2082 = vmatprep.subr.mxu0 0.0
          %v2083 = vand.u32 %v1663, 4294901760
          %2084 = vmatpush1.msra.mxu0 %v2083
          %2085 = vmatprep.subr.mxu0 0.0
          %v2086 = vand.u32 %v1664, 4294901760
          %2087 = vmatpush1.msra.mxu0 %v2086
          %2088 = vmatprep.subr.mxu0 0.0
          %v2089 = vand.u32 %v1665, 4294901760
          %2090 = vmatpush1.msra.mxu0 %v2089
          %2091 = vmatprep.subr.mxu0 0.0
          %2092 = vmatpush1.msra.mxu0 0.0
          %2093 = vmatprep.subr.mxu0 0.0
          %2094 = vmatpush1.msra.mxu0 0.0
          %2095 = vmatprep.subr.mxu0 0.0
          %2096 = vmatpush1.msra.mxu0 0.0
          %2097 = vmatprep.subr.mxu0 0.0
          %2098 = vmatpush1.msra.mxu0 0.0
          %2099 = vmatprep.subr.mxu0 0.0
          %2100 = vmatpush1.msra.mxu0 0.0
          %2101 = vmatprep.subr.mxu0 0.0
          %2102 = vmatpush1.msra.mxu0 0.0
          %2103 = vmatprep.subr.mxu0 0.0
          %2104 = vmatpush1.msra.mxu0 0.0
          %2105 = vmatprep.subr.mxu0 0.0
          %2106 = vmatpush1.msra.mxu0 0.0
          %2107 = vmatprep.subr.mxu0 0.0
          %2108 = vmatpush1.msra.mxu0 0.0
          %2109 = vmatprep.subr.mxu0 0.0
          %2110 = vmatpush1.msra.mxu0 0.0
          %2111 = vmatprep.subr.mxu0 0.0
          %2112 = vmatpush1.msra.mxu0 0.0
          %2113 = vmatprep.subr.mxu0 0.0
          %2114 = vmatpush1.msra.mxu0 0.0
          %2115 = vmatprep.subr.mxu0 0.0
          %2116 = vmatpush1.msra.mxu0 0.0
          %2117 = vmatprep.subr.mxu0 0.0
          %2118 = vmatpush1.msra.mxu0 0.0
          %2119 = vmatprep.subr.mxu0 0.0
          %2120 = vmatpush1.msra.mxu0 0.0
          %2121 = vmatprep.subr.mxu0 0.0
          %2122 = vmatpush1.msra.mxu0 0.0
          %2123 = vmatprep.subr.mxu0 0.0
          %2124 = vmatpush1.msra.mxu0 0.0
          %2125 = vmatprep.subr.mxu0 0.0
          %2126 = vmatpush1.msra.mxu0 0.0
          %2127 = vmatprep.subr.mxu0 0.0
          %2128 = vmatpush1.msra.mxu0 0.0
          %2129 = vmatprep.subr.mxu0 0.0
          %2130 = vmatpush1.msra.mxu0 0.0
          %2131 = vmatprep.subr.mxu0 0.0
          %2132 = vmatpush1.msra.mxu0 0.0
          %2133 = vmatprep.subr.mxu0 0.0
          %2134 = vmatpush1.msra.mxu0 0.0
          %2135 = vmatprep.subr.mxu0 0.0
          %2136 = vmatpush1.msra.mxu0 0.0
          %2137 = vmatprep.subr.mxu0 0.0
          %2138 = vmatpush1.msra.mxu0 0.0
          %2139 = vmatprep.subr.mxu0 0.0
          %2140 = vmatpush1.msra.mxu0 0.0
          %2141 = vmatprep.subr.mxu0 0.0
          %2142 = vmatpush1.msra.mxu0 0.0
          %2143 = vmatprep.subr.mxu0 0.0
          %2144 = vmatpush1.msra.mxu0 0.0
          %2145 = vmatprep.subr.mxu0 0.0
          %2146 = vmatpush1.msra.mxu0 0.0
          %2147 = vmatprep.mubr.f32.mxu0 0.0
          %v2148 = vand.u32 %v1667, 4294901760
          %2149 = vmatmul.mubr.f32.gmra.mrb[0].mxu0 %v2148
          %v2150 = vpop.f32.mrb[0].mxu0
          %v2151 = vadd.f32 %v2076, %v2150
          %v2152 = vpop.f32.mrb[0].mxu0
          %2153 = vdwg.mxu0
          %v2155 = vsel %vm1107, %v1654, 0
          %2157 = vmatprep.subr.mxu0 0.0
          %v2158 = vand.u32 %v1655, 4294901760
          %2159 = vmatpush1.msra.mxu0 %v2158
          %2160 = vmatprep.subr.mxu0 0.0
          %v2161 = vand.u32 %v1656, 4294901760
          %2162 = vmatpush1.msra.mxu0 %v2161
          %2163 = vmatprep.subr.mxu0 0.0
          %v2164 = vand.u32 %v1657, 4294901760
          %2165 = vmatpush1.msra.mxu0 %v2164
          %2166 = vmatprep.subr.mxu0 0.0
          %v2167 = vand.u32 %v1658, 4294901760
          %2168 = vmatpush1.msra.mxu0 %v2167
          %2169 = vmatprep.subr.mxu0 0.0
          %2170 = vmatpush1.msra.mxu0 0.0
          %2171 = vmatprep.subr.mxu0 0.0
          %2172 = vmatpush1.msra.mxu0 0.0
          %2173 = vmatprep.subr.mxu0 0.0
          %2174 = vmatpush1.msra.mxu0 0.0
          %2175 = vmatprep.subr.mxu0 0.0
          %2176 = vmatpush1.msra.mxu0 0.0
          %2177 = vmatprep.subr.mxu0 0.0
          %2178 = vmatpush1.msra.mxu0 0.0
          %2179 = vmatprep.subr.mxu0 0.0
          %2180 = vmatpush1.msra.mxu0 0.0
          %2181 = vmatprep.subr.mxu0 0.0
          %2182 = vmatpush1.msra.mxu0 0.0
          %2183 = vmatprep.subr.mxu0 0.0
          %2184 = vmatpush1.msra.mxu0 0.0
          %2185 = vmatprep.subr.mxu0 0.0
          %2186 = vmatpush1.msra.mxu0 0.0
          %2187 = vmatprep.subr.mxu0 0.0
          %2188 = vmatpush1.msra.mxu0 0.0
          %2189 = vmatprep.subr.mxu0 0.0
          %2190 = vmatpush1.msra.mxu0 0.0
          %2191 = vmatprep.subr.mxu0 0.0
          %2192 = vmatpush1.msra.mxu0 0.0
          %2193 = vmatprep.subr.mxu0 0.0
          %2194 = vmatpush1.msra.mxu0 0.0
          %2195 = vmatprep.subr.mxu0 0.0
          %2196 = vmatpush1.msra.mxu0 0.0
          %2197 = vmatprep.subr.mxu0 0.0
          %2198 = vmatpush1.msra.mxu0 0.0
          %2199 = vmatprep.subr.mxu0 0.0
          %2200 = vmatpush1.msra.mxu0 0.0
          %2201 = vmatprep.subr.mxu0 0.0
          %2202 = vmatpush1.msra.mxu0 0.0
          %2203 = vmatprep.subr.mxu0 0.0
          %2204 = vmatpush1.msra.mxu0 0.0
          %2205 = vmatprep.subr.mxu0 0.0
          %2206 = vmatpush1.msra.mxu0 0.0
          %2207 = vmatprep.subr.mxu0 0.0
          %2208 = vmatpush1.msra.mxu0 0.0
          %2209 = vmatprep.subr.mxu0 0.0
          %2210 = vmatpush1.msra.mxu0 0.0
          %2211 = vmatprep.subr.mxu0 0.0
          %2212 = vmatpush1.msra.mxu0 0.0
          %2213 = vmatprep.subr.mxu0 0.0
          %2214 = vmatpush1.msra.mxu0 0.0
          %2215 = vmatprep.subr.mxu0 0.0
          %2216 = vmatpush1.msra.mxu0 0.0
          %2217 = vmatprep.subr.mxu0 0.0
          %2218 = vmatpush1.msra.mxu0 0.0
          %2219 = vmatprep.subr.mxu0 0.0
          %2220 = vmatpush1.msra.mxu0 0.0
          %2221 = vmatprep.subr.mxu0 0.0
          %2222 = vmatpush1.msra.mxu0 0.0
          %2223 = vmatprep.subr.mxu0 0.0
          %2224 = vmatpush1.msra.mxu0 0.0
          %2225 = vmatprep.mubr.f32.mxu0 0.0
          %v2226 = vand.u32 %v2155, 4294901760
          %v2227 = vsub.f32 %v2155, %v2226
          %v2228 = vand.u32 %v2227, 4294901760
          %v2229 = vsub.f32 %v2227, %v2228
          %v2230 = vand.u32 %v2229, 4294901760
          %2231 = vmatmul.mubr.f32.gmra.mrb[0].mxu0 %v2230
          %v2232 = vpop.f32.mrb[0].mxu0
          %v2233 = vadd.f32 %v2151, %v2232
          %v2234 = vpop.f32.mrb[0].mxu0
          %2235 = vdwg.mxu0
          %2236 = vmatprep.subr.mxu0 0.0
          %v2237 = vand.u32 %v1655, 4294901760
          %v2238 = vsub.f32 %v1655, %v2237
          %v2239 = vand.u32 %v2238, 4294901760
          %v2240 = vsub.f32 %v2238, %v2239
          %v2241 = vand.u32 %v2240, 4294901760
          %2242 = vmatpush1.msra.mxu0 %v2241
          %2243 = vmatprep.subr.mxu0 0.0
          %v2244 = vand.u32 %v1656, 4294901760
          %v2245 = vsub.f32 %v1656, %v2244
          %v2246 = vand.u32 %v2245, 4294901760
          %v2247 = vsub.f32 %v2245, %v2246
          %v2248 = vand.u32 %v2247, 4294901760
          %2249 = vmatpush1.msra.mxu0 %v2248
          %2250 = vmatprep.subr.mxu0 0.0
          %v2251 = vand.u32 %v1657, 4294901760
          %v2252 = vsub.f32 %v1657, %v2251
          %v2253 = vand.u32 %v2252, 4294901760
          %v2254 = vsub.f32 %v2252, %v2253
          %v2255 = vand.u32 %v2254, 4294901760
          %2256 = vmatpush1.msra.mxu0 %v2255
          %2257 = vmatprep.subr.mxu0 0.0
          %v2258 = vand.u32 %v1658, 4294901760
          %v2259 = vsub.f32 %v1658, %v2258
          %v2260 = vand.u32 %v2259, 4294901760
          %v2261 = vsub.f32 %v2259, %v2260
          %v2262 = vand.u32 %v2261, 4294901760
          %2263 = vmatpush1.msra.mxu0 %v2262
          %2264 = vmatprep.subr.mxu0 0.0
          %2265 = vmatpush1.msra.mxu0 0.0
          %2266 = vmatprep.subr.mxu0 0.0
          %2267 = vmatpush1.msra.mxu0 0.0
          %2268 = vmatprep.subr.mxu0 0.0
          %2269 = vmatpush1.msra.mxu0 0.0
          %2270 = vmatprep.subr.mxu0 0.0
          %2271 = vmatpush1.msra.mxu0 0.0
          %2272 = vmatprep.subr.mxu0 0.0
          %2273 = vmatpush1.msra.mxu0 0.0
          %2274 = vmatprep.subr.mxu0 0.0
          %2275 = vmatpush1.msra.mxu0 0.0
          %2276 = vmatprep.subr.mxu0 0.0
          %2277 = vmatpush1.msra.mxu0 0.0
          %2278 = vmatprep.subr.mxu0 0.0
          %2279 = vmatpush1.msra.mxu0 0.0
          %2280 = vmatprep.subr.mxu0 0.0
          %2281 = vmatpush1.msra.mxu0 0.0
          %2282 = vmatprep.subr.mxu0 0.0
          %2283 = vmatpush1.msra.mxu0 0.0
          %2284 = vmatprep.subr.mxu0 0.0
          %2285 = vmatpush1.msra.mxu0 0.0
          %2286 = vmatprep.subr.mxu0 0.0
          %2287 = vmatpush1.msra.mxu0 0.0
          %2288 = vmatprep.subr.mxu0 0.0
          %2289 = vmatpush1.msra.mxu0 0.0
          %2290 = vmatprep.subr.mxu0 0.0
          %2291 = vmatpush1.msra.mxu0 0.0
          %2292 = vmatprep.subr.mxu0 0.0
          %2293 = vmatpush1.msra.mxu0 0.0
          %2294 = vmatprep.subr.mxu0 0.0
          %2295 = vmatpush1.msra.mxu0 0.0
          %2296 = vmatprep.subr.mxu0 0.0
          %2297 = vmatpush1.msra.mxu0 0.0
          %2298 = vmatprep.subr.mxu0 0.0
          %2299 = vmatpush1.msra.mxu0 0.0
          %2300 = vmatprep.subr.mxu0 0.0
          %2301 = vmatpush1.msra.mxu0 0.0
          %2302 = vmatprep.subr.mxu0 0.0
          %2303 = vmatpush1.msra.mxu0 0.0
          %2304 = vmatprep.subr.mxu0 0.0
          %2305 = vmatpush1.msra.mxu0 0.0
          %2306 = vmatprep.subr.mxu0 0.0
          %2307 = vmatpush1.msra.mxu0 0.0
          %2308 = vmatprep.subr.mxu0 0.0
          %2309 = vmatpush1.msra.mxu0 0.0
          %2310 = vmatprep.subr.mxu0 0.0
          %2311 = vmatpush1.msra.mxu0 0.0
          %2312 = vmatprep.subr.mxu0 0.0
          %2313 = vmatpush1.msra.mxu0 0.0
          %2314 = vmatprep.subr.mxu0 0.0
          %2315 = vmatpush1.msra.mxu0 0.0
          %2316 = vmatprep.subr.mxu0 0.0
          %2317 = vmatpush1.msra.mxu0 0.0
          %2318 = vmatprep.subr.mxu0 0.0
          %2319 = vmatpush1.msra.mxu0 0.0
          %2320 = vmatprep.mubr.f32.mxu0 0.0
          %v2321 = vand.u32 %v2155, 4294901760
          %2322 = vmatmul.mubr.f32.gmra.mrb[0].mxu0 %v2321
          %v2323 = vpop.f32.mrb[0].mxu0
          %v2324 = vadd.f32 %v2233, %v2323
          %v2325 = vpop.f32.mrb[0].mxu0
          %2326 = vdwg.mxu0
          %2327 = vmatprep.subr.mxu0 0.0
          %v2328 = vand.u32 %v1655, 4294901760
          %v2329 = vsub.f32 %v1655, %v2328
          %2330 = vmatpush1.msra.mxu0 %v2329
          %2331 = vmatprep.subr.mxu0 0.0
          %v2332 = vand.u32 %v1656, 4294901760
          %v2333 = vsub.f32 %v1656, %v2332
          %2334 = vmatpush1.msra.mxu0 %v2333
          %2335 = vmatprep.subr.mxu0 0.0
          %v2336 = vand.u32 %v1657, 4294901760
          %v2337 = vsub.f32 %v1657, %v2336
          %2338 = vmatpush1.msra.mxu0 %v2337
          %2339 = vmatprep.subr.mxu0 0.0
          %v2340 = vand.u32 %v1658, 4294901760
          %v2341 = vsub.f32 %v1658, %v2340
          %2342 = vmatpush1.msra.mxu0 %v2341
          %2343 = vmatprep.subr.mxu0 0.0
          %2344 = vmatpush1.msra.mxu0 0.0
          %2345 = vmatprep.subr.mxu0 0.0
          %2346 = vmatpush1.msra.mxu0 0.0
          %2347 = vmatprep.subr.mxu0 0.0
          %2348 = vmatpush1.msra.mxu0 0.0
          %2349 = vmatprep.subr.mxu0 0.0
          %2350 = vmatpush1.msra.mxu0 0.0
          %2351 = vmatprep.subr.mxu0 0.0
          %2352 = vmatpush1.msra.mxu0 0.0
          %2353 = vmatprep.subr.mxu0 0.0
          %2354 = vmatpush1.msra.mxu0 0.0
          %2355 = vmatprep.subr.mxu0 0.0
          %2356 = vmatpush1.msra.mxu0 0.0
          %2357 = vmatprep.subr.mxu0 0.0
          %2358 = vmatpush1.msra.mxu0 0.0
          %2359 = vmatprep.subr.mxu0 0.0
          %2360 = vmatpush1.msra.mxu0 0.0
          %2361 = vmatprep.subr.mxu0 0.0
          %2362 = vmatpush1.msra.mxu0 0.0
          %2363 = vmatprep.subr.mxu0 0.0
          %2364 = vmatpush1.msra.mxu0 0.0
          %2365 = vmatprep.subr.mxu0 0.0
          %2366 = vmatpush1.msra.mxu0 0.0
          %2367 = vmatprep.subr.mxu0 0.0
          %2368 = vmatpush1.msra.mxu0 0.0
          %2369 = vmatprep.subr.mxu0 0.0
          %2370 = vmatpush1.msra.mxu0 0.0
          %2371 = vmatprep.subr.mxu0 0.0
          %2372 = vmatpush1.msra.mxu0 0.0
          %2373 = vmatprep.subr.mxu0 0.0
          %2374 = vmatpush1.msra.mxu0 0.0
          %2375 = vmatprep.subr.mxu0 0.0
          %2376 = vmatpush1.msra.mxu0 0.0
          %2377 = vmatprep.subr.mxu0 0.0
          %2378 = vmatpush1.msra.mxu0 0.0
          %2379 = vmatprep.subr.mxu0 0.0
          %2380 = vmatpush1.msra.mxu0 0.0
          %2381 = vmatprep.subr.mxu0 0.0
          %2382 = vmatpush1.msra.mxu0 0.0
          %2383 = vmatprep.subr.mxu0 0.0
          %2384 = vmatpush1.msra.mxu0 0.0
          %2385 = vmatprep.subr.mxu0 0.0
          %2386 = vmatpush1.msra.mxu0 0.0
          %2387 = vmatprep.subr.mxu0 0.0
          %2388 = vmatpush1.msra.mxu0 0.0
          %2389 = vmatprep.subr.mxu0 0.0
          %2390 = vmatpush1.msra.mxu0 0.0
          %2391 = vmatprep.subr.mxu0 0.0
          %2392 = vmatpush1.msra.mxu0 0.0
          %2393 = vmatprep.subr.mxu0 0.0
          %2394 = vmatpush1.msra.mxu0 0.0
          %2395 = vmatprep.subr.mxu0 0.0
          %2396 = vmatpush1.msra.mxu0 0.0
          %2397 = vmatprep.subr.mxu0 0.0
          %2398 = vmatpush1.msra.mxu0 0.0
          %2399 = vmatprep.mubr.f32.mxu0 0.0
          %v2400 = vand.u32 %v2155, 4294901760
          %v2401 = vsub.f32 %v2155, %v2400
          %2402 = vmatmul.mubr.f32.gmra.mrb[0].mxu0 %v2401
          %v2403 = vpop.f32.mrb[0].mxu0
          %v2404 = vadd.f32 %v2324, %v2403
          %v2405 = vpop.f32.mrb[0].mxu0
          %2406 = vdwg.mxu0
          %2407 = vmatprep.subr.mxu0 0.0
          %v2408 = vand.u32 %v1655, 4294901760
          %2409 = vmatpush1.msra.mxu0 %v2408
          %2410 = vmatprep.subr.mxu0 0.0
          %v2411 = vand.u32 %v1656, 4294901760
          %2412 = vmatpush1.msra.mxu0 %v2411
          %2413 = vmatprep.subr.mxu0 0.0
          %v2414 = vand.u32 %v1657, 4294901760
          %2415 = vmatpush1.msra.mxu0 %v2414
          %2416 = vmatprep.subr.mxu0 0.0
          %v2417 = vand.u32 %v1658, 4294901760
          %2418 = vmatpush1.msra.mxu0 %v2417
          %2419 = vmatprep.subr.mxu0 0.0
          %2420 = vmatpush1.msra.mxu0 0.0
          %2421 = vmatprep.subr.mxu0 0.0
          %2422 = vmatpush1.msra.mxu0 0.0
          %2423 = vmatprep.subr.mxu0 0.0
          %2424 = vmatpush1.msra.mxu0 0.0
          %2425 = vmatprep.subr.mxu0 0.0
          %2426 = vmatpush1.msra.mxu0 0.0
          %2427 = vmatprep.subr.mxu0 0.0
          %2428 = vmatpush1.msra.mxu0 0.0
          %2429 = vmatprep.subr.mxu0 0.0
          %2430 = vmatpush1.msra.mxu0 0.0
          %2431 = vmatprep.subr.mxu0 0.0
          %2432 = vmatpush1.msra.mxu0 0.0
          %2433 = vmatprep.subr.mxu0 0.0
          %2434 = vmatpush1.msra.mxu0 0.0
          %2435 = vmatprep.subr.mxu0 0.0
          %2436 = vmatpush1.msra.mxu0 0.0
          %2437 = vmatprep.subr.mxu0 0.0
          %2438 = vmatpush1.msra.mxu0 0.0
          %2439 = vmatprep.subr.mxu0 0.0
          %2440 = vmatpush1.msra.mxu0 0.0
          %2441 = vmatprep.subr.mxu0 0.0
          %2442 = vmatpush1.msra.mxu0 0.0
          %2443 = vmatprep.subr.mxu0 0.0
          %2444 = vmatpush1.msra.mxu0 0.0
          %2445 = vmatprep.subr.mxu0 0.0
          %2446 = vmatpush1.msra.mxu0 0.0
          %2447 = vmatprep.subr.mxu0 0.0
          %2448 = vmatpush1.msra.mxu0 0.0
          %2449 = vmatprep.subr.mxu0 0.0
          %2450 = vmatpush1.msra.mxu0 0.0
          %2451 = vmatprep.subr.mxu0 0.0
          %2452 = vmatpush1.msra.mxu0 0.0
          %2453 = vmatprep.subr.mxu0 0.0
          %2454 = vmatpush1.msra.mxu0 0.0
          %2455 = vmatprep.subr.mxu0 0.0
          %2456 = vmatpush1.msra.mxu0 0.0
          %2457 = vmatprep.subr.mxu0 0.0
          %2458 = vmatpush1.msra.mxu0 0.0
          %2459 = vmatprep.subr.mxu0 0.0
          %2460 = vmatpush1.msra.mxu0 0.0
          %2461 = vmatprep.subr.mxu0 0.0
          %2462 = vmatpush1.msra.mxu0 0.0
          %2463 = vmatprep.subr.mxu0 0.0
          %2464 = vmatpush1.msra.mxu0 0.0
          %2465 = vmatprep.subr.mxu0 0.0
          %2466 = vmatpush1.msra.mxu0 0.0
          %2467 = vmatprep.subr.mxu0 0.0
          %2468 = vmatpush1.msra.mxu0 0.0
          %2469 = vmatprep.subr.mxu0 0.0
          %2470 = vmatpush1.msra.mxu0 0.0
          %2471 = vmatprep.subr.mxu0 0.0
          %2472 = vmatpush1.msra.mxu0 0.0
          %2473 = vmatprep.subr.mxu0 0.0
          %2474 = vmatpush1.msra.mxu0 0.0
          %2475 = vmatprep.mubr.f32.mxu0 0.0
          %v2476 = vand.u32 %v2155, 4294901760
          %v2477 = vsub.f32 %v2155, %v2476
          %v2478 = vand.u32 %v2477, 4294901760
          %2479 = vmatmul.mubr.f32.gmra.mrb[0].mxu0 %v2478
          %v2480 = vpop.f32.mrb[0].mxu0
          %v2481 = vadd.f32 %v2404, %v2480
          %v2482 = vpop.f32.mrb[0].mxu0
          %2483 = vdwg.mxu0
          %2484 = vmatprep.subr.mxu0 0.0
          %v2485 = vand.u32 %v1655, 4294901760
          %v2486 = vsub.f32 %v1655, %v2485
          %v2487 = vand.u32 %v2486, 4294901760
          %2488 = vmatpush1.msra.mxu0 %v2487
          %2489 = vmatprep.subr.mxu0 0.0
          %v2490 = vand.u32 %v1656, 4294901760
          %v2491 = vsub.f32 %v1656, %v2490
          %v2492 = vand.u32 %v2491, 4294901760
          %2493 = vmatpush1.msra.mxu0 %v2492
          %2494 = vmatprep.subr.mxu0 0.0
          %v2495 = vand.u32 %v1657, 4294901760
          %v2496 = vsub.f32 %v1657, %v2495
          %v2497 = vand.u32 %v2496, 4294901760
          %2498 = vmatpush1.msra.mxu0 %v2497
          %2499 = vmatprep.subr.mxu0 0.0
          %v2500 = vand.u32 %v1658, 4294901760
          %v2501 = vsub.f32 %v1658, %v2500
          %v2502 = vand.u32 %v2501, 4294901760
          %2503 = vmatpush1.msra.mxu0 %v2502
          %2504 = vmatprep.subr.mxu0 0.0
          %2505 = vmatpush1.msra.mxu0 0.0
          %2506 = vmatprep.subr.mxu0 0.0
          %2507 = vmatpush1.msra.mxu0 0.0
          %2508 = vmatprep.subr.mxu0 0.0
          %2509 = vmatpush1.msra.mxu0 0.0
          %2510 = vmatprep.subr.mxu0 0.0
          %2511 = vmatpush1.msra.mxu0 0.0
          %2512 = vmatprep.subr.mxu0 0.0
          %2513 = vmatpush1.msra.mxu0 0.0
          %2514 = vmatprep.subr.mxu0 0.0
          %2515 = vmatpush1.msra.mxu0 0.0
          %2516 = vmatprep.subr.mxu0 0.0
          %2517 = vmatpush1.msra.mxu0 0.0
          %2518 = vmatprep.subr.mxu0 0.0
          %2519 = vmatpush1.msra.mxu0 0.0
          %2520 = vmatprep.subr.mxu0 0.0
          %2521 = vmatpush1.msra.mxu0 0.0
          %2522 = vmatprep.subr.mxu0 0.0
          %2523 = vmatpush1.msra.mxu0 0.0
          %2524 = vmatprep.subr.mxu0 0.0
          %2525 = vmatpush1.msra.mxu0 0.0
          %2526 = vmatprep.subr.mxu0 0.0
          %2527 = vmatpush1.msra.mxu0 0.0
          %2528 = vmatprep.subr.mxu0 0.0
          %2529 = vmatpush1.msra.mxu0 0.0
          %2530 = vmatprep.subr.mxu0 0.0
          %2531 = vmatpush1.msra.mxu0 0.0
          %2532 = vmatprep.subr.mxu0 0.0
          %2533 = vmatpush1.msra.mxu0 0.0
          %2534 = vmatprep.subr.mxu0 0.0
          %2535 = vmatpush1.msra.mxu0 0.0
          %2536 = vmatprep.subr.mxu0 0.0
          %2537 = vmatpush1.msra.mxu0 0.0
          %2538 = vmatprep.subr.mxu0 0.0
          %2539 = vmatpush1.msra.mxu0 0.0
          %2540 = vmatprep.subr.mxu0 0.0
          %2541 = vmatpush1.msra.mxu0 0.0
          %2542 = vmatprep.subr.mxu0 0.0
          %2543 = vmatpush1.msra.mxu0 0.0
          %2544 = vmatprep.subr.mxu0 0.0
          %2545 = vmatpush1.msra.mxu0 0.0
          %2546 = vmatprep.subr.mxu0 0.0
          %2547 = vmatpush1.msra.mxu0 0.0
          %2548 = vmatprep.subr.mxu0 0.0
          %2549 = vmatpush1.msra.mxu0 0.0
          %2550 = vmatprep.subr.mxu0 0.0
          %2551 = vmatpush1.msra.mxu0 0.0
          %2552 = vmatprep.subr.mxu0 0.0
          %2553 = vmatpush1.msra.mxu0 0.0
          %2554 = vmatprep.subr.mxu0 0.0
          %2555 = vmatpush1.msra.mxu0 0.0
          %2556 = vmatprep.subr.mxu0 0.0
          %2557 = vmatpush1.msra.mxu0 0.0
          %2558 = vmatprep.subr.mxu0 0.0
          %2559 = vmatpush1.msra.mxu0 0.0
          %2560 = vmatprep.mubr.f32.mxu0 0.0
          %v2561 = vand.u32 %v2155, 4294901760
          %2562 = vmatmul.mubr.f32.gmra.mrb[0].mxu0 %v2561
          %v2563 = vpop.f32.mrb[0].mxu0
          %v2564 = vadd.f32 %v2481, %v2563
          %v2565 = vpop.f32.mrb[0].mxu0
          %2566 = vdwg.mxu0
          %2567 = vmatprep.subr.mxu0 0.0
          %v2568 = vand.u32 %v1655, 4294901760
          %2569 = vmatpush1.msra.mxu0 %v2568
          %2570 = vmatprep.subr.mxu0 0.0
          %v2571 = vand.u32 %v1656, 4294901760
          %2572 = vmatpush1.msra.mxu0 %v2571
          %2573 = vmatprep.subr.mxu0 0.0
          %v2574 = vand.u32 %v1657, 4294901760
          %2575 = vmatpush1.msra.mxu0 %v2574
          %2576 = vmatprep.subr.mxu0 0.0
          %v2577 = vand.u32 %v1658, 4294901760
          %2578 = vmatpush1.msra.mxu0 %v2577
          %2579 = vmatprep.subr.mxu0 0.0
          %2580 = vmatpush1.msra.mxu0 0.0
          %2581 = vmatprep.subr.mxu0 0.0
          %2582 = vmatpush1.msra.mxu0 0.0
          %2583 = vmatprep.subr.mxu0 0.0
          %2584 = vmatpush1.msra.mxu0 0.0
          %2585 = vmatprep.subr.mxu0 0.0
          %2586 = vmatpush1.msra.mxu0 0.0
          %2587 = vmatprep.subr.mxu0 0.0
          %2588 = vmatpush1.msra.mxu0 0.0
          %2589 = vmatprep.subr.mxu0 0.0
          %2590 = vmatpush1.msra.mxu0 0.0
          %2591 = vmatprep.subr.mxu0 0.0
          %2592 = vmatpush1.msra.mxu0 0.0
          %2593 = vmatprep.subr.mxu0 0.0
          %2594 = vmatpush1.msra.mxu0 0.0
          %2595 = vmatprep.subr.mxu0 0.0
          %2596 = vmatpush1.msra.mxu0 0.0
          %2597 = vmatprep.subr.mxu0 0.0
          %2598 = vmatpush1.msra.mxu0 0.0
          %2599 = vmatprep.subr.mxu0 0.0
          %2600 = vmatpush1.msra.mxu0 0.0
          %2601 = vmatprep.subr.mxu0 0.0
          %2602 = vmatpush1.msra.mxu0 0.0
          %2603 = vmatprep.subr.mxu0 0.0
          %2604 = vmatpush1.msra.mxu0 0.0
          %2605 = vmatprep.subr.mxu0 0.0
          %2606 = vmatpush1.msra.mxu0 0.0
          %2607 = vmatprep.subr.mxu0 0.0
          %2608 = vmatpush1.msra.mxu0 0.0
          %2609 = vmatprep.subr.mxu0 0.0
          %2610 = vmatpush1.msra.mxu0 0.0
          %2611 = vmatprep.subr.mxu0 0.0
          %2612 = vmatpush1.msra.mxu0 0.0
          %2613 = vmatprep.subr.mxu0 0.0
          %2614 = vmatpush1.msra.mxu0 0.0
          %2615 = vmatprep.subr.mxu0 0.0
          %2616 = vmatpush1.msra.mxu0 0.0
          %2617 = vmatprep.subr.mxu0 0.0
          %2618 = vmatpush1.msra.mxu0 0.0
          %2619 = vmatprep.subr.mxu0 0.0
          %2620 = vmatpush1.msra.mxu0 0.0
          %2621 = vmatprep.subr.mxu0 0.0
          %2622 = vmatpush1.msra.mxu0 0.0
          %2623 = vmatprep.subr.mxu0 0.0
          %2624 = vmatpush1.msra.mxu0 0.0
          %2625 = vmatprep.subr.mxu0 0.0
          %2626 = vmatpush1.msra.mxu0 0.0
          %2627 = vmatprep.subr.mxu0 0.0
          %2628 = vmatpush1.msra.mxu0 0.0
          %2629 = vmatprep.subr.mxu0 0.0
          %2630 = vmatpush1.msra.mxu0 0.0
          %2631 = vmatprep.subr.mxu0 0.0
          %2632 = vmatpush1.msra.mxu0 0.0
          %2633 = vmatprep.subr.mxu0 0.0
          %2634 = vmatpush1.msra.mxu0 0.0
          %2635 = vmatprep.mubr.f32.mxu0 0.0
          %v2636 = vand.u32 %v2155, 4294901760
          %2637 = vmatmul.mubr.f32.gmra.mrb[0].mxu0 %v2636
          %v2638 = vpop.f32.mrb[0].mxu0
          %v2639 = vadd.f32 %v2564, %v2638
          %v2640 = vpop.f32.mrb[0].mxu0
          %2641 = vdwg.mxu0
          %s2642 = scalar_lea.vmem %s5, 1
          %v2643 = vld [vmem:[%s2642] sm:$0x1]
          %v2645 = vlaneseq
          %v2646 = vshrl.u32 %v2645, 7
          %v2647 = vsub.s32 0, %v2646
          %v2648 = vrot.slane %v2643, %v2647
          %v2650 = vadd.f32 %v2639, %v2648
          %s2651 = scalar_lea.vmem %s3, 4
          %v2652 = vld [vmem:[%s2651] sm:$0xf]
          %v2653 = vxor.u32 %v2650, 2147483648
          %v2654 = vmul.f32 %v2653, 1.442695
          %v2655 = vpow.pop %v2654
          %v2656 = vadd.f32 %v2655, 1.0
          %v2657 = vrcp.pop %v2656
          %v2658 = vmul.f32 1.0, %v2657
          %v2659 = vtanh.pop %v2650
          %2661 = vrot.lane.b32.xlu0 %v2652, 16
          %v2662 = vpop.permute.xlu0 %2661
          %v2664 = vmul.f32 %v2658, %v2662
          %2666 = vrot.lane.b32.xlu0 %v2659, 96
          %v2667 = vpop.permute.xlu0 %2666
          %v2669 = vmul.f32 %v2658, %v2667
          %2671 = vrot.lane.b32.xlu0 %v2669, 16
          %v2672 = vpop.permute.xlu0 %2671
          %v2674 = vadd.f32 %v2664, %v2672
          %v2675 = vtanh.pop %v2674
          %2677 = vrot.lane.b32.xlu0 %v2675, 32
          %v2678 = vpop.permute.xlu0 %2677
          %v2680 = vmul.f32 %v2658, %v2678
          %2681 = vrot.lane.b32.xlu0 %v2652, 64
          %v2682 = vpop.permute.xlu0 %2681
          %v2684 = vmul.f32 %v2658, %v2682
          %v2685 = vadd.f32 %v2684, %v2672
          %v2686 = vtanh.pop %v2685
          %2688 = vrot.lane.b32.xlu0 %v2686, 32
          %v2689 = vpop.permute.xlu0 %2688
          %v2691 = vmul.f32 %v2658, %v2689
          %2693 = vrot.lane.b32.xlu0 %v2680, 80
          %v2694 = vpop.permute.xlu0 %2693
          %2697 = vrot.lane.b32.xlu0 %v2691, 32
          %v2698 = vpop.permute.xlu0 %2697
          %v2700 = vsel %vm1653, %v2694, %v2698
          %s2701 = scalar_lea.vmem [#allocation9], 32
          %v2702 = vld [vmem:[%s2701] sm:$0xff]
          %v2703 = vld [vmem:[%s2701 + $0x8] sm:$0xff]
          %v2704 = vld [vmem:[%s2701 + $0x10] sm:$0xff]
          %v2705 = vld [vmem:[%s2701 + $0x18] sm:$0xff]
          %s2706 = scalar_lea.vmem %s2, 8
          %v2707 = vld [vmem:[%s2706] sm:$0xf]
          %s2708 = scalar_lea.vmem [#allocation8], 64
          %v2709 = vld [vmem:[%s2708] sm:$0xff]
          %v2710 = vld [vmem:[%s2708 + $0x8] sm:$0xff]
          %v2711 = vld [vmem:[%s2708 + $0x10] sm:$0xff]
          %v2712 = vld [vmem:[%s2708 + $0x18] sm:$0xff]
          %v2714 = vsel %vm1107, %v2707, 0
          %2716 = vmatprep.subr.mxu0 0.0
          %v2717 = vand.u32 %v2709, 4294901760
          %2718 = vmatpush1.msra.mxu0 %v2717
          %2719 = vmatprep.subr.mxu0 0.0
          %v2720 = vand.u32 %v2710, 4294901760
          %2721 = vmatpush1.msra.mxu0 %v2720
          %2722 = vmatprep.subr.mxu0 0.0
          %v2723 = vand.u32 %v2711, 4294901760
          %2724 = vmatpush1.msra.mxu0 %v2723
          %2725 = vmatprep.subr.mxu0 0.0
          %v2726 = vand.u32 %v2712, 4294901760
          %2727 = vmatpush1.msra.mxu0 %v2726
          %2728 = vmatprep.subr.mxu0 0.0
          %2729 = vmatpush1.msra.mxu0 0.0
          %2730 = vmatprep.subr.mxu0 0.0
          %2731 = vmatpush1.msra.mxu0 0.0
          %2732 = vmatprep.subr.mxu0 0.0
          %2733 = vmatpush1.msra.mxu0 0.0
          %2734 = vmatprep.subr.mxu0 0.0
          %2735 = vmatpush1.msra.mxu0 0.0
          %2736 = vmatprep.subr.mxu0 0.0
          %2737 = vmatpush1.msra.mxu0 0.0
          %2738 = vmatprep.subr.mxu0 0.0
          %2739 = vmatpush1.msra.mxu0 0.0
          %2740 = vmatprep.subr.mxu0 0.0
          %2741 = vmatpush1.msra.mxu0 0.0
          %2742 = vmatprep.subr.mxu0 0.0
          %2743 = vmatpush1.msra.mxu0 0.0
          %2744 = vmatprep.subr.mxu0 0.0
          %2745 = vmatpush1.msra.mxu0 0.0
          %2746 = vmatprep.subr.mxu0 0.0
          %2747 = vmatpush1.msra.mxu0 0.0
          %2748 = vmatprep.subr.mxu0 0.0
          %2749 = vmatpush1.msra.mxu0 0.0
          %2750 = vmatprep.subr.mxu0 0.0
          %2751 = vmatpush1.msra.mxu0 0.0
          %2752 = vmatprep.subr.mxu0 0.0
          %2753 = vmatpush1.msra.mxu0 0.0
          %2754 = vmatprep.subr.mxu0 0.0
          %2755 = vmatpush1.msra.mxu0 0.0
          %2756 = vmatprep.subr.mxu0 0.0
          %2757 = vmatpush1.msra.mxu0 0.0
          %2758 = vmatprep.subr.mxu0 0.0
          %2759 = vmatpush1.msra.mxu0 0.0
          %2760 = vmatprep.subr.mxu0 0.0
          %2761 = vmatpush1.msra.mxu0 0.0
          %2762 = vmatprep.subr.mxu0 0.0
          %2763 = vmatpush1.msra.mxu0 0.0
          %2764 = vmatprep.subr.mxu0 0.0
          %2765 = vmatpush1.msra.mxu0 0.0
          %2766 = vmatprep.subr.mxu0 0.0
          %2767 = vmatpush1.msra.mxu0 0.0
          %2768 = vmatprep.subr.mxu0 0.0
          %2769 = vmatpush1.msra.mxu0 0.0
          %2770 = vmatprep.subr.mxu0 0.0
          %2771 = vmatpush1.msra.mxu0 0.0
          %2772 = vmatprep.subr.mxu0 0.0
          %2773 = vmatpush1.msra.mxu0 0.0
          %2774 = vmatprep.subr.mxu0 0.0
          %2775 = vmatpush1.msra.mxu0 0.0
          %2776 = vmatprep.subr.mxu0 0.0
          %2777 = vmatpush1.msra.mxu0 0.0
          %2778 = vmatprep.subr.mxu0 0.0
          %2779 = vmatpush1.msra.mxu0 0.0
          %2780 = vmatprep.subr.mxu0 0.0
          %2781 = vmatpush1.msra.mxu0 0.0
          %2782 = vmatprep.subr.mxu0 0.0
          %2783 = vmatpush1.msra.mxu0 0.0
          %2784 = vmatprep.mubr.f32.mxu0 0.0
          %v2785 = vand.u32 %v2714, 4294901760
          %v2786 = vsub.f32 %v2714, %v2785
          %v2787 = vand.u32 %v2786, 4294901760
          %v2788 = vsub.f32 %v2786, %v2787
          %v2789 = vand.u32 %v2788, 4294901760
          %2790 = vmatmul.mubr.f32.gmra.mrb[0].mxu0 %v2789
          %v2791 = vpop.f32.mrb[0].mxu0
          %v2792 = vadd.f32 0.0, %v2791
          %v2793 = vpop.f32.mrb[0].mxu0
          %2794 = vdwg.mxu0
          %2795 = vmatprep.subr.mxu0 0.0
          %v2796 = vand.u32 %v2709, 4294901760
          %v2797 = vsub.f32 %v2709, %v2796
          %v2798 = vand.u32 %v2797, 4294901760
          %v2799 = vsub.f32 %v2797, %v2798
          %v2800 = vand.u32 %v2799, 4294901760
          %2801 = vmatpush1.msra.mxu0 %v2800
          %2802 = vmatprep.subr.mxu0 0.0
          %v2803 = vand.u32 %v2710, 4294901760
          %v2804 = vsub.f32 %v2710, %v2803
          %v2805 = vand.u32 %v2804, 4294901760
          %v2806 = vsub.f32 %v2804, %v2805
          %v2807 = vand.u32 %v2806, 4294901760
          %2808 = vmatpush1.msra.mxu0 %v2807
          %2809 = vmatprep.subr.mxu0 0.0
          %v2810 = vand.u32 %v2711, 4294901760
          %v2811 = vsub.f32 %v2711, %v2810
          %v2812 = vand.u32 %v2811, 4294901760
          %v2813 = vsub.f32 %v2811, %v2812
          %v2814 = vand.u32 %v2813, 4294901760
          %2815 = vmatpush1.msra.mxu0 %v2814
          %2816 = vmatprep.subr.mxu0 0.0
          %v2817 = vand.u32 %v2712, 4294901760
          %v2818 = vsub.f32 %v2712, %v2817
          %v2819 = vand.u32 %v2818, 4294901760
          %v2820 = vsub.f32 %v2818, %v2819
          %v2821 = vand.u32 %v2820, 4294901760
          %2822 = vmatpush1.msra.mxu0 %v2821
          %2823 = vmatprep.subr.mxu0 0.0
          %2824 = vmatpush1.msra.mxu0 0.0
          %2825 = vmatprep.subr.mxu0 0.0
          %2826 = vmatpush1.msra.mxu0 0.0
          %2827 = vmatprep.subr.mxu0 0.0
          %2828 = vmatpush1.msra.mxu0 0.0
          %2829 = vmatprep.subr.mxu0 0.0
          %2830 = vmatpush1.msra.mxu0 0.0
          %2831 = vmatprep.subr.mxu0 0.0
          %2832 = vmatpush1.msra.mxu0 0.0
          %2833 = vmatprep.subr.mxu0 0.0
          %2834 = vmatpush1.msra.mxu0 0.0
          %2835 = vmatprep.subr.mxu0 0.0
          %2836 = vmatpush1.msra.mxu0 0.0
          %2837 = vmatprep.subr.mxu0 0.0
          %2838 = vmatpush1.msra.mxu0 0.0
          %2839 = vmatprep.subr.mxu0 0.0
          %2840 = vmatpush1.msra.mxu0 0.0
          %2841 = vmatprep.subr.mxu0 0.0
          %2842 = vmatpush1.msra.mxu0 0.0
          %2843 = vmatprep.subr.mxu0 0.0
          %2844 = vmatpush1.msra.mxu0 0.0
          %2845 = vmatprep.subr.mxu0 0.0
          %2846 = vmatpush1.msra.mxu0 0.0
          %2847 = vmatprep.subr.mxu0 0.0
          %2848 = vmatpush1.msra.mxu0 0.0
          %2849 = vmatprep.subr.mxu0 0.0
          %2850 = vmatpush1.msra.mxu0 0.0
          %2851 = vmatprep.subr.mxu0 0.0
          %2852 = vmatpush1.msra.mxu0 0.0
          %2853 = vmatprep.subr.mxu0 0.0
          %2854 = vmatpush1.msra.mxu0 0.0
          %2855 = vmatprep.subr.mxu0 0.0
          %2856 = vmatpush1.msra.mxu0 0.0
          %2857 = vmatprep.subr.mxu0 0.0
          %2858 = vmatpush1.msra.mxu0 0.0
          %2859 = vmatprep.subr.mxu0 0.0
          %2860 = vmatpush1.msra.mxu0 0.0
          %2861 = vmatprep.subr.mxu0 0.0
          %2862 = vmatpush1.msra.mxu0 0.0
          %2863 = vmatprep.subr.mxu0 0.0
          %2864 = vmatpush1.msra.mxu0 0.0
          %2865 = vmatprep.subr.mxu0 0.0
          %2866 = vmatpush1.msra.mxu0 0.0
          %2867 = vmatprep.subr.mxu0 0.0
          %2868 = vmatpush1.msra.mxu0 0.0
          %2869 = vmatprep.subr.mxu0 0.0
          %2870 = vmatpush1.msra.mxu0 0.0
          %2871 = vmatprep.subr.mxu0 0.0
          %2872 = vmatpush1.msra.mxu0 0.0
          %2873 = vmatprep.subr.mxu0 0.0
          %2874 = vmatpush1.msra.mxu0 0.0
          %2875 = vmatprep.subr.mxu0 0.0
          %2876 = vmatpush1.msra.mxu0 0.0
          %2877 = vmatprep.subr.mxu0 0.0
          %2878 = vmatpush1.msra.mxu0 0.0
          %2879 = vmatprep.mubr.f32.mxu0 0.0
          %v2880 = vand.u32 %v2714, 4294901760
          %2881 = vmatmul.mubr.f32.gmra.mrb[0].mxu0 %v2880
          %v2882 = vpop.f32.mrb[0].mxu0
          %v2883 = vadd.f32 %v2792, %v2882
          %v2884 = vpop.f32.mrb[0].mxu0
          %2885 = vdwg.mxu0
          %2886 = vmatprep.subr.mxu0 0.0
          %v2887 = vand.u32 %v2709, 4294901760
          %v2888 = vsub.f32 %v2709, %v2887
          %2889 = vmatpush1.msra.mxu0 %v2888
          %2890 = vmatprep.subr.mxu0 0.0
          %v2891 = vand.u32 %v2710, 4294901760
          %v2892 = vsub.f32 %v2710, %v2891
          %2893 = vmatpush1.msra.mxu0 %v2892
          %2894 = vmatprep.subr.mxu0 0.0
          %v2895 = vand.u32 %v2711, 4294901760
          %v2896 = vsub.f32 %v2711, %v2895
          %2897 = vmatpush1.msra.mxu0 %v2896
          %2898 = vmatprep.subr.mxu0 0.0
          %v2899 = vand.u32 %v2712, 4294901760
          %v2900 = vsub.f32 %v2712, %v2899
          %2901 = vmatpush1.msra.mxu0 %v2900
          %2902 = vmatprep.subr.mxu0 0.0
          %2903 = vmatpush1.msra.mxu0 0.0
          %2904 = vmatprep.subr.mxu0 0.0
          %2905 = vmatpush1.msra.mxu0 0.0
          %2906 = vmatprep.subr.mxu0 0.0
          %2907 = vmatpush1.msra.mxu0 0.0
          %2908 = vmatprep.subr.mxu0 0.0
          %2909 = vmatpush1.msra.mxu0 0.0
          %2910 = vmatprep.subr.mxu0 0.0
          %2911 = vmatpush1.msra.mxu0 0.0
          %2912 = vmatprep.subr.mxu0 0.0
          %2913 = vmatpush1.msra.mxu0 0.0
          %2914 = vmatprep.subr.mxu0 0.0
          %2915 = vmatpush1.msra.mxu0 0.0
          %2916 = vmatprep.subr.mxu0 0.0
          %2917 = vmatpush1.msra.mxu0 0.0
          %2918 = vmatprep.subr.mxu0 0.0
          %2919 = vmatpush1.msra.mxu0 0.0
          %2920 = vmatprep.subr.mxu0 0.0
          %2921 = vmatpush1.msra.mxu0 0.0
          %2922 = vmatprep.subr.mxu0 0.0
          %2923 = vmatpush1.msra.mxu0 0.0
          %2924 = vmatprep.subr.mxu0 0.0
          %2925 = vmatpush1.msra.mxu0 0.0
          %2926 = vmatprep.subr.mxu0 0.0
          %2927 = vmatpush1.msra.mxu0 0.0
          %2928 = vmatprep.subr.mxu0 0.0
          %2929 = vmatpush1.msra.mxu0 0.0
          %2930 = vmatprep.subr.mxu0 0.0
          %2931 = vmatpush1.msra.mxu0 0.0
          %2932 = vmatprep.subr.mxu0 0.0
          %2933 = vmatpush1.msra.mxu0 0.0
          %2934 = vmatprep.subr.mxu0 0.0
          %2935 = vmatpush1.msra.mxu0 0.0
          %2936 = vmatprep.subr.mxu0 0.0
          %2937 = vmatpush1.msra.mxu0 0.0
          %2938 = vmatprep.subr.mxu0 0.0
          %2939 = vmatpush1.msra.mxu0 0.0
          %2940 = vmatprep.subr.mxu0 0.0
          %2941 = vmatpush1.msra.mxu0 0.0
          %2942 = vmatprep.subr.mxu0 0.0
          %2943 = vmatpush1.msra.mxu0 0.0
          %2944 = vmatprep.subr.mxu0 0.0
          %2945 = vmatpush1.msra.mxu0 0.0
          %2946 = vmatprep.subr.mxu0 0.0
          %2947 = vmatpush1.msra.mxu0 0.0
          %2948 = vmatprep.subr.mxu0 0.0
          %2949 = vmatpush1.msra.mxu0 0.0
          %2950 = vmatprep.subr.mxu0 0.0
          %2951 = vmatpush1.msra.mxu0 0.0
          %2952 = vmatprep.subr.mxu0 0.0
          %2953 = vmatpush1.msra.mxu0 0.0
          %2954 = vmatprep.subr.mxu0 0.0
          %2955 = vmatpush1.msra.mxu0 0.0
          %2956 = vmatprep.subr.mxu0 0.0
          %2957 = vmatpush1.msra.mxu0 0.0
          %2958 = vmatprep.mubr.f32.mxu0 0.0
          %v2959 = vand.u32 %v2714, 4294901760
          %v2960 = vsub.f32 %v2714, %v2959
          %2961 = vmatmul.mubr.f32.gmra.mrb[0].mxu0 %v2960
          %v2962 = vpop.f32.mrb[0].mxu0
          %v2963 = vadd.f32 %v2883, %v2962
          %v2964 = vpop.f32.mrb[0].mxu0
          %2965 = vdwg.mxu0
          %2966 = vmatprep.subr.mxu0 0.0
          %v2967 = vand.u32 %v2709, 4294901760
          %2968 = vmatpush1.msra.mxu0 %v2967
          %2969 = vmatprep.subr.mxu0 0.0
          %v2970 = vand.u32 %v2710, 4294901760
          %2971 = vmatpush1.msra.mxu0 %v2970
          %2972 = vmatprep.subr.mxu0 0.0
          %v2973 = vand.u32 %v2711, 4294901760
          %2974 = vmatpush1.msra.mxu0 %v2973
          %2975 = vmatprep.subr.mxu0 0.0
          %v2976 = vand.u32 %v2712, 4294901760
          %2977 = vmatpush1.msra.mxu0 %v2976
          %2978 = vmatprep.subr.mxu0 0.0
          %2979 = vmatpush1.msra.mxu0 0.0
          %2980 = vmatprep.subr.mxu0 0.0
          %2981 = vmatpush1.msra.mxu0 0.0
          %2982 = vmatprep.subr.mxu0 0.0
          %2983 = vmatpush1.msra.mxu0 0.0
          %2984 = vmatprep.subr.mxu0 0.0
          %2985 = vmatpush1.msra.mxu0 0.0
          %2986 = vmatprep.subr.mxu0 0.0
          %2987 = vmatpush1.msra.mxu0 0.0
          %2988 = vmatprep.subr.mxu0 0.0
          %2989 = vmatpush1.msra.mxu0 0.0
          %2990 = vmatprep.subr.mxu0 0.0
          %2991 = vmatpush1.msra.mxu0 0.0
          %2992 = vmatprep.subr.mxu0 0.0
          %2993 = vmatpush1.msra.mxu0 0.0
          %2994 = vmatprep.subr.mxu0 0.0
          %2995 = vmatpush1.msra.mxu0 0.0
          %2996 = vmatprep.subr.mxu0 0.0
          %2997 = vmatpush1.msra.mxu0 0.0
          %2998 = vmatprep.subr.mxu0 0.0
          %2999 = vmatpush1.msra.mxu0 0.0
          %3000 = vmatprep.subr.mxu0 0.0
          %3001 = vmatpush1.msra.mxu0 0.0
          %3002 = vmatprep.subr.mxu0 0.0
          %3003 = vmatpush1.msra.mxu0 0.0
          %3004 = vmatprep.subr.mxu0 0.0
          %3005 = vmatpush1.msra.mxu0 0.0
          %3006 = vmatprep.subr.mxu0 0.0
          %3007 = vmatpush1.msra.mxu0 0.0
          %3008 = vmatprep.subr.mxu0 0.0
          %3009 = vmatpush1.msra.mxu0 0.0
          %3010 = vmatprep.subr.mxu0 0.0
          %3011 = vmatpush1.msra.mxu0 0.0
          %3012 = vmatprep.subr.mxu0 0.0
          %3013 = vmatpush1.msra.mxu0 0.0
          %3014 = vmatprep.subr.mxu0 0.0
          %3015 = vmatpush1.msra.mxu0 0.0
          %3016 = vmatprep.subr.mxu0 0.0
          %3017 = vmatpush1.msra.mxu0 0.0
          %3018 = vmatprep.subr.mxu0 0.0
          %3019 = vmatpush1.msra.mxu0 0.0
          %3020 = vmatprep.subr.mxu0 0.0
          %3021 = vmatpush1.msra.mxu0 0.0
          %3022 = vmatprep.subr.mxu0 0.0
          %3023 = vmatpush1.msra.mxu0 0.0
          %3024 = vmatprep.subr.mxu0 0.0
          %3025 = vmatpush1.msra.mxu0 0.0
          %3026 = vmatprep.subr.mxu0 0.0
          %3027 = vmatpush1.msra.mxu0 0.0
          %3028 = vmatprep.subr.mxu0 0.0
          %3029 = vmatpush1.msra.mxu0 0.0
          %3030 = vmatprep.subr.mxu0 0.0
          %3031 = vmatpush1.msra.mxu0 0.0
          %3032 = vmatprep.subr.mxu0 0.0
          %3033 = vmatpush1.msra.mxu0 0.0
          %3034 = vmatprep.mubr.f32.mxu0 0.0
          %v3035 = vand.u32 %v2714, 4294901760
          %v3036 = vsub.f32 %v2714, %v3035
          %v3037 = vand.u32 %v3036, 4294901760
          %3038 = vmatmul.mubr.f32.gmra.mrb[0].mxu0 %v3037
          %v3039 = vpop.f32.mrb[0].mxu0
          %v3040 = vadd.f32 %v2963, %v3039
          %v3041 = vpop.f32.mrb[0].mxu0
          %3042 = vdwg.mxu0
          %3043 = vmatprep.subr.mxu0 0.0
          %v3044 = vand.u32 %v2709, 4294901760
          %v3045 = vsub.f32 %v2709, %v3044
          %v3046 = vand.u32 %v3045, 4294901760
          %3047 = vmatpush1.msra.mxu0 %v3046
          %3048 = vmatprep.subr.mxu0 0.0
          %v3049 = vand.u32 %v2710, 4294901760
          %v3050 = vsub.f32 %v2710, %v3049
          %v3051 = vand.u32 %v3050, 4294901760
          %3052 = vmatpush1.msra.mxu0 %v3051
          %3053 = vmatprep.subr.mxu0 0.0
          %v3054 = vand.u32 %v2711, 4294901760
          %v3055 = vsub.f32 %v2711, %v3054
          %v3056 = vand.u32 %v3055, 4294901760
          %3057 = vmatpush1.msra.mxu0 %v3056
          %3058 = vmatprep.subr.mxu0 0.0
          %v3059 = vand.u32 %v2712, 4294901760
          %v3060 = vsub.f32 %v2712, %v3059
          %v3061 = vand.u32 %v3060, 4294901760
          %3062 = vmatpush1.msra.mxu0 %v3061
          %3063 = vmatprep.subr.mxu0 0.0
          %3064 = vmatpush1.msra.mxu0 0.0
          %3065 = vmatprep.subr.mxu0 0.0
          %3066 = vmatpush1.msra.mxu0 0.0
          %3067 = vmatprep.subr.mxu0 0.0
          %3068 = vmatpush1.msra.mxu0 0.0
          %3069 = vmatprep.subr.mxu0 0.0
          %3070 = vmatpush1.msra.mxu0 0.0
          %3071 = vmatprep.subr.mxu0 0.0
          %3072 = vmatpush1.msra.mxu0 0.0
          %3073 = vmatprep.subr.mxu0 0.0
          %3074 = vmatpush1.msra.mxu0 0.0
          %3075 = vmatprep.subr.mxu0 0.0
          %3076 = vmatpush1.msra.mxu0 0.0
          %3077 = vmatprep.subr.mxu0 0.0
          %3078 = vmatpush1.msra.mxu0 0.0
          %3079 = vmatprep.subr.mxu0 0.0
          %3080 = vmatpush1.msra.mxu0 0.0
          %3081 = vmatprep.subr.mxu0 0.0
          %3082 = vmatpush1.msra.mxu0 0.0
          %3083 = vmatprep.subr.mxu0 0.0
          %3084 = vmatpush1.msra.mxu0 0.0
          %3085 = vmatprep.subr.mxu0 0.0
          %3086 = vmatpush1.msra.mxu0 0.0
          %3087 = vmatprep.subr.mxu0 0.0
          %3088 = vmatpush1.msra.mxu0 0.0
          %3089 = vmatprep.subr.mxu0 0.0
          %3090 = vmatpush1.msra.mxu0 0.0
          %3091 = vmatprep.subr.mxu0 0.0
          %3092 = vmatpush1.msra.mxu0 0.0
          %3093 = vmatprep.subr.mxu0 0.0
          %3094 = vmatpush1.msra.mxu0 0.0
          %3095 = vmatprep.subr.mxu0 0.0
          %3096 = vmatpush1.msra.mxu0 0.0
          %3097 = vmatprep.subr.mxu0 0.0
          %3098 = vmatpush1.msra.mxu0 0.0
          %3099 = vmatprep.subr.mxu0 0.0
          %3100 = vmatpush1.msra.mxu0 0.0
          %3101 = vmatprep.subr.mxu0 0.0
          %3102 = vmatpush1.msra.mxu0 0.0
          %3103 = vmatprep.subr.mxu0 0.0
          %3104 = vmatpush1.msra.mxu0 0.0
          %3105 = vmatprep.subr.mxu0 0.0
          %3106 = vmatpush1.msra.mxu0 0.0
          %3107 = vmatprep.subr.mxu0 0.0
          %3108 = vmatpush1.msra.mxu0 0.0
          %3109 = vmatprep.subr.mxu0 0.0
          %3110 = vmatpush1.msra.mxu0 0.0
          %3111 = vmatprep.subr.mxu0 0.0
          %3112 = vmatpush1.msra.mxu0 0.0
          %3113 = vmatprep.subr.mxu0 0.0
          %3114 = vmatpush1.msra.mxu0 0.0
          %3115 = vmatprep.subr.mxu0 0.0
          %3116 = vmatpush1.msra.mxu0 0.0
          %3117 = vmatprep.subr.mxu0 0.0
          %3118 = vmatpush1.msra.mxu0 0.0
          %3119 = vmatprep.mubr.f32.mxu0 0.0
          %v3120 = vand.u32 %v2714, 4294901760
          %3121 = vmatmul.mubr.f32.gmra.mrb[0].mxu0 %v3120
          %v3122 = vpop.f32.mrb[0].mxu0
          %v3123 = vadd.f32 %v3040, %v3122
          %v3124 = vpop.f32.mrb[0].mxu0
          %3125 = vdwg.mxu0
          %3126 = vmatprep.subr.mxu0 0.0
          %v3127 = vand.u32 %v2709, 4294901760
          %3128 = vmatpush1.msra.mxu0 %v3127
          %3129 = vmatprep.subr.mxu0 0.0
          %v3130 = vand.u32 %v2710, 4294901760
          %3131 = vmatpush1.msra.mxu0 %v3130
          %3132 = vmatprep.subr.mxu0 0.0
          %v3133 = vand.u32 %v2711, 4294901760
          %3134 = vmatpush1.msra.mxu0 %v3133
          %3135 = vmatprep.subr.mxu0 0.0
          %v3136 = vand.u32 %v2712, 4294901760
          %3137 = vmatpush1.msra.mxu0 %v3136
          %3138 = vmatprep.subr.mxu0 0.0
          %3139 = vmatpush1.msra.mxu0 0.0
          %3140 = vmatprep.subr.mxu0 0.0
          %3141 = vmatpush1.msra.mxu0 0.0
          %3142 = vmatprep.subr.mxu0 0.0
          %3143 = vmatpush1.msra.mxu0 0.0
          %3144 = vmatprep.subr.mxu0 0.0
          %3145 = vmatpush1.msra.mxu0 0.0
          %3146 = vmatprep.subr.mxu0 0.0
          %3147 = vmatpush1.msra.mxu0 0.0
          %3148 = vmatprep.subr.mxu0 0.0
          %3149 = vmatpush1.msra.mxu0 0.0
          %3150 = vmatprep.subr.mxu0 0.0
          %3151 = vmatpush1.msra.mxu0 0.0
          %3152 = vmatprep.subr.mxu0 0.0
          %3153 = vmatpush1.msra.mxu0 0.0
          %3154 = vmatprep.subr.mxu0 0.0
          %3155 = vmatpush1.msra.mxu0 0.0
          %3156 = vmatprep.subr.mxu0 0.0
          %3157 = vmatpush1.msra.mxu0 0.0
          %3158 = vmatprep.subr.mxu0 0.0
          %3159 = vmatpush1.msra.mxu0 0.0
          %3160 = vmatprep.subr.mxu0 0.0
          %3161 = vmatpush1.msra.mxu0 0.0
          %3162 = vmatprep.subr.mxu0 0.0
          %3163 = vmatpush1.msra.mxu0 0.0
          %3164 = vmatprep.subr.mxu0 0.0
          %3165 = vmatpush1.msra.mxu0 0.0
          %3166 = vmatprep.subr.mxu0 0.0
          %3167 = vmatpush1.msra.mxu0 0.0
          %3168 = vmatprep.subr.mxu0 0.0
          %3169 = vmatpush1.msra.mxu0 0.0
          %3170 = vmatprep.subr.mxu0 0.0
          %3171 = vmatpush1.msra.mxu0 0.0
          %3172 = vmatprep.subr.mxu0 0.0
          %3173 = vmatpush1.msra.mxu0 0.0
          %3174 = vmatprep.subr.mxu0 0.0
          %3175 = vmatpush1.msra.mxu0 0.0
          %3176 = vmatprep.subr.mxu0 0.0
          %3177 = vmatpush1.msra.mxu0 0.0
          %3178 = vmatprep.subr.mxu0 0.0
          %3179 = vmatpush1.msra.mxu0 0.0
          %3180 = vmatprep.subr.mxu0 0.0
          %3181 = vmatpush1.msra.mxu0 0.0
          %3182 = vmatprep.subr.mxu0 0.0
          %3183 = vmatpush1.msra.mxu0 0.0
          %3184 = vmatprep.subr.mxu0 0.0
          %3185 = vmatpush1.msra.mxu0 0.0
          %3186 = vmatprep.subr.mxu0 0.0
          %3187 = vmatpush1.msra.mxu0 0.0
          %3188 = vmatprep.subr.mxu0 0.0
          %3189 = vmatpush1.msra.mxu0 0.0
          %3190 = vmatprep.subr.mxu0 0.0
          %3191 = vmatpush1.msra.mxu0 0.0
          %3192 = vmatprep.subr.mxu0 0.0
          %3193 = vmatpush1.msra.mxu0 0.0
          %3194 = vmatprep.mubr.f32.mxu0 0.0
          %v3195 = vand.u32 %v2714, 4294901760
          %3196 = vmatmul.mubr.f32.gmra.mrb[0].mxu0 %v3195
          %v3197 = vpop.f32.mrb[0].mxu0
          %v3198 = vadd.f32 %v3123, %v3197
          %v3199 = vpop.f32.mrb[0].mxu0
          %3200 = vdwg.mxu0
          %v3202 = vsel %vm1107, %v2700, 0
          %3204 = vmatprep.subr.mxu0 0.0
          %v3205 = vand.u32 %v2702, 4294901760
          %3206 = vmatpush1.msra.mxu0 %v3205
          %3207 = vmatprep.subr.mxu0 0.0
          %v3208 = vand.u32 %v2703, 4294901760
          %3209 = vmatpush1.msra.mxu0 %v3208
          %3210 = vmatprep.subr.mxu0 0.0
          %v3211 = vand.u32 %v2704, 4294901760
          %3212 = vmatpush1.msra.mxu0 %v3211
          %3213 = vmatprep.subr.mxu0 0.0
          %v3214 = vand.u32 %v2705, 4294901760
          %3215 = vmatpush1.msra.mxu0 %v3214
          %3216 = vmatprep.subr.mxu0 0.0
          %3217 = vmatpush1.msra.mxu0 0.0
          %3218 = vmatprep.subr.mxu0 0.0
          %3219 = vmatpush1.msra.mxu0 0.0
          %3220 = vmatprep.subr.mxu0 0.0
          %3221 = vmatpush1.msra.mxu0 0.0
          %3222 = vmatprep.subr.mxu0 0.0
          %3223 = vmatpush1.msra.mxu0 0.0
          %3224 = vmatprep.subr.mxu0 0.0
          %3225 = vmatpush1.msra.mxu0 0.0
          %3226 = vmatprep.subr.mxu0 0.0
          %3227 = vmatpush1.msra.mxu0 0.0
          %3228 = vmatprep.subr.mxu0 0.0
          %3229 = vmatpush1.msra.mxu0 0.0
          %3230 = vmatprep.subr.mxu0 0.0
          %3231 = vmatpush1.msra.mxu0 0.0
          %3232 = vmatprep.subr.mxu0 0.0
          %3233 = vmatpush1.msra.mxu0 0.0
          %3234 = vmatprep.subr.mxu0 0.0
          %3235 = vmatpush1.msra.mxu0 0.0
          %3236 = vmatprep.subr.mxu0 0.0
          %3237 = vmatpush1.msra.mxu0 0.0
          %3238 = vmatprep.subr.mxu0 0.0
          %3239 = vmatpush1.msra.mxu0 0.0
          %3240 = vmatprep.subr.mxu0 0.0
          %3241 = vmatpush1.msra.mxu0 0.0
          %3242 = vmatprep.subr.mxu0 0.0
          %3243 = vmatpush1.msra.mxu0 0.0
          %3244 = vmatprep.subr.mxu0 0.0
          %3245 = vmatpush1.msra.mxu0 0.0
          %3246 = vmatprep.subr.mxu0 0.0
          %3247 = vmatpush1.msra.mxu0 0.0
          %3248 = vmatprep.subr.mxu0 0.0
          %3249 = vmatpush1.msra.mxu0 0.0
          %3250 = vmatprep.subr.mxu0 0.0
          %3251 = vmatpush1.msra.mxu0 0.0
          %3252 = vmatprep.subr.mxu0 0.0
          %3253 = vmatpush1.msra.mxu0 0.0
          %3254 = vmatprep.subr.mxu0 0.0
          %3255 = vmatpush1.msra.mxu0 0.0
          %3256 = vmatprep.subr.mxu0 0.0
          %3257 = vmatpush1.msra.mxu0 0.0
          %3258 = vmatprep.subr.mxu0 0.0
          %3259 = vmatpush1.msra.mxu0 0.0
          %3260 = vmatprep.subr.mxu0 0.0
          %3261 = vmatpush1.msra.mxu0 0.0
          %3262 = vmatprep.subr.mxu0 0.0
          %3263 = vmatpush1.msra.mxu0 0.0
          %3264 = vmatprep.subr.mxu0 0.0
          %3265 = vmatpush1.msra.mxu0 0.0
          %3266 = vmatprep.subr.mxu0 0.0
          %3267 = vmatpush1.msra.mxu0 0.0
          %3268 = vmatprep.subr.mxu0 0.0
          %3269 = vmatpush1.msra.mxu0 0.0
          %3270 = vmatprep.subr.mxu0 0.0
          %3271 = vmatpush1.msra.mxu0 0.0
          %3272 = vmatprep.mubr.f32.mxu0 0.0
          %v3273 = vand.u32 %v3202, 4294901760
          %v3274 = vsub.f32 %v3202, %v3273
          %v3275 = vand.u32 %v3274, 4294901760
          %v3276 = vsub.f32 %v3274, %v3275
          %v3277 = vand.u32 %v3276, 4294901760
          %3278 = vmatmul.mubr.f32.gmra.mrb[0].mxu0 %v3277
          %v3279 = vpop.f32.mrb[0].mxu0
          %v3280 = vadd.f32 %v3198, %v3279
          %v3281 = vpop.f32.mrb[0].mxu0
          %3282 = vdwg.mxu0
          %3283 = vmatprep.subr.mxu0 0.0
          %v3284 = vand.u32 %v2702, 4294901760
          %v3285 = vsub.f32 %v2702, %v3284
          %v3286 = vand.u32 %v3285, 4294901760
          %v3287 = vsub.f32 %v3285, %v3286
          %v3288 = vand.u32 %v3287, 4294901760
          %3289 = vmatpush1.msra.mxu0 %v3288
          %3290 = vmatprep.subr.mxu0 0.0
          %v3291 = vand.u32 %v2703, 4294901760
          %v3292 = vsub.f32 %v2703, %v3291
          %v3293 = vand.u32 %v3292, 4294901760
          %v3294 = vsub.f32 %v3292, %v3293
          %v3295 = vand.u32 %v3294, 4294901760
          %3296 = vmatpush1.msra.mxu0 %v3295
          %3297 = vmatprep.subr.mxu0 0.0
          %v3298 = vand.u32 %v2704, 4294901760
          %v3299 = vsub.f32 %v2704, %v3298
          %v3300 = vand.u32 %v3299, 4294901760
          %v3301 = vsub.f32 %v3299, %v3300
          %v3302 = vand.u32 %v3301, 4294901760
          %3303 = vmatpush1.msra.mxu0 %v3302
          %3304 = vmatprep.subr.mxu0 0.0
          %v3305 = vand.u32 %v2705, 4294901760
          %v3306 = vsub.f32 %v2705, %v3305
          %v3307 = vand.u32 %v3306, 4294901760
          %v3308 = vsub.f32 %v3306, %v3307
          %v3309 = vand.u32 %v3308, 4294901760
          %3310 = vmatpush1.msra.mxu0 %v3309
          %3311 = vmatprep.subr.mxu0 0.0
          %3312 = vmatpush1.msra.mxu0 0.0
          %3313 = vmatprep.subr.mxu0 0.0
          %3314 = vmatpush1.msra.mxu0 0.0
          %3315 = vmatprep.subr.mxu0 0.0
          %3316 = vmatpush1.msra.mxu0 0.0
          %3317 = vmatprep.subr.mxu0 0.0
          %3318 = vmatpush1.msra.mxu0 0.0
          %3319 = vmatprep.subr.mxu0 0.0
          %3320 = vmatpush1.msra.mxu0 0.0
          %3321 = vmatprep.subr.mxu0 0.0
          %3322 = vmatpush1.msra.mxu0 0.0
          %3323 = vmatprep.subr.mxu0 0.0
          %3324 = vmatpush1.msra.mxu0 0.0
          %3325 = vmatprep.subr.mxu0 0.0
          %3326 = vmatpush1.msra.mxu0 0.0
          %3327 = vmatprep.subr.mxu0 0.0
          %3328 = vmatpush1.msra.mxu0 0.0
          %3329 = vmatprep.subr.mxu0 0.0
          %3330 = vmatpush1.msra.mxu0 0.0
          %3331 = vmatprep.subr.mxu0 0.0
          %3332 = vmatpush1.msra.mxu0 0.0
          %3333 = vmatprep.subr.mxu0 0.0
          %3334 = vmatpush1.msra.mxu0 0.0
          %3335 = vmatprep.subr.mxu0 0.0
          %3336 = vmatpush1.msra.mxu0 0.0
          %3337 = vmatprep.subr.mxu0 0.0
          %3338 = vmatpush1.msra.mxu0 0.0
          %3339 = vmatprep.subr.mxu0 0.0
          %3340 = vmatpush1.msra.mxu0 0.0
          %3341 = vmatprep.subr.mxu0 0.0
          %3342 = vmatpush1.msra.mxu0 0.0
          %3343 = vmatprep.subr.mxu0 0.0
          %3344 = vmatpush1.msra.mxu0 0.0
          %3345 = vmatprep.subr.mxu0 0.0
          %3346 = vmatpush1.msra.mxu0 0.0
          %3347 = vmatprep.subr.mxu0 0.0
          %3348 = vmatpush1.msra.mxu0 0.0
          %3349 = vmatprep.subr.mxu0 0.0
          %3350 = vmatpush1.msra.mxu0 0.0
          %3351 = vmatprep.subr.mxu0 0.0
          %3352 = vmatpush1.msra.mxu0 0.0
          %3353 = vmatprep.subr.mxu0 0.0
          %3354 = vmatpush1.msra.mxu0 0.0
          %3355 = vmatprep.subr.mxu0 0.0
          %3356 = vmatpush1.msra.mxu0 0.0
          %3357 = vmatprep.subr.mxu0 0.0
          %3358 = vmatpush1.msra.mxu0 0.0
          %3359 = vmatprep.subr.mxu0 0.0
          %3360 = vmatpush1.msra.mxu0 0.0
          %3361 = vmatprep.subr.mxu0 0.0
          %3362 = vmatpush1.msra.mxu0 0.0
          %3363 = vmatprep.subr.mxu0 0.0
          %3364 = vmatpush1.msra.mxu0 0.0
          %3365 = vmatprep.subr.mxu0 0.0
          %3366 = vmatpush1.msra.mxu0 0.0
          %3367 = vmatprep.mubr.f32.mxu0 0.0
          %v3368 = vand.u32 %v3202, 4294901760
          %3369 = vmatmul.mubr.f32.gmra.mrb[0].mxu0 %v3368
          %v3370 = vpop.f32.mrb[0].mxu0
          %v3371 = vadd.f32 %v3280, %v3370
          %v3372 = vpop.f32.mrb[0].mxu0
          %3373 = vdwg.mxu0
          %3374 = vmatprep.subr.mxu0 0.0
          %v3375 = vand.u32 %v2702, 4294901760
          %v3376 = vsub.f32 %v2702, %v3375
          %3377 = vmatpush1.msra.mxu0 %v3376
          %3378 = vmatprep.subr.mxu0 0.0
          %v3379 = vand.u32 %v2703, 4294901760
          %v3380 = vsub.f32 %v2703, %v3379
          %3381 = vmatpush1.msra.mxu0 %v3380
          %3382 = vmatprep.subr.mxu0 0.0
          %v3383 = vand.u32 %v2704, 4294901760
          %v3384 = vsub.f32 %v2704, %v3383
          %3385 = vmatpush1.msra.mxu0 %v3384
          %3386 = vmatprep.subr.mxu0 0.0
          %v3387 = vand.u32 %v2705, 4294901760
          %v3388 = vsub.f32 %v2705, %v3387
          %3389 = vmatpush1.msra.mxu0 %v3388
          %3390 = vmatprep.subr.mxu0 0.0
          %3391 = vmatpush1.msra.mxu0 0.0
          %3392 = vmatprep.subr.mxu0 0.0
          %3393 = vmatpush1.msra.mxu0 0.0
          %3394 = vmatprep.subr.mxu0 0.0
          %3395 = vmatpush1.msra.mxu0 0.0
          %3396 = vmatprep.subr.mxu0 0.0
          %3397 = vmatpush1.msra.mxu0 0.0
          %3398 = vmatprep.subr.mxu0 0.0
          %3399 = vmatpush1.msra.mxu0 0.0
          %3400 = vmatprep.subr.mxu0 0.0
          %3401 = vmatpush1.msra.mxu0 0.0
          %3402 = vmatprep.subr.mxu0 0.0
          %3403 = vmatpush1.msra.mxu0 0.0
          %3404 = vmatprep.subr.mxu0 0.0
          %3405 = vmatpush1.msra.mxu0 0.0
          %3406 = vmatprep.subr.mxu0 0.0
          %3407 = vmatpush1.msra.mxu0 0.0
          %3408 = vmatprep.subr.mxu0 0.0
          %3409 = vmatpush1.msra.mxu0 0.0
          %3410 = vmatprep.subr.mxu0 0.0
          %3411 = vmatpush1.msra.mxu0 0.0
          %3412 = vmatprep.subr.mxu0 0.0
          %3413 = vmatpush1.msra.mxu0 0.0
          %3414 = vmatprep.subr.mxu0 0.0
          %3415 = vmatpush1.msra.mxu0 0.0
          %3416 = vmatprep.subr.mxu0 0.0
          %3417 = vmatpush1.msra.mxu0 0.0
          %3418 = vmatprep.subr.mxu0 0.0
          %3419 = vmatpush1.msra.mxu0 0.0
          %3420 = vmatprep.subr.mxu0 0.0
          %3421 = vmatpush1.msra.mxu0 0.0
          %3422 = vmatprep.subr.mxu0 0.0
          %3423 = vmatpush1.msra.mxu0 0.0
          %3424 = vmatprep.subr.mxu0 0.0
          %3425 = vmatpush1.msra.mxu0 0.0
          %3426 = vmatprep.subr.mxu0 0.0
          %3427 = vmatpush1.msra.mxu0 0.0
          %3428 = vmatprep.subr.mxu0 0.0
          %3429 = vmatpush1.msra.mxu0 0.0
          %3430 = vmatprep.subr.mxu0 0.0
          %3431 = vmatpush1.msra.mxu0 0.0
          %3432 = vmatprep.subr.mxu0 0.0
          %3433 = vmatpush1.msra.mxu0 0.0
          %3434 = vmatprep.subr.mxu0 0.0
          %3435 = vmatpush1.msra.mxu0 0.0
          %3436 = vmatprep.subr.mxu0 0.0
          %3437 = vmatpush1.msra.mxu0 0.0
          %3438 = vmatprep.subr.mxu0 0.0
          %3439 = vmatpush1.msra.mxu0 0.0
          %3440 = vmatprep.subr.mxu0 0.0
          %3441 = vmatpush1.msra.mxu0 0.0
          %3442 = vmatprep.subr.mxu0 0.0
          %3443 = vmatpush1.msra.mxu0 0.0
          %3444 = vmatprep.subr.mxu0 0.0
          %3445 = vmatpush1.msra.mxu0 0.0
          %3446 = vmatprep.mubr.f32.mxu0 0.0
          %v3447 = vand.u32 %v3202, 4294901760
          %v3448 = vsub.f32 %v3202, %v3447
          %3449 = vmatmul.mubr.f32.gmra.mrb[0].mxu0 %v3448
          %v3450 = vpop.f32.mrb[0].mxu0
          %v3451 = vadd.f32 %v3371, %v3450
          %v3452 = vpop.f32.mrb[0].mxu0
          %3453 = vdwg.mxu0
          %3454 = vmatprep.subr.mxu0 0.0
          %v3455 = vand.u32 %v2702, 4294901760
          %3456 = vmatpush1.msra.mxu0 %v3455
          %3457 = vmatprep.subr.mxu0 0.0
          %v3458 = vand.u32 %v2703, 4294901760
          %3459 = vmatpush1.msra.mxu0 %v3458
          %3460 = vmatprep.subr.mxu0 0.0
          %v3461 = vand.u32 %v2704, 4294901760
          %3462 = vmatpush1.msra.mxu0 %v3461
          %3463 = vmatprep.subr.mxu0 0.0
          %v3464 = vand.u32 %v2705, 4294901760
          %3465 = vmatpush1.msra.mxu0 %v3464
          %3466 = vmatprep.subr.mxu0 0.0
          %3467 = vmatpush1.msra.mxu0 0.0
          %3468 = vmatprep.subr.mxu0 0.0
          %3469 = vmatpush1.msra.mxu0 0.0
          %3470 = vmatprep.subr.mxu0 0.0
          %3471 = vmatpush1.msra.mxu0 0.0
          %3472 = vmatprep.subr.mxu0 0.0
          %3473 = vmatpush1.msra.mxu0 0.0
          %3474 = vmatprep.subr.mxu0 0.0
          %3475 = vmatpush1.msra.mxu0 0.0
          %3476 = vmatprep.subr.mxu0 0.0
          %3477 = vmatpush1.msra.mxu0 0.0
          %3478 = vmatprep.subr.mxu0 0.0
          %3479 = vmatpush1.msra.mxu0 0.0
          %3480 = vmatprep.subr.mxu0 0.0
          %3481 = vmatpush1.msra.mxu0 0.0
          %3482 = vmatprep.subr.mxu0 0.0
          %3483 = vmatpush1.msra.mxu0 0.0
          %3484 = vmatprep.subr.mxu0 0.0
          %3485 = vmatpush1.msra.mxu0 0.0
          %3486 = vmatprep.subr.mxu0 0.0
          %3487 = vmatpush1.msra.mxu0 0.0
          %3488 = vmatprep.subr.mxu0 0.0
          %3489 = vmatpush1.msra.mxu0 0.0
          %3490 = vmatprep.subr.mxu0 0.0
          %3491 = vmatpush1.msra.mxu0 0.0
          %3492 = vmatprep.subr.mxu0 0.0
          %3493 = vmatpush1.msra.mxu0 0.0
          %3494 = vmatprep.subr.mxu0 0.0
          %3495 = vmatpush1.msra.mxu0 0.0
          %3496 = vmatprep.subr.mxu0 0.0
          %3497 = vmatpush1.msra.mxu0 0.0
          %3498 = vmatprep.subr.mxu0 0.0
          %3499 = vmatpush1.msra.mxu0 0.0
          %3500 = vmatprep.subr.mxu0 0.0
          %3501 = vmatpush1.msra.mxu0 0.0
          %3502 = vmatprep.subr.mxu0 0.0
          %3503 = vmatpush1.msra.mxu0 0.0
          %3504 = vmatprep.subr.mxu0 0.0
          %3505 = vmatpush1.msra.mxu0 0.0
          %3506 = vmatprep.subr.mxu0 0.0
          %3507 = vmatpush1.msra.mxu0 0.0
          %3508 = vmatprep.subr.mxu0 0.0
          %3509 = vmatpush1.msra.mxu0 0.0
          %3510 = vmatprep.subr.mxu0 0.0
          %3511 = vmatpush1.msra.mxu0 0.0
          %3512 = vmatprep.subr.mxu0 0.0
          %3513 = vmatpush1.msra.mxu0 0.0
          %3514 = vmatprep.subr.mxu0 0.0
          %3515 = vmatpush1.msra.mxu0 0.0
          %3516 = vmatprep.subr.mxu0 0.0
          %3517 = vmatpush1.msra.mxu0 0.0
          %3518 = vmatprep.subr.mxu0 0.0
          %3519 = vmatpush1.msra.mxu0 0.0
          %3520 = vmatprep.subr.mxu0 0.0
          %3521 = vmatpush1.msra.mxu0 0.0
          %3522 = vmatprep.mubr.f32.mxu0 0.0
          %v3523 = vand.u32 %v3202, 4294901760
          %v3524 = vsub.f32 %v3202, %v3523
          %v3525 = vand.u32 %v3524, 4294901760
          %3526 = vmatmul.mubr.f32.gmra.mrb[0].mxu0 %v3525
          %v3527 = vpop.f32.mrb[0].mxu0
          %v3528 = vadd.f32 %v3451, %v3527
          %v3529 = vpop.f32.mrb[0].mxu0
          %3530 = vdwg.mxu0
          %3531 = vmatprep.subr.mxu0 0.0
          %v3532 = vand.u32 %v2702, 4294901760
          %v3533 = vsub.f32 %v2702, %v3532
          %v3534 = vand.u32 %v3533, 4294901760
          %3535 = vmatpush1.msra.mxu0 %v3534
          %3536 = vmatprep.subr.mxu0 0.0
          %v3537 = vand.u32 %v2703, 4294901760
          %v3538 = vsub.f32 %v2703, %v3537
          %v3539 = vand.u32 %v3538, 4294901760
          %3540 = vmatpush1.msra.mxu0 %v3539
          %3541 = vmatprep.subr.mxu0 0.0
          %v3542 = vand.u32 %v2704, 4294901760
          %v3543 = vsub.f32 %v2704, %v3542
          %v3544 = vand.u32 %v3543, 4294901760
          %3545 = vmatpush1.msra.mxu0 %v3544
          %3546 = vmatprep.subr.mxu0 0.0
          %v3547 = vand.u32 %v2705, 4294901760
          %v3548 = vsub.f32 %v2705, %v3547
          %v3549 = vand.u32 %v3548, 4294901760
          %3550 = vmatpush1.msra.mxu0 %v3549
          %3551 = vmatprep.subr.mxu0 0.0
          %3552 = vmatpush1.msra.mxu0 0.0
          %3553 = vmatprep.subr.mxu0 0.0
          %3554 = vmatpush1.msra.mxu0 0.0
          %3555 = vmatprep.subr.mxu0 0.0
          %3556 = vmatpush1.msra.mxu0 0.0
          %3557 = vmatprep.subr.mxu0 0.0
          %3558 = vmatpush1.msra.mxu0 0.0
          %3559 = vmatprep.subr.mxu0 0.0
          %3560 = vmatpush1.msra.mxu0 0.0
          %3561 = vmatprep.subr.mxu0 0.0
          %3562 = vmatpush1.msra.mxu0 0.0
          %3563 = vmatprep.subr.mxu0 0.0
          %3564 = vmatpush1.msra.mxu0 0.0
          %3565 = vmatprep.subr.mxu0 0.0
          %3566 = vmatpush1.msra.mxu0 0.0
          %3567 = vmatprep.subr.mxu0 0.0
          %3568 = vmatpush1.msra.mxu0 0.0
          %3569 = vmatprep.subr.mxu0 0.0
          %3570 = vmatpush1.msra.mxu0 0.0
          %3571 = vmatprep.subr.mxu0 0.0
          %3572 = vmatpush1.msra.mxu0 0.0
          %3573 = vmatprep.subr.mxu0 0.0
          %3574 = vmatpush1.msra.mxu0 0.0
          %3575 = vmatprep.subr.mxu0 0.0
          %3576 = vmatpush1.msra.mxu0 0.0
          %3577 = vmatprep.subr.mxu0 0.0
          %3578 = vmatpush1.msra.mxu0 0.0
          %3579 = vmatprep.subr.mxu0 0.0
          %3580 = vmatpush1.msra.mxu0 0.0
          %3581 = vmatprep.subr.mxu0 0.0
          %3582 = vmatpush1.msra.mxu0 0.0
          %3583 = vmatprep.subr.mxu0 0.0
          %3584 = vmatpush1.msra.mxu0 0.0
          %3585 = vmatprep.subr.mxu0 0.0
          %3586 = vmatpush1.msra.mxu0 0.0
          %3587 = vmatprep.subr.mxu0 0.0
          %3588 = vmatpush1.msra.mxu0 0.0
          %3589 = vmatprep.subr.mxu0 0.0
          %3590 = vmatpush1.msra.mxu0 0.0
          %3591 = vmatprep.subr.mxu0 0.0
          %3592 = vmatpush1.msra.mxu0 0.0
          %3593 = vmatprep.subr.mxu0 0.0
          %3594 = vmatpush1.msra.mxu0 0.0
          %3595 = vmatprep.subr.mxu0 0.0
          %3596 = vmatpush1.msra.mxu0 0.0
          %3597 = vmatprep.subr.mxu0 0.0
          %3598 = vmatpush1.msra.mxu0 0.0
          %3599 = vmatprep.subr.mxu0 0.0
          %3600 = vmatpush1.msra.mxu0 0.0
          %3601 = vmatprep.subr.mxu0 0.0
          %3602 = vmatpush1.msra.mxu0 0.0
          %3603 = vmatprep.subr.mxu0 0.0
          %3604 = vmatpush1.msra.mxu0 0.0
          %3605 = vmatprep.subr.mxu0 0.0
          %3606 = vmatpush1.msra.mxu0 0.0
          %3607 = vmatprep.mubr.f32.mxu0 0.0
          %v3608 = vand.u32 %v3202, 4294901760
          %3609 = vmatmul.mubr.f32.gmra.mrb[0].mxu0 %v3608
          %v3610 = vpop.f32.mrb[0].mxu0
          %v3611 = vadd.f32 %v3528, %v3610
          %v3612 = vpop.f32.mrb[0].mxu0
          %3613 = vdwg.mxu0
          %3614 = vmatprep.subr.mxu0 0.0
          %v3615 = vand.u32 %v2702, 4294901760
          %3616 = vmatpush1.msra.mxu0 %v3615
          %3617 = vmatprep.subr.mxu0 0.0
          %v3618 = vand.u32 %v2703, 4294901760
          %3619 = vmatpush1.msra.mxu0 %v3618
          %3620 = vmatprep.subr.mxu0 0.0
          %v3621 = vand.u32 %v2704, 4294901760
          %3622 = vmatpush1.msra.mxu0 %v3621
          %3623 = vmatprep.subr.mxu0 0.0
          %v3624 = vand.u32 %v2705, 4294901760
          %3625 = vmatpush1.msra.mxu0 %v3624
          %3626 = vmatprep.subr.mxu0 0.0
          %3627 = vmatpush1.msra.mxu0 0.0
          %3628 = vmatprep.subr.mxu0 0.0
          %3629 = vmatpush1.msra.mxu0 0.0
          %3630 = vmatprep.subr.mxu0 0.0
          %3631 = vmatpush1.msra.mxu0 0.0
          %3632 = vmatprep.subr.mxu0 0.0
          %3633 = vmatpush1.msra.mxu0 0.0
          %3634 = vmatprep.subr.mxu0 0.0
          %3635 = vmatpush1.msra.mxu0 0.0
          %3636 = vmatprep.subr.mxu0 0.0
          %3637 = vmatpush1.msra.mxu0 0.0
          %3638 = vmatprep.subr.mxu0 0.0
          %3639 = vmatpush1.msra.mxu0 0.0
          %3640 = vmatprep.subr.mxu0 0.0
          %3641 = vmatpush1.msra.mxu0 0.0
          %3642 = vmatprep.subr.mxu0 0.0
          %3643 = vmatpush1.msra.mxu0 0.0
          %3644 = vmatprep.subr.mxu0 0.0
          %3645 = vmatpush1.msra.mxu0 0.0
          %3646 = vmatprep.subr.mxu0 0.0
          %3647 = vmatpush1.msra.mxu0 0.0
          %3648 = vmatprep.subr.mxu0 0.0
          %3649 = vmatpush1.msra.mxu0 0.0
          %3650 = vmatprep.subr.mxu0 0.0
          %3651 = vmatpush1.msra.mxu0 0.0
          %3652 = vmatprep.subr.mxu0 0.0
          %3653 = vmatpush1.msra.mxu0 0.0
          %3654 = vmatprep.subr.mxu0 0.0
          %3655 = vmatpush1.msra.mxu0 0.0
          %3656 = vmatprep.subr.mxu0 0.0
          %3657 = vmatpush1.msra.mxu0 0.0
          %3658 = vmatprep.subr.mxu0 0.0
          %3659 = vmatpush1.msra.mxu0 0.0
          %3660 = vmatprep.subr.mxu0 0.0
          %3661 = vmatpush1.msra.mxu0 0.0
          %3662 = vmatprep.subr.mxu0 0.0
          %3663 = vmatpush1.msra.mxu0 0.0
          %3664 = vmatprep.subr.mxu0 0.0
          %3665 = vmatpush1.msra.mxu0 0.0
          %3666 = vmatprep.subr.mxu0 0.0
          %3667 = vmatpush1.msra.mxu0 0.0
          %3668 = vmatprep.subr.mxu0 0.0
          %3669 = vmatpush1.msra.mxu0 0.0
          %3670 = vmatprep.subr.mxu0 0.0
          %3671 = vmatpush1.msra.mxu0 0.0
          %3672 = vmatprep.subr.mxu0 0.0
          %3673 = vmatpush1.msra.mxu0 0.0
          %3674 = vmatprep.subr.mxu0 0.0
          %3675 = vmatpush1.msra.mxu0 0.0
          %3676 = vmatprep.subr.mxu0 0.0
          %3677 = vmatpush1.msra.mxu0 0.0
          %3678 = vmatprep.subr.mxu0 0.0
          %3679 = vmatpush1.msra.mxu0 0.0
          %3680 = vmatprep.subr.mxu0 0.0
          %3681 = vmatpush1.msra.mxu0 0.0
          %3682 = vmatprep.mubr.f32.mxu0 0.0
          %v3683 = vand.u32 %v3202, 4294901760
          %3684 = vmatmul.mubr.f32.gmra.mrb[0].mxu0 %v3683
          %v3685 = vpop.f32.mrb[0].mxu0
          %v3686 = vadd.f32 %v3611, %v3685
          %v3687 = vpop.f32.mrb[0].mxu0
          %3688 = vdwg.mxu0
          %s3689 = scalar_lea.vmem %s5, 2
          %v3690 = vld [vmem:[%s3689] sm:$0x1]
          %v3692 = vlaneseq
          %v3693 = vshrl.u32 %v3692, 7
          %v3694 = vsub.s32 0, %v3693
          %v3695 = vrot.slane %v3690, %v3694
          %v3697 = vadd.f32 %v3686, %v3695
          %s3698 = scalar_lea.vmem %s3, 8
          %v3699 = vld [vmem:[%s3698] sm:$0xf]
          %v3700 = vxor.u32 %v3697, 2147483648
          %v3701 = vmul.f32 %v3700, 1.442695
          %v3702 = vpow.pop %v3701
          %v3703 = vadd.f32 %v3702, 1.0
          %v3704 = vrcp.pop %v3703
          %v3705 = vmul.f32 1.0, %v3704
          %v3706 = vtanh.pop %v3697
          %3708 = vrot.lane.b32.xlu0 %v3699, 16
          %v3709 = vpop.permute.xlu0 %3708
          %v3711 = vmul.f32 %v3705, %v3709
          %3713 = vrot.lane.b32.xlu0 %v3706, 96
          %v3714 = vpop.permute.xlu0 %3713
          %v3716 = vmul.f32 %v3705, %v3714
          %3718 = vrot.lane.b32.xlu0 %v3716, 16
          %v3719 = vpop.permute.xlu0 %3718
          %v3721 = vadd.f32 %v3711, %v3719
          %v3722 = vtanh.pop %v3721
          %3724 = vrot.lane.b32.xlu0 %v3722, 32
          %v3725 = vpop.permute.xlu0 %3724
          %v3727 = vmul.f32 %v3705, %v3725
          %3728 = vrot.lane.b32.xlu0 %v3699, 64
          %v3729 = vpop.permute.xlu0 %3728
          %v3731 = vmul.f32 %v3705, %v3729
          %v3732 = vadd.f32 %v3731, %v3719
          %v3733 = vtanh.pop %v3732
          %3735 = vrot.lane.b32.xlu0 %v3733, 32
          %v3736 = vpop.permute.xlu0 %3735
          %v3738 = vmul.f32 %v3705, %v3736
          %3740 = vrot.lane.b32.xlu0 %v3727, 80
          %v3741 = vpop.permute.xlu0 %3740
          %3744 = vrot.lane.b32.xlu0 %v3738, 32
          %v3745 = vpop.permute.xlu0 %3744
          %v3747 = vsel %vm1653, %v3741, %v3745
          %3749 = vrot.lane.b32.xlu0 %v3747, 112
          %v3750 = vpop.permute.xlu0 %3749
          %v3752 = vadd.f32 %v3747, %v3750
          %vm3753 = vcmask 125952
          %3754 = vst.msk [vmem:[#allocation11] sm:$0xf] %vm3753, %v3752
          %v3755 = vld [vmem:[%s7] sm:$0xff]
          %v3756 = vld [vmem:[%s7 + $0x8] sm:$0xff]
          %v3757 = vld [vmem:[%s8] sm:$0x1]
          %v3759 = vlaneseq
          %v3760 = vshrl.u32 %v3759, 7
          %v3761 = vsub.s32 0, %v3760
          %v3762 = vrot.slane %v3757, %v3761
          %v3765 = vsel %vm1653, %v3752, 0
          %3767 = vmatprep.subr.mxu0 0.0
          %v3768 = vand.u32 %v3755, 4294901760
          %3769 = vmatpush1.msra.mxu0 %v3768
          %3770 = vmatprep.subr.mxu0 0.0
          %v3771 = vand.u32 %v3756, 4294901760
          %3772 = vmatpush1.msra.mxu0 %v3771
          %3773 = vmatprep.subr.mxu0 0.0
          %3774 = vmatpush1.msra.mxu0 0.0
          %3775 = vmatprep.subr.mxu0 0.0
          %3776 = vmatpush1.msra.mxu0 0.0
          %3777 = vmatprep.subr.mxu0 0.0
          %3778 = vmatpush1.msra.mxu0 0.0
          %3779 = vmatprep.subr.mxu0 0.0
          %3780 = vmatpush1.msra.mxu0 0.0
          %3781 = vmatprep.subr.mxu0 0.0
          %3782 = vmatpush1.msra.mxu0 0.0
          %3783 = vmatprep.subr.mxu0 0.0
          %3784 = vmatpush1.msra.mxu0 0.0
          %3785 = vmatprep.subr.mxu0 0.0
          %3786 = vmatpush1.msra.mxu0 0.0
          %3787 = vmatprep.subr.mxu0 0.0
          %3788 = vmatpush1.msra.mxu0 0.0
          %3789 = vmatprep.subr.mxu0 0.0
          %3790 = vmatpush1.msra.mxu0 0.0
          %3791 = vmatprep.subr.mxu0 0.0
          %3792 = vmatpush1.msra.mxu0 0.0
          %3793 = vmatprep.subr.mxu0 0.0
          %3794 = vmatpush1.msra.mxu0 0.0
          %3795 = vmatprep.subr.mxu0 0.0
          %3796 = vmatpush1.msra.mxu0 0.0
          %3797 = vmatprep.subr.mxu0 0.0
          %3798 = vmatpush1.msra.mxu0 0.0
          %3799 = vmatprep.subr.mxu0 0.0
          %3800 = vmatpush1.msra.mxu0 0.0
          %3801 = vmatprep.subr.mxu0 0.0
          %3802 = vmatpush1.msra.mxu0 0.0
          %3803 = vmatprep.subr.mxu0 0.0
          %3804 = vmatpush1.msra.mxu0 0.0
          %3805 = vmatprep.subr.mxu0 0.0
          %3806 = vmatpush1.msra.mxu0 0.0
          %3807 = vmatprep.subr.mxu0 0.0
          %3808 = vmatpush1.msra.mxu0 0.0
          %3809 = vmatprep.subr.mxu0 0.0
          %3810 = vmatpush1.msra.mxu0 0.0
          %3811 = vmatprep.subr.mxu0 0.0
          %3812 = vmatpush1.msra.mxu0 0.0
          %3813 = vmatprep.subr.mxu0 0.0
          %3814 = vmatpush1.msra.mxu0 0.0
          %3815 = vmatprep.subr.mxu0 0.0
          %3816 = vmatpush1.msra.mxu0 0.0
          %3817 = vmatprep.subr.mxu0 0.0
          %3818 = vmatpush1.msra.mxu0 0.0
          %3819 = vmatprep.subr.mxu0 0.0
          %3820 = vmatpush1.msra.mxu0 0.0
          %3821 = vmatprep.subr.mxu0 0.0
          %3822 = vmatpush1.msra.mxu0 0.0
          %3823 = vmatprep.subr.mxu0 0.0
          %3824 = vmatpush1.msra.mxu0 0.0
          %3825 = vmatprep.subr.mxu0 0.0
          %3826 = vmatpush1.msra.mxu0 0.0
          %3827 = vmatprep.subr.mxu0 0.0
          %3828 = vmatpush1.msra.mxu0 0.0
          %3829 = vmatprep.subr.mxu0 0.0
          %3830 = vmatpush1.msra.mxu0 0.0
          %3831 = vmatprep.subr.mxu0 0.0
          %3832 = vmatpush1.msra.mxu0 0.0
          %3833 = vmatprep.mubr.f32.mxu0 0.0
          %v3834 = vand.u32 %v3765, 4294901760
          %v3835 = vsub.f32 %v3765, %v3834
          %v3836 = vand.u32 %v3835, 4294901760
          %v3837 = vsub.f32 %v3835, %v3836
          %v3838 = vand.u32 %v3837, 4294901760
          %3839 = vmatmul.mubr.f32.gmra.mrb[0].mxu0 %v3838
          %v3840 = vpop.f32.mrb[0].mxu0
          %v3841 = vadd.f32 %v3762, %v3840
          %v3842 = vpop.f32.mrb[0].mxu0
          %3843 = vdwg.mxu0
          %3844 = vmatprep.subr.mxu0 0.0
          %v3845 = vand.u32 %v3755, 4294901760
          %v3846 = vsub.f32 %v3755, %v3845
          %v3847 = vand.u32 %v3846, 4294901760
          %v3848 = vsub.f32 %v3846, %v3847
          %v3849 = vand.u32 %v3848, 4294901760
          %3850 = vmatpush1.msra.mxu0 %v3849
          %3851 = vmatprep.subr.mxu0 0.0
          %v3852 = vand.u32 %v3756, 4294901760
          %v3853 = vsub.f32 %v3756, %v3852
          %v3854 = vand.u32 %v3853, 4294901760
          %v3855 = vsub.f32 %v3853, %v3854
          %v3856 = vand.u32 %v3855, 4294901760
          %3857 = vmatpush1.msra.mxu0 %v3856
          %3858 = vmatprep.subr.mxu0 0.0
          %3859 = vmatpush1.msra.mxu0 0.0
          %3860 = vmatprep.subr.mxu0 0.0
          %3861 = vmatpush1.msra.mxu0 0.0
          %3862 = vmatprep.subr.mxu0 0.0
          %3863 = vmatpush1.msra.mxu0 0.0
          %3864 = vmatprep.subr.mxu0 0.0
          %3865 = vmatpush1.msra.mxu0 0.0
          %3866 = vmatprep.subr.mxu0 0.0
          %3867 = vmatpush1.msra.mxu0 0.0
          %3868 = vmatprep.subr.mxu0 0.0
          %3869 = vmatpush1.msra.mxu0 0.0
          %3870 = vmatprep.subr.mxu0 0.0
          %3871 = vmatpush1.msra.mxu0 0.0
          %3872 = vmatprep.subr.mxu0 0.0
          %3873 = vmatpush1.msra.mxu0 0.0
          %3874 = vmatprep.subr.mxu0 0.0
          %3875 = vmatpush1.msra.mxu0 0.0
          %3876 = vmatprep.subr.mxu0 0.0
          %3877 = vmatpush1.msra.mxu0 0.0
          %3878 = vmatprep.subr.mxu0 0.0
          %3879 = vmatpush1.msra.mxu0 0.0
          %3880 = vmatprep.subr.mxu0 0.0
          %3881 = vmatpush1.msra.mxu0 0.0
          %3882 = vmatprep.subr.mxu0 0.0
          %3883 = vmatpush1.msra.mxu0 0.0
          %3884 = vmatprep.subr.mxu0 0.0
          %3885 = vmatpush1.msra.mxu0 0.0
          %3886 = vmatprep.subr.mxu0 0.0
          %3887 = vmatpush1.msra.mxu0 0.0
          %3888 = vmatprep.subr.mxu0 0.0
          %3889 = vmatpush1.msra.mxu0 0.0
          %3890 = vmatprep.subr.mxu0 0.0
          %3891 = vmatpush1.msra.mxu0 0.0
          %3892 = vmatprep.subr.mxu0 0.0
          %3893 = vmatpush1.msra.mxu0 0.0
          %3894 = vmatprep.subr.mxu0 0.0
          %3895 = vmatpush1.msra.mxu0 0.0
          %3896 = vmatprep.subr.mxu0 0.0
          %3897 = vmatpush1.msra.mxu0 0.0
          %3898 = vmatprep.subr.mxu0 0.0
          %3899 = vmatpush1.msra.mxu0 0.0
          %3900 = vmatprep.subr.mxu0 0.0
          %3901 = vmatpush1.msra.mxu0 0.0
          %3902 = vmatprep.subr.mxu0 0.0
          %3903 = vmatpush1.msra.mxu0 0.0
          %3904 = vmatprep.subr.mxu0 0.0
          %3905 = vmatpush1.msra.mxu0 0.0
          %3906 = vmatprep.subr.mxu0 0.0
          %3907 = vmatpush1.msra.mxu0 0.0
          %3908 = vmatprep.subr.mxu0 0.0
          %3909 = vmatpush1.msra.mxu0 0.0
          %3910 = vmatprep.subr.mxu0 0.0
          %3911 = vmatpush1.msra.mxu0 0.0
          %3912 = vmatprep.subr.mxu0 0.0
          %3913 = vmatpush1.msra.mxu0 0.0
          %3914 = vmatprep.subr.mxu0 0.0
          %3915 = vmatpush1.msra.mxu0 0.0
          %3916 = vmatprep.subr.mxu0 0.0
          %3917 = vmatpush1.msra.mxu0 0.0
          %3918 = vmatprep.mubr.f32.mxu0 0.0
          %v3919 = vand.u32 %v3765, 4294901760
          %3920 = vmatmul.mubr.f32.gmra.mrb[0].mxu0 %v3919
          %v3921 = vpop.f32.mrb[0].mxu0
          %v3922 = vadd.f32 %v3841, %v3921
          %v3923 = vpop.f32.mrb[0].mxu0
          %3924 = vdwg.mxu0
          %3925 = vmatprep.subr.mxu0 0.0
          %v3926 = vand.u32 %v3755, 4294901760
          %v3927 = vsub.f32 %v3755, %v3926
          %3928 = vmatpush1.msra.mxu0 %v3927
          %3929 = vmatprep.subr.mxu0 0.0
          %v3930 = vand.u32 %v3756, 4294901760
          %v3931 = vsub.f32 %v3756, %v3930
          %3932 = vmatpush1.msra.mxu0 %v3931
          %3933 = vmatprep.subr.mxu0 0.0
          %3934 = vmatpush1.msra.mxu0 0.0
          %3935 = vmatprep.subr.mxu0 0.0
          %3936 = vmatpush1.msra.mxu0 0.0
          %3937 = vmatprep.subr.mxu0 0.0
          %3938 = vmatpush1.msra.mxu0 0.0
          %3939 = vmatprep.subr.mxu0 0.0
          %3940 = vmatpush1.msra.mxu0 0.0
          %3941 = vmatprep.subr.mxu0 0.0
          %3942 = vmatpush1.msra.mxu0 0.0
          %3943 = vmatprep.subr.mxu0 0.0
          %3944 = vmatpush1.msra.mxu0 0.0
          %3945 = vmatprep.subr.mxu0 0.0
          %3946 = vmatpush1.msra.mxu0 0.0
          %3947 = vmatprep.subr.mxu0 0.0
          %3948 = vmatpush1.msra.mxu0 0.0
          %3949 = vmatprep.subr.mxu0 0.0
          %3950 = vmatpush1.msra.mxu0 0.0
          %3951 = vmatprep.subr.mxu0 0.0
          %3952 = vmatpush1.msra.mxu0 0.0
          %3953 = vmatprep.subr.mxu0 0.0
          %3954 = vmatpush1.msra.mxu0 0.0
          %3955 = vmatprep.subr.mxu0 0.0
          %3956 = vmatpush1.msra.mxu0 0.0
          %3957 = vmatprep.subr.mxu0 0.0
          %3958 = vmatpush1.msra.mxu0 0.0
          %3959 = vmatprep.subr.mxu0 0.0
          %3960 = vmatpush1.msra.mxu0 0.0
          %3961 = vmatprep.subr.mxu0 0.0
          %3962 = vmatpush1.msra.mxu0 0.0
          %3963 = vmatprep.subr.mxu0 0.0
          %3964 = vmatpush1.msra.mxu0 0.0
          %3965 = vmatprep.subr.mxu0 0.0
          %3966 = vmatpush1.msra.mxu0 0.0
          %3967 = vmatprep.subr.mxu0 0.0
          %3968 = vmatpush1.msra.mxu0 0.0
          %3969 = vmatprep.subr.mxu0 0.0
          %3970 = vmatpush1.msra.mxu0 0.0
          %3971 = vmatprep.subr.mxu0 0.0
          %3972 = vmatpush1.msra.mxu0 0.0
          %3973 = vmatprep.subr.mxu0 0.0
          %3974 = vmatpush1.msra.mxu0 0.0
          %3975 = vmatprep.subr.mxu0 0.0
          %3976 = vmatpush1.msra.mxu0 0.0
          %3977 = vmatprep.subr.mxu0 0.0
          %3978 = vmatpush1.msra.mxu0 0.0
          %3979 = vmatprep.subr.mxu0 0.0
          %3980 = vmatpush1.msra.mxu0 0.0
          %3981 = vmatprep.subr.mxu0 0.0
          %3982 = vmatpush1.msra.mxu0 0.0
          %3983 = vmatprep.subr.mxu0 0.0
          %3984 = vmatpush1.msra.mxu0 0.0
          %3985 = vmatprep.subr.mxu0 0.0
          %3986 = vmatpush1.msra.mxu0 0.0
          %3987 = vmatprep.subr.mxu0 0.0
          %3988 = vmatpush1.msra.mxu0 0.0
          %3989 = vmatprep.subr.mxu0 0.0
          %3990 = vmatpush1.msra.mxu0 0.0
          %3991 = vmatprep.subr.mxu0 0.0
          %3992 = vmatpush1.msra.mxu0 0.0
          %3993 = vmatprep.mubr.f32.mxu0 0.0
          %v3994 = vand.u32 %v3765, 4294901760
          %v3995 = vsub.f32 %v3765, %v3994
          %3996 = vmatmul.mubr.f32.gmra.mrb[0].mxu0 %v3995
          %v3997 = vpop.f32.mrb[0].mxu0
          %v3998 = vadd.f32 %v3922, %v3997
          %v3999 = vpop.f32.mrb[0].mxu0
          %4000 = vdwg.mxu0
          %4001 = vmatprep.subr.mxu0 0.0
          %v4002 = vand.u32 %v3755, 4294901760
          %4003 = vmatpush1.msra.mxu0 %v4002
          %4004 = vmatprep.subr.mxu0 0.0
          %v4005 = vand.u32 %v3756, 4294901760
          %4006 = vmatpush1.msra.mxu0 %v4005
          %4007 = vmatprep.subr.mxu0 0.0
          %4008 = vmatpush1.msra.mxu0 0.0
          %4009 = vmatprep.subr.mxu0 0.0
          %4010 = vmatpush1.msra.mxu0 0.0
          %4011 = vmatprep.subr.mxu0 0.0
          %4012 = vmatpush1.msra.mxu0 0.0
          %4013 = vmatprep.subr.mxu0 0.0
          %4014 = vmatpush1.msra.mxu0 0.0
          %4015 = vmatprep.subr.mxu0 0.0
          %4016 = vmatpush1.msra.mxu0 0.0
          %4017 = vmatprep.subr.mxu0 0.0
          %4018 = vmatpush1.msra.mxu0 0.0
          %4019 = vmatprep.subr.mxu0 0.0
          %4020 = vmatpush1.msra.mxu0 0.0
          %4021 = vmatprep.subr.mxu0 0.0
          %4022 = vmatpush1.msra.mxu0 0.0
          %4023 = vmatprep.subr.mxu0 0.0
          %4024 = vmatpush1.msra.mxu0 0.0
          %4025 = vmatprep.subr.mxu0 0.0
          %4026 = vmatpush1.msra.mxu0 0.0
          %4027 = vmatprep.subr.mxu0 0.0
          %4028 = vmatpush1.msra.mxu0 0.0
          %4029 = vmatprep.subr.mxu0 0.0
          %4030 = vmatpush1.msra.mxu0 0.0
          %4031 = vmatprep.subr.mxu0 0.0
          %4032 = vmatpush1.msra.mxu0 0.0
          %4033 = vmatprep.subr.mxu0 0.0
          %4034 = vmatpush1.msra.mxu0 0.0
          %4035 = vmatprep.subr.mxu0 0.0
          %4036 = vmatpush1.msra.mxu0 0.0
          %4037 = vmatprep.subr.mxu0 0.0
          %4038 = vmatpush1.msra.mxu0 0.0
          %4039 = vmatprep.subr.mxu0 0.0
          %4040 = vmatpush1.msra.mxu0 0.0
          %4041 = vmatprep.subr.mxu0 0.0
          %4042 = vmatpush1.msra.mxu0 0.0
          %4043 = vmatprep.subr.mxu0 0.0
          %4044 = vmatpush1.msra.mxu0 0.0
          %4045 = vmatprep.subr.mxu0 0.0
          %4046 = vmatpush1.msra.mxu0 0.0
          %4047 = vmatprep.subr.mxu0 0.0
          %4048 = vmatpush1.msra.mxu0 0.0
          %4049 = vmatprep.subr.mxu0 0.0
          %4050 = vmatpush1.msra.mxu0 0.0
          %4051 = vmatprep.subr.mxu0 0.0
          %4052 = vmatpush1.msra.mxu0 0.0
          %4053 = vmatprep.subr.mxu0 0.0
          %4054 = vmatpush1.msra.mxu0 0.0
          %4055 = vmatprep.subr.mxu0 0.0
          %4056 = vmatpush1.msra.mxu0 0.0
          %4057 = vmatprep.subr.mxu0 0.0
          %4058 = vmatpush1.msra.mxu0 0.0
          %4059 = vmatprep.subr.mxu0 0.0
          %4060 = vmatpush1.msra.mxu0 0.0
          %4061 = vmatprep.subr.mxu0 0.0
          %4062 = vmatpush1.msra.mxu0 0.0
          %4063 = vmatprep.subr.mxu0 0.0
          %4064 = vmatpush1.msra.mxu0 0.0
          %4065 = vmatprep.subr.mxu0 0.0
          %4066 = vmatpush1.msra.mxu0 0.0
          %4067 = vmatprep.mubr.f32.mxu0 0.0
          %v4068 = vand.u32 %v3765, 4294901760
          %v4069 = vsub.f32 %v3765, %v4068
          %v4070 = vand.u32 %v4069, 4294901760
          %4071 = vmatmul.mubr.f32.gmra.mrb[0].mxu0 %v4070
          %v4072 = vpop.f32.mrb[0].mxu0
          %v4073 = vadd.f32 %v3998, %v4072
          %v4074 = vpop.f32.mrb[0].mxu0
          %4075 = vdwg.mxu0
          %4076 = vmatprep.subr.mxu0 0.0
          %v4077 = vand.u32 %v3755, 4294901760
          %v4078 = vsub.f32 %v3755, %v4077
          %v4079 = vand.u32 %v4078, 4294901760
          %4080 = vmatpush1.msra.mxu0 %v4079
          %4081 = vmatprep.subr.mxu0 0.0
          %v4082 = vand.u32 %v3756, 4294901760
          %v4083 = vsub.f32 %v3756, %v4082
          %v4084 = vand.u32 %v4083, 4294901760
          %4085 = vmatpush1.msra.mxu0 %v4084
          %4086 = vmatprep.subr.mxu0 0.0
          %4087 = vmatpush1.msra.mxu0 0.0
          %4088 = vmatprep.subr.mxu0 0.0
          %4089 = vmatpush1.msra.mxu0 0.0
          %4090 = vmatprep.subr.mxu0 0.0
          %4091 = vmatpush1.msra.mxu0 0.0
          %4092 = vmatprep.subr.mxu0 0.0
          %4093 = vmatpush1.msra.mxu0 0.0
          %4094 = vmatprep.subr.mxu0 0.0
          %4095 = vmatpush1.msra.mxu0 0.0
          %4096 = vmatprep.subr.mxu0 0.0
          %4097 = vmatpush1.msra.mxu0 0.0
          %4098 = vmatprep.subr.mxu0 0.0
          %4099 = vmatpush1.msra.mxu0 0.0
          %4100 = vmatprep.subr.mxu0 0.0
          %4101 = vmatpush1.msra.mxu0 0.0
          %4102 = vmatprep.subr.mxu0 0.0
          %4103 = vmatpush1.msra.mxu0 0.0
          %4104 = vmatprep.subr.mxu0 0.0
          %4105 = vmatpush1.msra.mxu0 0.0
          %4106 = vmatprep.subr.mxu0 0.0
          %4107 = vmatpush1.msra.mxu0 0.0
          %4108 = vmatprep.subr.mxu0 0.0
          %4109 = vmatpush1.msra.mxu0 0.0
          %4110 = vmatprep.subr.mxu0 0.0
          %4111 = vmatpush1.msra.mxu0 0.0
          %4112 = vmatprep.subr.mxu0 0.0
          %4113 = vmatpush1.msra.mxu0 0.0
          %4114 = vmatprep.subr.mxu0 0.0
          %4115 = vmatpush1.msra.mxu0 0.0
          %4116 = vmatprep.subr.mxu0 0.0
          %4117 = vmatpush1.msra.mxu0 0.0
          %4118 = vmatprep.subr.mxu0 0.0
          %4119 = vmatpush1.msra.mxu0 0.0
          %4120 = vmatprep.subr.mxu0 0.0
          %4121 = vmatpush1.msra.mxu0 0.0
          %4122 = vmatprep.subr.mxu0 0.0
          %4123 = vmatpush1.msra.mxu0 0.0
          %4124 = vmatprep.subr.mxu0 0.0
          %4125 = vmatpush1.msra.mxu0 0.0
          %4126 = vmatprep.subr.mxu0 0.0
          %4127 = vmatpush1.msra.mxu0 0.0
          %4128 = vmatprep.subr.mxu0 0.0
          %4129 = vmatpush1.msra.mxu0 0.0
          %4130 = vmatprep.subr.mxu0 0.0
          %4131 = vmatpush1.msra.mxu0 0.0
          %4132 = vmatprep.subr.mxu0 0.0
          %4133 = vmatpush1.msra.mxu0 0.0
          %4134 = vmatprep.subr.mxu0 0.0
          %4135 = vmatpush1.msra.mxu0 0.0
          %4136 = vmatprep.subr.mxu0 0.0
          %4137 = vmatpush1.msra.mxu0 0.0
          %4138 = vmatprep.subr.mxu0 0.0
          %4139 = vmatpush1.msra.mxu0 0.0
          %4140 = vmatprep.subr.mxu0 0.0
          %4141 = vmatpush1.msra.mxu0 0.0
          %4142 = vmatprep.subr.mxu0 0.0
          %4143 = vmatpush1.msra.mxu0 0.0
          %4144 = vmatprep.subr.mxu0 0.0
          %4145 = vmatpush1.msra.mxu0 0.0
          %4146 = vmatprep.mubr.f32.mxu0 0.0
          %v4147 = vand.u32 %v3765, 4294901760
          %4148 = vmatmul.mubr.f32.gmra.mrb[0].mxu0 %v4147
          %v4149 = vpop.f32.mrb[0].mxu0
          %v4150 = vadd.f32 %v4073, %v4149
          %v4151 = vpop.f32.mrb[0].mxu0
          %4152 = vdwg.mxu0
          %4153 = vmatprep.subr.mxu0 0.0
          %v4154 = vand.u32 %v3755, 4294901760
          %4155 = vmatpush1.msra.mxu0 %v4154
          %4156 = vmatprep.subr.mxu0 0.0
          %v4157 = vand.u32 %v3756, 4294901760
          %4158 = vmatpush1.msra.mxu0 %v4157
          %4159 = vmatprep.subr.mxu0 0.0
          %4160 = vmatpush1.msra.mxu0 0.0
          %4161 = vmatprep.subr.mxu0 0.0
          %4162 = vmatpush1.msra.mxu0 0.0
          %4163 = vmatprep.subr.mxu0 0.0
          %4164 = vmatpush1.msra.mxu0 0.0
          %4165 = vmatprep.subr.mxu0 0.0
          %4166 = vmatpush1.msra.mxu0 0.0
          %4167 = vmatprep.subr.mxu0 0.0
          %4168 = vmatpush1.msra.mxu0 0.0
          %4169 = vmatprep.subr.mxu0 0.0
          %4170 = vmatpush1.msra.mxu0 0.0
          %4171 = vmatprep.subr.mxu0 0.0
          %4172 = vmatpush1.msra.mxu0 0.0
          %4173 = vmatprep.subr.mxu0 0.0
          %4174 = vmatpush1.msra.mxu0 0.0
          %4175 = vmatprep.subr.mxu0 0.0
          %4176 = vmatpush1.msra.mxu0 0.0
          %4177 = vmatprep.subr.mxu0 0.0
          %4178 = vmatpush1.msra.mxu0 0.0
          %4179 = vmatprep.subr.mxu0 0.0
          %4180 = vmatpush1.msra.mxu0 0.0
          %4181 = vmatprep.subr.mxu0 0.0
          %4182 = vmatpush1.msra.mxu0 0.0
          %4183 = vmatprep.subr.mxu0 0.0
          %4184 = vmatpush1.msra.mxu0 0.0
          %4185 = vmatprep.subr.mxu0 0.0
          %4186 = vmatpush1.msra.mxu0 0.0
          %4187 = vmatprep.subr.mxu0 0.0
          %4188 = vmatpush1.msra.mxu0 0.0
          %4189 = vmatprep.subr.mxu0 0.0
          %4190 = vmatpush1.msra.mxu0 0.0
          %4191 = vmatprep.subr.mxu0 0.0
          %4192 = vmatpush1.msra.mxu0 0.0
          %4193 = vmatprep.subr.mxu0 0.0
          %4194 = vmatpush1.msra.mxu0 0.0
          %4195 = vmatprep.subr.mxu0 0.0
          %4196 = vmatpush1.msra.mxu0 0.0
          %4197 = vmatprep.subr.mxu0 0.0
          %4198 = vmatpush1.msra.mxu0 0.0
          %4199 = vmatprep.subr.mxu0 0.0
          %4200 = vmatpush1.msra.mxu0 0.0
          %4201 = vmatprep.subr.mxu0 0.0
          %4202 = vmatpush1.msra.mxu0 0.0
          %4203 = vmatprep.subr.mxu0 0.0
          %4204 = vmatpush1.msra.mxu0 0.0
          %4205 = vmatprep.subr.mxu0 0.0
          %4206 = vmatpush1.msra.mxu0 0.0
          %4207 = vmatprep.subr.mxu0 0.0
          %4208 = vmatpush1.msra.mxu0 0.0
          %4209 = vmatprep.subr.mxu0 0.0
          %4210 = vmatpush1.msra.mxu0 0.0
          %4211 = vmatprep.subr.mxu0 0.0
          %4212 = vmatpush1.msra.mxu0 0.0
          %4213 = vmatprep.subr.mxu0 0.0
          %4214 = vmatpush1.msra.mxu0 0.0
          %4215 = vmatprep.subr.mxu0 0.0
          %4216 = vmatpush1.msra.mxu0 0.0
          %4217 = vmatprep.subr.mxu0 0.0
          %4218 = vmatpush1.msra.mxu0 0.0
          %4219 = vmatprep.mubr.f32.mxu0 0.0
          %v4220 = vand.u32 %v3765, 4294901760
          %4221 = vmatmul.mubr.f32.gmra.mrb[0].mxu0 %v4220
          %v4222 = vpop.f32.mrb[0].mxu0
          %v4223 = vadd.f32 %v4150, %v4222
          %v4224 = vpop.f32.mrb[0].mxu0
          %4225 = vdwg.mxu0
          %vm4226 = vcmask 11264
          %v4227 = vsel %vm4226, %v4223, -inf
          %4228 = vmax.xlane.f32.xlu0 %v4227
          %v4229 = vpop.xlane.xlu0 %4228
          %v4230 = vsub.f32 %v4223, %v4229
          %v4231 = vmul.f32 %v4230, 1.442695
          %v4232 = vpow.pop %v4231
          %v4233 = vsel %vm4226, %v4232, 0.0
          %4234 = vadd.xlane.f32.xlu0 %v4233
          %v4235 = vpop.xlane.xlu0 %4234
          %v4236 = vrcp.pop %v4235
          %v4237 = vmul.f32 %v4232, %v4236
          %4238 = vst.msk [vmem:[%s9] sm:$0xf] %vm4226, %v4237
        $region80: #{tpu_custom_call.1} parent=55 // pred_fallthru
          _
        // Predicated region
        $region81: #{tpu_custom_call.1} parent=55 // pred_check
          %p4239 = pneg %p242
        $region82: #{tpu_custom_call.1} parent=55 // pred_check_branch
          %4241 = sbr.rel (%p4239) target = $region84
        $region83: #{tpu_custom_call.1} parent=55 // pred_region
          _
        $region84: #{tpu_custom_call.1} parent=55 // pred_fallthru
          _
        // Predicated region
        $region85: #{tpu_custom_call.1} parent=55 // pred_check
          %p4242 = pneg %p263
        $region86: #{tpu_custom_call.1} parent=55 // pred_check_branch
          %4244 = sbr.rel (%p4242) target = $region88
        $region87: #{tpu_custom_call.1} parent=55 // pred_region
          %s4246 = ssub.s32 64, 64
          %4247 = vsyncadd [#allocation5], %s4246
          %s4249 = sshll.u32 [#allocation11], 4
          %s4250 = int_to_ptr.vmem [resolvable:$true] %s4249
          %4252 = dma.vmem_to_hbm [thread:$0]  %s4250, 64, %s10, [#allocation5]
        $region88: #{tpu_custom_call.1} parent=55 // pred_fallthru
          _
        // Predicated region
        $region89: #{tpu_custom_call.1} parent=55 // pred_check
          %p4253 = pneg %p242
        $region90: #{tpu_custom_call.1} parent=55 // pred_check_branch
          %4255 = sbr.rel (%p4253) target = $region92
        $region91: #{tpu_custom_call.1} parent=55 // pred_region
          _
        $region92: #{tpu_custom_call.1} parent=55 // pred_fallthru
          _
        // Predicated region
        $region93: #{tpu_custom_call.1} parent=55 // pred_check
          %p4256 = pneg %p263
        $region94: #{tpu_custom_call.1} parent=55 // pred_check_branch
          %4258 = sbr.rel (%p4256) target = $region96
        $region95: #{tpu_custom_call.1} parent=55 // pred_region
          %4259 = dma.done [#allocation5], 64
        $region96: #{tpu_custom_call.1} parent=55 // pred_fallthru
          _
      $region56: #{tpu_custom_call.1} parent=5 // pred_fallthru
        _
      %p4260 = scmp.le.s32.totalorder 2, %s25
      // Predicated region
      $region97: #{tpu_custom_call.1} parent=5 // pred_check
        %p4261 = pneg %p4260
      $region98: #{tpu_custom_call.1} parent=5 // pred_check_branch
        %4263 = sbr.rel (%p4261) target = $region100
      $region99: #{tpu_custom_call.1} parent=5 // pred_region
        %s4264 = ssub.s32 %s25, 2
      $region100: #{tpu_custom_call.1} parent=5 // pred_fallthru
        _
    $region6: #{tpu_custom_call.1} parent=1 // loop_footer
      %s29 = sadd.s32 1, %s25
    $region7: #{tpu_custom_call.1} parent=1 // loop_footer_branch
      %24 = sbr.rel target = $region3
    $region8: #{tpu_custom_call.1} parent=1 // loop_exit
      _
    %4265 = vsyncpa [#allocation4], 1
    %s4266 = scalar_lea.sflag [#allocation4], 1
    %4267 = vsyncpa %s4266, 1
    %4268 = vsyncpa [#allocation7], 1
    %s4269 = scalar_lea.sflag [#allocation7], 1
    %4270 = vsyncpa %s4269, 1
    %4271 = vsyncpa [#allocation10], 1
    %4272 = vsyncpa [#allocation5], 1
    %s4273 = scalar_lea.sflag [#allocation5], 1
    %4274 = vsyncpa %s4273, 1

</llo_original>
